<compile_context>
chip_gen: v5e
topology: v5e:2x2
jax: 0.10.0
libtpu: 0.0.40
codegen_flags: <defaults>
</compile_context>

<pallas_src>
import functools
import numpy as np
import jax
import jax.numpy as jnp
from jax import lax
from jax.experimental import pallas as pl
from jax.experimental.pallas import tpu as pltpu


# ----------------------------------------------------------------------------
# Kernel
# ----------------------------------------------------------------------------
def _cmm(ar, ai, br, bi):
    """Complex matmul (ar + i*ai) @ (br + i*bi), 4-multiply form, f32 accumulate.

    The 4-multiply form (no Gauss t3-t1-t2 cancellation) is used because the
    operands are bf16 by default; accumulation stays in f32 on the MXU.
    """
    rr = (jnp.dot(ar, br, preferred_element_type=jnp.float32)
          - jnp.dot(ai, bi, preferred_element_type=jnp.float32))
    ri = (jnp.dot(ar, bi, preferred_element_type=jnp.float32)
          + jnp.dot(ai, br, preferred_element_type=jnp.float32))
    return rr, ri


def _recon_update_kernel(mn_r_ref, mn_i_ref, it_r_ref, it_i_ref,
                         rx_r_ref, rx_i_ref,
                         w1r_ref, w1i_ref, f1r_ref, f1i_ref,
                         w2r_ref, w2i_ref, f2r_ref, f2i_ref,
                         out_r_ref, out_i_ref,
                         *, bt, ds0, ds1, fr0, fr1, inv_denom):
    cdt = w1r_ref.dtype            # MXU operand dtype (bf16 default / f32 exact)

    # ---- stage 1: ifft along the last axis.  Batch folded into the MXU M dim:
    #      Y = X @ W1,  X: (bt*ds0, ds1)
    yr, yi = _cmm(rx_r_ref[...], rx_i_ref[...], w1r_ref[...], w1i_ref[...])

    # ---- stage 2: fft along rows, kept in transposed layout so the batch stays
    #      folded:  spc^T = Y^T @ F1^T  (F1 symmetric -> pass F1),  (bt*ds1, ds0)
    ytr = jnp.swapaxes(yr.reshape(bt, ds0, ds1), 1, 2).reshape(bt * ds1, ds0)
    yti = jnp.swapaxes(yi.reshape(bt, ds0, ds1), 1, 2).reshape(bt * ds1, ds0)
    sr_t, si_t = _cmm(ytr.astype(cdt), yti.astype(cdt),
                      f1r_ref[...], f1i_ref[...])

    # ---- per-column phase, fully vectorized (columns are rows of the
    #      transposed layout, so the inner product is a lane reduction).
    itr = it_r_ref[...]            # input^T, (bt*ds1, ds0), f32
    iti = it_i_ref[...]
    tre = jnp.sum(sr_t * itr + si_t * iti, axis=1, keepdims=True)  # Re<conj(spc), in>
    tim = jnp.sum(sr_t * iti - si_t * itr, axis=1, keepdims=True)  # Im<conj(spc), in>
    # conj(e) = exp(-1j*phi), phi = -atan2(tre, tim)  ->  (tim + 1j*tre)/|tmp|
    r2 = tre * tre + tim * tim
    rinv = lax.rsqrt(jnp.where(r2 > 0.0, r2, 1.0))                 # EUP rsqrt
    er = jnp.where(r2 > 0.0, tim * rinv, 1.0)                      # atan2(0,0)=0 -> 1
    ei = jnp.where(r2 > 0.0, tre * rinv, 0.0)

    # ---- rec0^T = input^T * conj(e)  (per-column scale == per-row here)
    rr = itr * er - iti * ei
    ri = itr * ei + iti * er

    # ---- stage 3: ifft along rows (still transposed, batch still folded):
    #      A^T = rec0^T @ W2^T,  (bt*ds1, fr0)
    ar, ai = _cmm(rr.astype(cdt), ri.astype(cdt), w2r_ref[...], w2i_ref[...])

    # ---- stage 4: fft along the last axis; transpose back, fold batch into M:
    #      rec = A @ F2,  A: (bt*fr0, ds1)  ->  rec: (bt*fr0, fr1)
    afr = jnp.swapaxes(ar.reshape(bt, ds1, fr0), 1, 2).reshape(bt * fr0, ds1)
    afi = jnp.swapaxes(ai.reshape(bt, ds1, fr0), 1, 2).reshape(bt * fr0, ds1)
    rec_r, rec_i = _cmm(afr.astype(cdt), afi.astype(cdt),
                        f2r_ref[...], f2i_ref[...])

    # ---- epilogue (f32): re_mid = minus - (minus - rec) / (mask + rho)
    mnr = mn_r_ref[...]
    mni = mn_i_ref[...]
    out_r_ref[...] = mnr - (mnr - rec_r) * inv_denom
    out_i_ref[...] = mni - (mni - rec_i) * inv_denom


# ----------------------------------------------------------------------------
# Tiling heuristics
# ----------------------------------------------------------------------------
def _step_vmem_bytes(bt, ds0, ds1, fr0, fr1, cbytes):
    """Rough per-grid-step VMEM working set (double-buffered I/O + weights +
    straight-line intermediates)."""
    io = 2 * (4 * bt * fr0 * fr1 * 4          # minus + out planes (f32)
              + 2 * bt * ds1 * ds0 * 4        # input^T planes (f32)
              + 2 * bt * ds0 * ds1 * cbytes)  # rec_x corner planes (compute dtype)
    w = 2 * 2 * (ds1 * ds1 + ds0 * ds0 + ds0 * fr0 + ds1 * fr1) * cbytes
    interm = 4 * bt * (4 * ds0 * ds1 + 3 * ds1 * fr0 + 2 * fr0 * fr1)
    return io + w + interm


def _pick_batch_tile(B, ds0, ds1, fr0, fr1, cbytes, budget_bytes=40 << 20):
    def aligned(bt):
        # (8, 128) rule: second-minor block dims must be sublane multiples
        # unless the block spans the whole array.
        return bt == B or all((bt * d) % 8 == 0 for d in (fr0, ds0, ds1))

    divisors = [d for d in range(1, B + 1) if B % d == 0 and aligned(d)]
    fitting = [d for d in divisors
               if _step_vmem_bytes(d, ds0, ds1, fr0, fr1, cbytes) <= budget_bytes]
    bt = max(fitting) if fitting else min(divisors)
    if bt == B and B > 1:
        # Prefer >=2 grid steps (feeds both TensorCores through the "parallel"
        # axis) as long as the folded matmul M dim stays reasonably tall.
        smaller = [d for d in divisors if d < B and d * ds0 >= 64
                   and _step_vmem_bytes(d, ds0, ds1, fr0, fr1, cbytes) <= budget_bytes]
        if smaller:
            bt = max(smaller)
    return bt


# ----------------------------------------------------------------------------
# Wrapper == ReconstructionUpdateLayer.forward
# ----------------------------------------------------------------------------
def reconstruction_update_layer(x, rho, fr_size, mask=1.0,
                                compute_dtype=jnp.bfloat16, batch_tile=None):
    """x: dict of complex64 arrays. Returns x plus 're_mid_output'."""
    fr0, fr1 = int(fr_size[0]), int(fr_size[1])
    ds0, ds1 = fr0 // 2, fr1 // 2

    nout = x['nnline_output']     # (B, fr0, fr1)
    mout = x['multi_output']      # (B, fr0, fr1)
    inp = x['input']              # (B, ds0, ds1)
    recx = x['nnline_input']      # (B, *, *)  only the (ds0, ds1) corner matters

    B = nout.shape[0]
    assert nout.shape == (B, fr0, fr1) and mout.shape == (B, fr0, fr1)
    assert inp.shape == (B, ds0, ds1)

    cdt = jnp.dtype(compute_dtype)
    cbytes = cdt.itemsize

    # minus precomputed here: XLA fuses the subtract with the re/im split, and
    # the kernel then only streams 2 fr-size planes instead of 4.
    mn = (nout - mout).astype(jnp.complex64)
    mn_r = jnp.real(mn).reshape(B * fr0, fr1)
    mn_i = jnp.imag(mn).reshape(B * fr0, fr1)

    # input passed in transposed layout (columns -> rows) so the per-column
    # phase and both row-axis DFT matmuls stay batch-folded in the kernel.
    inp_t = jnp.swapaxes(inp, -1, -2)                       # (B, ds1, ds0)
    it_r = jnp.real(inp_t).astype(jnp.float32).reshape(B * ds1, ds0)
    it_i = jnp.imag(inp_t).astype(jnp.float32).reshape(B * ds1, ds0)

    # torch.fft.ifftn(rec_x, n=ds1, dim=-1)/fftn(n=ds0, dim=-2) only see the
    # leading (ds0, ds1) corner (or its zero-padded extension).  The crop fuses
    # with the re/im split, so only corner-sized data is touched host-side.
    rx = recx[:, :ds0, :ds1]
    pr, pc = ds0 - rx.shape[1], ds1 - rx.shape[2]
    if pr > 0 or pc > 0:
        rx = jnp.pad(rx, ((0, 0), (0, max(pr, 0)), (0, max(pc, 0))))
    rx_r = jnp.real(rx).astype(cdt).reshape(B * ds0, ds1)
    rx_i = jnp.imag(rx).astype(cdt).reshape(B * ds0, ds1)

    # Exact dense (I)DFT matrices; FFT-length crop / zero-pad is folded into the
    # shapes.  DFT/IDFT matrices are symmetric, so F1^T == F1 and W1^T == W1.
    W1 = np.exp(2j * np.pi * np.outer(np.arange(ds1), np.arange(ds1)) / ds1) / ds1
    F1 = np.exp(-2j * np.pi * np.outer(np.arange(ds0), np.arange(ds0)) / ds0)
    W2T = np.exp(2j * np.pi * np.outer(np.arange(ds0), np.arange(fr0)) / fr0) / fr0
    F2 = np.exp(-2j * np.pi * np.outer(np.arange(ds1), np.arange(fr1)) / fr1)

    def planes(m):
        return jnp.asarray(m.real, cdt), jnp.asarray(m.imag, cdt)

    w1r, w1i = planes(W1)
    f1r, f1i = planes(F1)
    w2r, w2i = planes(W2T)
    f2r, f2i = planes(F2)

    # mask is the scalar 1 in the module; keep the torch.where(denom == 0) guard.
    den = float(mask) + float(rho)
    if den == 0.0:
        den = 1e-6
    inv_denom = 1.0 / den

    if batch_tile is None:
        bt = _pick_batch_tile(B, ds0, ds1, fr0, fr1, cbytes)
    else:
        bt = int(batch_tile)
        assert B % bt == 0, "batch_tile must divide the batch size"
    step_bytes = _step_vmem_bytes(bt, ds0, ds1, fr0, fr1, cbytes)
    vmem_limit = int(min(60 << 20, max(32 << 20, 2 * step_bytes)))

    def slab(rows_per_step, cols):
        return pl.BlockSpec((rows_per_step, cols), lambda i: (i, 0))

    def const2(shape):
        # TODO(synk): single-buffer these constants (pipeline_mode=pl.Buffered(1))
        # once weight VMEM becomes the limiter at large fr on v7x.
        return pl.BlockSpec(shape, lambda i: (0, 0))

    grid_spec = pltpu.PrefetchScalarGridSpec(
        num_scalar_prefetch=0,
        grid=(B // bt,),
        in_specs=[
            slab(bt * fr0, fr1), slab(bt * fr0, fr1),     # minus re/im (f32)
            slab(bt * ds1, ds0), slab(bt * ds1, ds0),     # input^T re/im (f32)
            slab(bt * ds0, ds1), slab(bt * ds0, ds1),     # rec_x corner re/im
            const2((ds1, ds1)), const2((ds1, ds1)),       # W1  (IDFT, last axis)
            const2((ds0, ds0)), const2((ds0, ds0)),       # F1  (DFT, rows; symmetric)
            const2((ds0, fr0)), const2((ds0, fr0)),       # W2^T (IDFT, rows, padded)
            const2((ds1, fr1)), const2((ds1, fr1)),       # F2  (DFT, last axis, padded)
        ],
        out_specs=(slab(bt * fr0, fr1), slab(bt * fr0, fr1)),
    )

    kernel = functools.partial(_recon_update_kernel, bt=bt, ds0=ds0, ds1=ds1,
                               fr0=fr0, fr1=fr1, inv_denom=inv_denom)

    out_r, out_i = pl.pallas_call(
        kernel,
        out_shape=(jax.ShapeDtypeStruct((B * fr0, fr1), jnp.float32),
                   jax.ShapeDtypeStruct((B * fr0, fr1), jnp.float32)),
        grid_spec=grid_spec,
        compiler_params=pltpu.CompilerParams(
            dimension_semantics=("parallel",),
            vmem_limit_bytes=vmem_limit),
    )(mn_r, mn_i, it_r, it_i, rx_r, rx_i,
      w1r, w1i, f1r, f1i, w2r, w2i, f2r, f2i)

    re_mid = (out_r + 1j * out_i).reshape(B, fr0, fr1).astype(jnp.complex64)

    out = dict(x)
    out['re_mid_output'] = re_mid
    return out


# ----------------------------------------------------------------------------
# Pure-JAX reference (mirrors the torch code) for correctness checking
# ----------------------------------------------------------------------------
def _reference_re_mid(x, rho, fr_size):
    fr0, fr1 = int(fr_size[0]), int(fr_size[1])
    ds0, ds1 = fr0 // 2, fr1 // 2
    nout = x['nnline_output']
    mout = x['multi_output']
    inp = x['input']
    recx = x['nnline_input']

    spc_tmp = jnp.fft.ifft(recx, n=ds1, axis=-1)
    spc = jnp.fft.fft(spc_tmp, n=ds0, axis=-2)
    tmp = jnp.sum(jnp.conj(spc) * inp, axis=-2)                 # (B, ds1)
    phi = -jnp.arctan2(jnp.real(tmp), jnp.imag(tmp))
    e = jnp.exp(1j * phi)                                       # diag of E

    minus = nout - mout
    rec = inp * jnp.conj(e)[:, None, :]
    rec = jnp.fft.ifft(rec, n=fr0, axis=-2)
    rec = jnp.fft.fft(rec, n=fr1, axis=-1)

    number = minus - rec
    den = 1.0 + float(rho)
    if den == 0.0:
        den = 1e-6
    return minus - number / den


if __name__ == "__main__":
    key = jax.random.PRNGKey(0)
    ks = jax.random.split(key, 4)

    B = 16
    fr_size = (32, 32)
    ds = (fr_size[0] // 2, fr_size[1] // 2)
    rho = 1.0

    def crandn(k, shape):
        kr, ki = jax.random.split(k)
        return (jax.random.normal(kr, shape, jnp.float32)
                + 1j * jax.random.normal(ki, shape, jnp.float32)).astype(jnp.complex64)

    x = {
        'nnline_output': crandn(ks[0], (B, fr_size[0], fr_size[1])),
        'multi_output':  crandn(ks[1], (B, fr_size[0], fr_size[1])),
        'input':         crandn(ks[2], (B, ds[0], ds[1])),
        'nnline_input':  crandn(ks[3], (B, fr_size[0], fr_size[1])),
    }

    ref = np.asarray(_reference_re_mid(x, rho, fr_size))

    # Exact f32 MXU path: tight check against the complex64 reference.
    out_f32 = reconstruction_update_layer(x, rho, fr_size,
                                          compute_dtype=jnp.float32)
    got_f32 = np.asarray(jax.block_until_ready(out_f32['re_mid_output']))
    np.testing.assert_allclose(got_f32, ref, rtol=2e-3, atol=2e-3)

    # Default bf16 MXU path (~3x MXU throughput on v6e/v7x): bf16 operands carry
    # ~2-3 significant digits, so the tolerance is correspondingly looser.
    out_bf16 = reconstruction_update_layer(x, rho, fr_size)
    got_bf16 = np.asarray(jax.block_until_ready(out_bf16['re_mid_output']))
    np.testing.assert_allclose(got_bf16, ref, rtol=1e-1, atol=1e-1)

    assert out_bf16['input'].shape == x['input'].shape

    print("KERNEL_OK")
</pallas_src>

<mosaic_0001>
module attributes {stable_mosaic.version = 11 : i64} {
  func.func @_recon_update_kernel(%arg0: i32, %arg1: memref<256x32xf32, #tpu.memory_space<vmem>>, %arg2: memref<256x32xf32, #tpu.memory_space<vmem>>, %arg3: memref<128x16xf32, #tpu.memory_space<vmem>>, %arg4: memref<128x16xf32, #tpu.memory_space<vmem>>, %arg5: memref<128x16xf32, #tpu.memory_space<vmem>>, %arg6: memref<128x16xf32, #tpu.memory_space<vmem>>, %arg7: memref<16x16xf32, #tpu.memory_space<vmem>>, %arg8: memref<16x16xf32, #tpu.memory_space<vmem>>, %arg9: memref<16x16xf32, #tpu.memory_space<vmem>>, %arg10: memref<16x16xf32, #tpu.memory_space<vmem>>, %arg11: memref<16x32xf32, #tpu.memory_space<vmem>>, %arg12: memref<16x32xf32, #tpu.memory_space<vmem>>, %arg13: memref<16x32xf32, #tpu.memory_space<vmem>>, %arg14: memref<16x32xf32, #tpu.memory_space<vmem>>, %arg15: memref<256x32xf32, #tpu.memory_space<vmem>>, %arg16: memref<256x32xf32, #tpu.memory_space<vmem>>) attributes {dimension_semantics = [#tpu.dimension_semantics<parallel>], iteration_bounds = array<i64: 2>, scalar_prefetch = 0 : i64, scratch_operands = 0 : i64, tpu.core_type = #tpu.core_type<tc>, window_params = [{transform_indices = @transform_0, window_bounds = array<i64: 256, 32>}, {transform_indices = @transform_1, window_bounds = array<i64: 256, 32>}, {transform_indices = @transform_2, window_bounds = array<i64: 128, 16>}, {transform_indices = @transform_3, window_bounds = array<i64: 128, 16>}, {transform_indices = @transform_4, window_bounds = array<i64: 128, 16>}, {transform_indices = @transform_5, window_bounds = array<i64: 128, 16>}, {pipeline_mode = #tpu.pipeline_mode<synchronous>, transform_indices = @transform_6, window_bounds = array<i64: 16, 16>}, {pipeline_mode = #tpu.pipeline_mode<synchronous>, transform_indices = @transform_7, window_bounds = array<i64: 16, 16>}, {pipeline_mode = #tpu.pipeline_mode<synchronous>, transform_indices = @transform_8, window_bounds = array<i64: 16, 16>}, {pipeline_mode = #tpu.pipeline_mode<synchronous>, transform_indices = @transform_9, window_bounds = array<i64: 16, 16>}, {pipeline_mode = #tpu.pipeline_mode<synchronous>, transform_indices = @transform_10, window_bounds = array<i64: 16, 32>}, {pipeline_mode = #tpu.pipeline_mode<synchronous>, transform_indices = @transform_11, window_bounds = array<i64: 16, 32>}, {pipeline_mode = #tpu.pipeline_mode<synchronous>, transform_indices = @transform_12, window_bounds = array<i64: 16, 32>}, {pipeline_mode = #tpu.pipeline_mode<synchronous>, transform_indices = @transform_13, window_bounds = array<i64: 16, 32>}, {transform_indices = @transform_14, window_bounds = array<i64: 256, 32>}, {transform_indices = @transform_15, window_bounds = array<i64: 256, 32>}]} {
    %c0 = arith.constant 0 : index
    %c0_0 = arith.constant 0 : index
    %0 = vector.load %arg5[%c0, %c0_0] : memref<128x16xf32, #tpu.memory_space<vmem>>, vector<128x16xf32>
    %c0_1 = arith.constant 0 : index
    %c0_2 = arith.constant 0 : index
    %1 = vector.load %arg6[%c0_1, %c0_2] : memref<128x16xf32, #tpu.memory_space<vmem>>, vector<128x16xf32>
    %c0_3 = arith.constant 0 : index
    %c0_4 = arith.constant 0 : index
    %2 = vector.load %arg7[%c0_3, %c0_4] : memref<16x16xf32, #tpu.memory_space<vmem>>, vector<16x16xf32>
    %c0_5 = arith.constant 0 : index
    %c0_6 = arith.constant 0 : index
    %3 = vector.load %arg8[%c0_5, %c0_6] : memref<16x16xf32, #tpu.memory_space<vmem>>, vector<16x16xf32>
    %cst = arith.constant dense<0.000000e+00> : vector<128x16xf32>
    %4 = tpu.matmul %0, %2, %cst {dimension_numbers = #tpu.dot_dimension_numbers<[1], [0], [0], [1], [0, 0, 1, 1], [], []>} : vector<128x16xf32>, vector<16x16xf32>, vector<128x16xf32> -> vector<128x16xf32>
    %cst_7 = arith.constant dense<0.000000e+00> : vector<128x16xf32>
    %5 = tpu.matmul %1, %3, %cst_7 {dimension_numbers = #tpu.dot_dimension_numbers<[1], [0], [0], [1], [0, 0, 1, 1], [], []>} : vector<128x16xf32>, vector<16x16xf32>, vector<128x16xf32> -> vector<128x16xf32>
    %6 = arith.subf %4, %5 : vector<128x16xf32>
    %cst_8 = arith.constant dense<0.000000e+00> : vector<128x16xf32>
    %7 = tpu.matmul %0, %3, %cst_8 {dimension_numbers = #tpu.dot_dimension_numbers<[1], [0], [0], [1], [0, 0, 1, 1], [], []>} : vector<128x16xf32>, vector<16x16xf32>, vector<128x16xf32> -> vector<128x16xf32>
    %cst_9 = arith.constant dense<0.000000e+00> : vector<128x16xf32>
    %8 = tpu.matmul %1, %2, %cst_9 {dimension_numbers = #tpu.dot_dimension_numbers<[1], [0], [0], [1], [0, 0, 1, 1], [], []>} : vector<128x16xf32>, vector<16x16xf32>, vector<128x16xf32> -> vector<128x16xf32>
    %9 = arith.addf %7, %8 : vector<128x16xf32>
    %10 = vector.shape_cast %6 : vector<128x16xf32> to vector<8x16x16xf32>
    %11 = tpu.transpose %10, [0, 2, 1] : vector<8x16x16xf32> -> vector<8x16x16xf32>
    %12 = vector.shape_cast %11 : vector<8x16x16xf32> to vector<128x16xf32>
    %13 = vector.shape_cast %9 : vector<128x16xf32> to vector<8x16x16xf32>
    %14 = tpu.transpose %13, [0, 2, 1] : vector<8x16x16xf32> -> vector<8x16x16xf32>
    %15 = vector.shape_cast %14 : vector<8x16x16xf32> to vector<128x16xf32>
    %c0_10 = arith.constant 0 : index
    %c0_11 = arith.constant 0 : index
    %16 = vector.load %arg9[%c0_10, %c0_11] : memref<16x16xf32, #tpu.memory_space<vmem>>, vector<16x16xf32>
    %c0_12 = arith.constant 0 : index
    %c0_13 = arith.constant 0 : index
    %17 = vector.load %arg10[%c0_12, %c0_13] : memref<16x16xf32, #tpu.memory_space<vmem>>, vector<16x16xf32>
    %cst_14 = arith.constant dense<0.000000e+00> : vector<128x16xf32>
    %18 = tpu.matmul %12, %16, %cst_14 {dimension_numbers = #tpu.dot_dimension_numbers<[1], [0], [0], [1], [0, 0, 1, 1], [], []>} : vector<128x16xf32>, vector<16x16xf32>, vector<128x16xf32> -> vector<128x16xf32>
    %cst_15 = arith.constant dense<0.000000e+00> : vector<128x16xf32>
    %19 = tpu.matmul %15, %17, %cst_15 {dimension_numbers = #tpu.dot_dimension_numbers<[1], [0], [0], [1], [0, 0, 1, 1], [], []>} : vector<128x16xf32>, vector<16x16xf32>, vector<128x16xf32> -> vector<128x16xf32>
    %20 = arith.subf %18, %19 : vector<128x16xf32>
    %cst_16 = arith.constant dense<0.000000e+00> : vector<128x16xf32>
    %21 = tpu.matmul %12, %17, %cst_16 {dimension_numbers = #tpu.dot_dimension_numbers<[1], [0], [0], [1], [0, 0, 1, 1], [], []>} : vector<128x16xf32>, vector<16x16xf32>, vector<128x16xf32> -> vector<128x16xf32>
    %cst_17 = arith.constant dense<0.000000e+00> : vector<128x16xf32>
    %22 = tpu.matmul %15, %16, %cst_17 {dimension_numbers = #tpu.dot_dimension_numbers<[1], [0], [0], [1], [0, 0, 1, 1], [], []>} : vector<128x16xf32>, vector<16x16xf32>, vector<128x16xf32> -> vector<128x16xf32>
    %23 = arith.addf %21, %22 : vector<128x16xf32>
    %c0_18 = arith.constant 0 : index
    %c0_19 = arith.constant 0 : index
    %24 = vector.load %arg3[%c0_18, %c0_19] : memref<128x16xf32, #tpu.memory_space<vmem>>, vector<128x16xf32>
    %c0_20 = arith.constant 0 : index
    %c0_21 = arith.constant 0 : index
    %25 = vector.load %arg4[%c0_20, %c0_21] : memref<128x16xf32, #tpu.memory_space<vmem>>, vector<128x16xf32>
    %26 = arith.mulf %20, %24 : vector<128x16xf32>
    %27 = arith.mulf %23, %25 : vector<128x16xf32>
    %28 = arith.addf %26, %27 : vector<128x16xf32>
    %cst_22 = arith.constant dense<0.000000e+00> : vector<128xf32>
    %29 = vector.multi_reduction <add>, %28, %cst_22 [1] : vector<128x16xf32> to vector<128xf32>
    %30 = vector.shape_cast %29 : vector<128xf32> to vector<128x1xf32>
    %31 = arith.mulf %20, %25 : vector<128x16xf32>
    %32 = arith.mulf %23, %24 : vector<128x16xf32>
    %33 = arith.subf %31, %32 : vector<128x16xf32>
    %cst_23 = arith.constant dense<0.000000e+00> : vector<128xf32>
    %34 = vector.multi_reduction <add>, %33, %cst_23 [1] : vector<128x16xf32> to vector<128xf32>
    %35 = vector.shape_cast %34 : vector<128xf32> to vector<128x1xf32>
    %36 = arith.mulf %30, %30 : vector<128x1xf32>
    %37 = arith.mulf %35, %35 : vector<128x1xf32>
    %38 = arith.addf %36, %37 : vector<128x1xf32>
    %cst_24 = arith.constant 0.000000e+00 : f32
    %39 = vector.broadcast %cst_24 : f32 to vector<128x1xf32>
    %40 = arith.cmpf ogt, %38, %39 : vector<128x1xf32>
    %cst_25 = arith.constant 1.000000e+00 : f32
    %41 = vector.broadcast %cst_25 : f32 to vector<128x1xf32>
    %42 = arith.select %40, %38, %41 : vector<128x1xi1>, vector<128x1xf32>
    %43 = math.rsqrt %42 : vector<128x1xf32>
    %cst_26 = arith.constant 0.000000e+00 : f32
    %44 = vector.broadcast %cst_26 : f32 to vector<128x1xf32>
    %45 = arith.cmpf ogt, %38, %44 : vector<128x1xf32>
    %46 = arith.mulf %35, %43 : vector<128x1xf32>
    %cst_27 = arith.constant 1.000000e+00 : f32
    %47 = vector.broadcast %cst_27 : f32 to vector<128x1xf32>
    %48 = arith.select %45, %46, %47 : vector<128x1xi1>, vector<128x1xf32>
    %cst_28 = arith.constant 0.000000e+00 : f32
    %49 = vector.broadcast %cst_28 : f32 to vector<128x1xf32>
    %50 = arith.cmpf ogt, %38, %49 : vector<128x1xf32>
    %51 = arith.mulf %30, %43 : vector<128x1xf32>
    %cst_29 = arith.constant 0.000000e+00 : f32
    %52 = vector.broadcast %cst_29 : f32 to vector<128x1xf32>
    %53 = arith.select %50, %51, %52 : vector<128x1xi1>, vector<128x1xf32>
    %54 = vector.broadcast %48 : vector<128x1xf32> to vector<128x16xf32>
    %55 = arith.mulf %24, %54 : vector<128x16xf32>
    %56 = vector.broadcast %53 : vector<128x1xf32> to vector<128x16xf32>
    %57 = arith.mulf %25, %56 : vector<128x16xf32>
    %58 = arith.subf %55, %57 : vector<128x16xf32>
    %59 = vector.broadcast %53 : vector<128x1xf32> to vector<128x16xf32>
    %60 = arith.mulf %24, %59 : vector<128x16xf32>
    %61 = vector.broadcast %48 : vector<128x1xf32> to vector<128x16xf32>
    %62 = arith.mulf %25, %61 : vector<128x16xf32>
    %63 = arith.addf %60, %62 : vector<128x16xf32>
    %c0_30 = arith.constant 0 : index
    %c0_31 = arith.constant 0 : index
    %64 = vector.load %arg11[%c0_30, %c0_31] : memref<16x32xf32, #tpu.memory_space<vmem>>, vector<16x32xf32>
    %c0_32 = arith.constant 0 : index
    %c0_33 = arith.constant 0 : index
    %65 = vector.load %arg12[%c0_32, %c0_33] : memref<16x32xf32, #tpu.memory_space<vmem>>, vector<16x32xf32>
    %cst_34 = arith.constant dense<0.000000e+00> : vector<128x32xf32>
    %66 = tpu.matmul %58, %64, %cst_34 {dimension_numbers = #tpu.dot_dimension_numbers<[1], [0], [0], [1], [0, 0, 1, 1], [], []>} : vector<128x16xf32>, vector<16x32xf32>, vector<128x32xf32> -> vector<128x32xf32>
    %cst_35 = arith.constant dense<0.000000e+00> : vector<128x32xf32>
    %67 = tpu.matmul %63, %65, %cst_35 {dimension_numbers = #tpu.dot_dimension_numbers<[1], [0], [0], [1], [0, 0, 1, 1], [], []>} : vector<128x16xf32>, vector<16x32xf32>, vector<128x32xf32> -> vector<128x32xf32>
    %68 = arith.subf %66, %67 : vector<128x32xf32>
    %cst_36 = arith.constant dense<0.000000e+00> : vector<128x32xf32>
    %69 = tpu.matmul %58, %65, %cst_36 {dimension_numbers = #tpu.dot_dimension_numbers<[1], [0], [0], [1], [0, 0, 1, 1], [], []>} : vector<128x16xf32>, vector<16x32xf32>, vector<128x32xf32> -> vector<128x32xf32>
    %cst_37 = arith.constant dense<0.000000e+00> : vector<128x32xf32>
    %70 = tpu.matmul %63, %64, %cst_37 {dimension_numbers = #tpu.dot_dimension_numbers<[1], [0], [0], [1], [0, 0, 1, 1], [], []>} : vector<128x16xf32>, vector<16x32xf32>, vector<128x32xf32> -> vector<128x32xf32>
    %71 = arith.addf %69, %70 : vector<128x32xf32>
    %72 = vector.shape_cast %68 : vector<128x32xf32> to vector<8x16x32xf32>
    %73 = tpu.transpose %72, [0, 2, 1] : vector<8x16x32xf32> -> vector<8x32x16xf32>
    %74 = vector.shape_cast %73 : vector<8x32x16xf32> to vector<256x16xf32>
    %75 = vector.shape_cast %71 : vector<128x32xf32> to vector<8x16x32xf32>
    %76 = tpu.transpose %75, [0, 2, 1] : vector<8x16x32xf32> -> vector<8x32x16xf32>
    %77 = vector.shape_cast %76 : vector<8x32x16xf32> to vector<256x16xf32>
    %c0_38 = arith.constant 0 : index
    %c0_39 = arith.constant 0 : index
    %78 = vector.load %arg13[%c0_38, %c0_39] : memref<16x32xf32, #tpu.memory_space<vmem>>, vector<16x32xf32>
    %c0_40 = arith.constant 0 : index
    %c0_41 = arith.constant 0 : index
    %79 = vector.load %arg14[%c0_40, %c0_41] : memref<16x32xf32, #tpu.memory_space<vmem>>, vector<16x32xf32>
    %cst_42 = arith.constant dense<0.000000e+00> : vector<256x32xf32>
    %80 = tpu.matmul %74, %78, %cst_42 {dimension_numbers = #tpu.dot_dimension_numbers<[1], [0], [0], [1], [0, 0, 1, 1], [], []>} : vector<256x16xf32>, vector<16x32xf32>, vector<256x32xf32> -> vector<256x32xf32>
    %cst_43 = arith.constant dense<0.000000e+00> : vector<256x32xf32>
    %81 = tpu.matmul %77, %79, %cst_43 {dimension_numbers = #tpu.dot_dimension_numbers<[1], [0], [0], [1], [0, 0, 1, 1], [], []>} : vector<256x16xf32>, vector<16x32xf32>, vector<256x32xf32> -> vector<256x32xf32>
    %82 = arith.subf %80, %81 : vector<256x32xf32>
    %cst_44 = arith.constant dense<0.000000e+00> : vector<256x32xf32>
    %83 = tpu.matmul %74, %79, %cst_44 {dimension_numbers = #tpu.dot_dimension_numbers<[1], [0], [0], [1], [0, 0, 1, 1], [], []>} : vector<256x16xf32>, vector<16x32xf32>, vector<256x32xf32> -> vector<256x32xf32>
    %cst_45 = arith.constant dense<0.000000e+00> : vector<256x32xf32>
    %84 = tpu.matmul %77, %78, %cst_45 {dimension_numbers = #tpu.dot_dimension_numbers<[1], [0], [0], [1], [0, 0, 1, 1], [], []>} : vector<256x16xf32>, vector<16x32xf32>, vector<256x32xf32> -> vector<256x32xf32>
    %85 = arith.addf %83, %84 : vector<256x32xf32>
    %c0_46 = arith.constant 0 : index
    %c0_47 = arith.constant 0 : index
    %86 = vector.load %arg1[%c0_46, %c0_47] : memref<256x32xf32, #tpu.memory_space<vmem>>, vector<256x32xf32>
    %c0_48 = arith.constant 0 : index
    %c0_49 = arith.constant 0 : index
    %87 = vector.load %arg2[%c0_48, %c0_49] : memref<256x32xf32, #tpu.memory_space<vmem>>, vector<256x32xf32>
    %88 = arith.subf %86, %82 : vector<256x32xf32>
    %cst_50 = arith.constant 5.000000e-01 : f32
    %89 = vector.broadcast %cst_50 : f32 to vector<256x32xf32>
    %90 = arith.mulf %88, %89 : vector<256x32xf32>
    %91 = arith.subf %86, %90 : vector<256x32xf32>
    %c0_51 = arith.constant 0 : index
    %c0_52 = arith.constant 0 : index
    %92 = vector.load %arg15[%c0_51, %c0_52] : memref<256x32xf32, #tpu.memory_space<vmem>>, vector<256x32xf32>
    tpu.vector_store %arg15[%c0_51, %c0_52], %91 {strides = array<i32>} : memref<256x32xf32, #tpu.memory_space<vmem>>, vector<256x32xf32>,
    %93 = arith.subf %87, %85 : vector<256x32xf32>
    %cst_53 = arith.constant 5.000000e-01 : f32
    %94 = vector.broadcast %cst_53 : f32 to vector<256x32xf32>
    %95 = arith.mulf %93, %94 : vector<256x32xf32>
    %96 = arith.subf %87, %95 : vector<256x32xf32>
    %c0_54 = arith.constant 0 : index
    %c0_55 = arith.constant 0 : index
    %97 = vector.load %arg16[%c0_54, %c0_55] : memref<256x32xf32, #tpu.memory_space<vmem>>, vector<256x32xf32>
    tpu.vector_store %arg16[%c0_54, %c0_55], %96 {strides = array<i32>} : memref<256x32xf32, #tpu.memory_space<vmem>>, vector<256x32xf32>,
    return
  }
  func.func @transform_0(%arg0: i32) -> (i32, i32) {
    %c0_i32 = arith.constant 0 : i32
    %c0_i32_0 = arith.constant 0 : i32
    return %arg0, %c0_i32 : i32, i32
  }
  func.func @transform_1(%arg0: i32) -> (i32, i32) {
    %c0_i32 = arith.constant 0 : i32
    %c0_i32_0 = arith.constant 0 : i32
    return %arg0, %c0_i32 : i32, i32
  }
  func.func @transform_2(%arg0: i32) -> (i32, i32) {
    %c0_i32 = arith.constant 0 : i32
    %c0_i32_0 = arith.constant 0 : i32
    return %arg0, %c0_i32 : i32, i32
  }
  func.func @transform_3(%arg0: i32) -> (i32, i32) {
    %c0_i32 = arith.constant 0 : i32
    %c0_i32_0 = arith.constant 0 : i32
    return %arg0, %c0_i32 : i32, i32
  }
  func.func @transform_4(%arg0: i32) -> (i32, i32) {
    %c0_i32 = arith.constant 0 : i32
    %c0_i32_0 = arith.constant 0 : i32
    return %arg0, %c0_i32 : i32, i32
  }
  func.func @transform_5(%arg0: i32) -> (i32, i32) {
    %c0_i32 = arith.constant 0 : i32
    %c0_i32_0 = arith.constant 0 : i32
    return %arg0, %c0_i32 : i32, i32
  }
  func.func @transform_6(%arg0: i32) -> (i32, i32) {
    %c0_i32 = arith.constant 0 : i32
    %c0_i32_0 = arith.constant 0 : i32
    %c0_i32_1 = arith.constant 0 : i32
    return %c0_i32, %c0_i32_0 : i32, i32
  }
  func.func @transform_7(%arg0: i32) -> (i32, i32) {
    %c0_i32 = arith.constant 0 : i32
    %c0_i32_0 = arith.constant 0 : i32
    %c0_i32_1 = arith.constant 0 : i32
    return %c0_i32, %c0_i32_0 : i32, i32
  }
  func.func @transform_8(%arg0: i32) -> (i32, i32) {
    %c0_i32 = arith.constant 0 : i32
    %c0_i32_0 = arith.constant 0 : i32
    %c0_i32_1 = arith.constant 0 : i32
    return %c0_i32, %c0_i32_0 : i32, i32
  }
  func.func @transform_9(%arg0: i32) -> (i32, i32) {
    %c0_i32 = arith.constant 0 : i32
    %c0_i32_0 = arith.constant 0 : i32
    %c0_i32_1 = arith.constant 0 : i32
    return %c0_i32, %c0_i32_0 : i32, i32
  }
  func.func @transform_10(%arg0: i32) -> (i32, i32) {
    %c0_i32 = arith.constant 0 : i32
    %c0_i32_0 = arith.constant 0 : i32
    %c0_i32_1 = arith.constant 0 : i32
    return %c0_i32, %c0_i32_0 : i32, i32
  }
  func.func @transform_11(%arg0: i32) -> (i32, i32) {
    %c0_i32 = arith.constant 0 : i32
    %c0_i32_0 = arith.constant 0 : i32
    %c0_i32_1 = arith.constant 0 : i32
    return %c0_i32, %c0_i32_0 : i32, i32
  }
  func.func @transform_12(%arg0: i32) -> (i32, i32) {
    %c0_i32 = arith.constant 0 : i32
    %c0_i32_0 = arith.constant 0 : i32
    %c0_i32_1 = arith.constant 0 : i32
    return %c0_i32, %c0_i32_0 : i32, i32
  }
  func.func @transform_13(%arg0: i32) -> (i32, i32) {
    %c0_i32 = arith.constant 0 : i32
    %c0_i32_0 = arith.constant 0 : i32
    %c0_i32_1 = arith.constant 0 : i32
    return %c0_i32, %c0_i32_0 : i32, i32
  }
  func.func @transform_14(%arg0: i32) -> (i32, i32) {
    %c0_i32 = arith.constant 0 : i32
    %c0_i32_0 = arith.constant 0 : i32
    return %arg0, %c0_i32 : i32, i32
  }
  func.func @transform_15(%arg0: i32) -> (i32, i32) {
    %c0_i32 = arith.constant 0 : i32
    %c0_i32_0 = arith.constant 0 : i32
    return %arg0, %c0_i32 : i32, i32
  }
}

</mosaic_0001>

<llo_original>
// kernel: tpu_custom_call.1
$region0: #{tpu_custom_call.1}
  #allocation0 [shape = 'u32[]', space=smem, size = 0x4, offset = 0x4, fixed_abs, tag = 'smem constant byte address 0x4 - core index']
  #allocation1 [shape = 'u32[72,128]{1,0:T(1,128)}', space=vmem, size = 0x9000, scoped, tag = 'internal scratch']
  %s0 = inlined_call_operand.vmem [shape: f32[512,32], index: 0, kind: input, shape index: {}]
  %s1 = inlined_call_operand.vmem [shape: f32[512,32], index: 1, kind: input, shape index: {}]
  %s2 = inlined_call_operand.vmem [shape: f32[256,16], index: 2, kind: input, shape index: {}]
  %s3 = inlined_call_operand.vmem [shape: f32[256,16], index: 3, kind: input, shape index: {}]
  %s4 = inlined_call_operand.vmem [shape: f32[256,16], index: 4, kind: input, shape index: {}]
  %s5 = inlined_call_operand.vmem [shape: f32[256,16], index: 5, kind: input, shape index: {}]
  %s6 = inlined_call_operand.vmem [shape: f32[16,16], index: 6, kind: input, shape index: {}]
  %s7 = inlined_call_operand.vmem [shape: f32[16,16], index: 7, kind: input, shape index: {}]
  %s8 = inlined_call_operand.vmem [shape: f32[16,16], index: 8, kind: input, shape index: {}]
  %s9 = inlined_call_operand.vmem [shape: f32[16,16], index: 9, kind: input, shape index: {}]
  %s10 = inlined_call_operand.vmem [shape: f32[16,32], index: 10, kind: input, shape index: {}]
  %s11 = inlined_call_operand.vmem [shape: f32[16,32], index: 11, kind: input, shape index: {}]
  %s12 = inlined_call_operand.vmem [shape: f32[16,32], index: 12, kind: input, shape index: {}]
  %s13 = inlined_call_operand.vmem [shape: f32[16,32], index: 13, kind: input, shape index: {}]
  %s14 = inlined_call_operand.vmem [shape: f32[512,32], index: 14, kind: output, shape index: {0}]
  %s15 = inlined_call_operand.vmem [shape: f32[512,32], index: 15, kind: output, shape index: {1}]
  %16 = xla_tuple %s14, %s15
  %s17 = sld [smem:[#allocation0]]
  $region97: #{tpu_custom_call.1} parent=0
    _
  %s19 = ssub.s32 1, %s17
  %s20 = scalar_select 0, %s19, %s17
  loop: start=0, step=1, limit=4
  $region2: #{tpu_custom_call.1} parent=0 // loop_pre_header
    _
  $region3: #{tpu_custom_call.1} parent=0 // loop_header
    %s22 = sphi 0, %s26
    %p23 = scmp.ge.s32.totalorder %s22, 4
    %s32 = sphi 0, %s34
    %s35 = sphi 0, %s32
    %s36 = sphi 0, %s35
    %s52 = sphi 0, %s36
    %s58 = sphi 0, %s60
    %s61 = sphi 0, %s58
    %s62 = sphi 0, %s61
    %s78 = sphi 0, %s62
    %s84 = sphi 0, %s86
    %s87 = sphi 0, %s84
    %s88 = sphi 0, %s87
    %s104 = sphi 0, %s88
    %s110 = sphi 0, %s112
    %s113 = sphi 0, %s110
    %s114 = sphi 0, %s113
    %s130 = sphi 0, %s114
    %s136 = sphi 0, %s138
    %s139 = sphi 0, %s136
    %s140 = sphi 0, %s139
    %s156 = sphi 0, %s140
    %s162 = sphi 0, %s164
    %s165 = sphi 0, %s162
    %s166 = sphi 0, %s165
    %s182 = sphi 0, %s166
    %s186 = sphi 0, %s186
    %s188 = sphi 0, %s186
    %s189 = sphi 0, %s188
    %s203 = sphi 0, %s189
    %s207 = sphi 0, %s207
    %s209 = sphi 0, %s207
    %s210 = sphi 0, %s209
    %s224 = sphi 0, %s210
    %s228 = sphi 0, %s228
    %s230 = sphi 0, %s228
    %s231 = sphi 0, %s230
    %s245 = sphi 0, %s231
    %s249 = sphi 0, %s249
    %s251 = sphi 0, %s249
    %s252 = sphi 0, %s251
    %s266 = sphi 0, %s252
    %s270 = sphi 0, %s270
    %s272 = sphi 0, %s270
    %s273 = sphi 0, %s272
    %s287 = sphi 0, %s273
    %s291 = sphi 0, %s291
    %s293 = sphi 0, %s291
    %s294 = sphi 0, %s293
    %s308 = sphi 0, %s294
    %s312 = sphi 0, %s312
    %s314 = sphi 0, %s312
    %s315 = sphi 0, %s314
    %s329 = sphi 0, %s315
    %s333 = sphi 0, %s333
    %s335 = sphi 0, %s333
    %s336 = sphi 0, %s335
    %s350 = sphi 0, %s336
    %s356 = sphi 0, %s358
    %s359 = sphi 0, %s356
    %s360 = sphi 0, %s359
    %s376 = sphi 0, %s360
    %s382 = sphi 0, %s384
    %s385 = sphi 0, %s382
    %s386 = sphi 0, %s385
    %s402 = sphi 0, %s386
  $region4: #{tpu_custom_call.1} parent=0 // loop_header_branch
    %25 = sbr.rel (%p23) target = $region8
  $region5: #{tpu_custom_call.1} parent=0 // loop_body
    %s27 = ssub.s32 %s22, 1
    %s28 = ssub.s32 %s22, 2
    %s29 = sadd.s32 %s22, 1
    %s30 = ssub.s32 %s22, %s29
    %p31 = scmp.eq.s32.totalorder %s30, 0
    %s33 = sadd.s32 %s32, 1
    %s34 = scalar_select %p31, %s32, %s33
    %p37 = pneg %p31
    %p38 = scmp.eq.s32.totalorder %s22, 1
    %p39 = por %p37, %p38
    %p40 = scmp.ne.s32.totalorder %s32, %s35
    %p41 = scmp.eq.s32.totalorder %s22, 0
    %p42 = por %p40, %p41
    %p43 = scmp.ne.s32.totalorder %s32, %s35
    %p44 = scmp.eq.s32.totalorder %s27, 1
    %p45 = por %p43, %p44
    %p46 = scmp.ne.s32.totalorder %s35, %s36
    %p47 = scmp.eq.s32.totalorder %s27, 0
    %p48 = por %p46, %p47
    %p49 = scmp.ne.s32.totalorder %s35, %s36
    %p50 = scmp.eq.s32.totalorder %s28, 1
    %p51 = por %p49, %p50
    %p53 = scmp.ne.s32.totalorder %s36, %s52
    %p54 = scmp.eq.s32.totalorder %s28, 0
    %p55 = por %p53, %p54
    %s56 = ssub.s32 %s22, %s29
    %p57 = scmp.eq.s32.totalorder %s56, 0
    %s59 = sadd.s32 %s58, 1
    %s60 = scalar_select %p57, %s58, %s59
    %p63 = pneg %p57
    %p64 = scmp.eq.s32.totalorder %s22, 1
    %p65 = por %p63, %p64
    %p66 = scmp.ne.s32.totalorder %s58, %s61
    %p67 = scmp.eq.s32.totalorder %s22, 0
    %p68 = por %p66, %p67
    %p69 = scmp.ne.s32.totalorder %s58, %s61
    %p70 = scmp.eq.s32.totalorder %s27, 1
    %p71 = por %p69, %p70
    %p72 = scmp.ne.s32.totalorder %s61, %s62
    %p73 = scmp.eq.s32.totalorder %s27, 0
    %p74 = por %p72, %p73
    %p75 = scmp.ne.s32.totalorder %s61, %s62
    %p76 = scmp.eq.s32.totalorder %s28, 1
    %p77 = por %p75, %p76
    %p79 = scmp.ne.s32.totalorder %s62, %s78
    %p80 = scmp.eq.s32.totalorder %s28, 0
    %p81 = por %p79, %p80
    %s82 = ssub.s32 %s22, %s29
    %p83 = scmp.eq.s32.totalorder %s82, 0
    %s85 = sadd.s32 %s84, 1
    %s86 = scalar_select %p83, %s84, %s85
    %p89 = pneg %p83
    %p90 = scmp.eq.s32.totalorder %s22, 1
    %p91 = por %p89, %p90
    %p92 = scmp.ne.s32.totalorder %s84, %s87
    %p93 = scmp.eq.s32.totalorder %s22, 0
    %p94 = por %p92, %p93
    %p95 = scmp.ne.s32.totalorder %s84, %s87
    %p96 = scmp.eq.s32.totalorder %s27, 1
    %p97 = por %p95, %p96
    %p98 = scmp.ne.s32.totalorder %s87, %s88
    %p99 = scmp.eq.s32.totalorder %s27, 0
    %p100 = por %p98, %p99
    %p101 = scmp.ne.s32.totalorder %s87, %s88
    %p102 = scmp.eq.s32.totalorder %s28, 1
    %p103 = por %p101, %p102
    %p105 = scmp.ne.s32.totalorder %s88, %s104
    %p106 = scmp.eq.s32.totalorder %s28, 0
    %p107 = por %p105, %p106
    %s108 = ssub.s32 %s22, %s29
    %p109 = scmp.eq.s32.totalorder %s108, 0
    %s111 = sadd.s32 %s110, 1
    %s112 = scalar_select %p109, %s110, %s111
    %p115 = pneg %p109
    %p116 = scmp.eq.s32.totalorder %s22, 1
    %p117 = por %p115, %p116
    %p118 = scmp.ne.s32.totalorder %s110, %s113
    %p119 = scmp.eq.s32.totalorder %s22, 0
    %p120 = por %p118, %p119
    %p121 = scmp.ne.s32.totalorder %s110, %s113
    %p122 = scmp.eq.s32.totalorder %s27, 1
    %p123 = por %p121, %p122
    %p124 = scmp.ne.s32.totalorder %s113, %s114
    %p125 = scmp.eq.s32.totalorder %s27, 0
    %p126 = por %p124, %p125
    %p127 = scmp.ne.s32.totalorder %s113, %s114
    %p128 = scmp.eq.s32.totalorder %s28, 1
    %p129 = por %p127, %p128
    %p131 = scmp.ne.s32.totalorder %s114, %s130
    %p132 = scmp.eq.s32.totalorder %s28, 0
    %p133 = por %p131, %p132
    %s134 = ssub.s32 %s22, %s29
    %p135 = scmp.eq.s32.totalorder %s134, 0
    %s137 = sadd.s32 %s136, 1
    %s138 = scalar_select %p135, %s136, %s137
    %p141 = pneg %p135
    %p142 = scmp.eq.s32.totalorder %s22, 1
    %p143 = por %p141, %p142
    %p144 = scmp.ne.s32.totalorder %s136, %s139
    %p145 = scmp.eq.s32.totalorder %s22, 0
    %p146 = por %p144, %p145
    %p147 = scmp.ne.s32.totalorder %s136, %s139
    %p148 = scmp.eq.s32.totalorder %s27, 1
    %p149 = por %p147, %p148
    %p150 = scmp.ne.s32.totalorder %s139, %s140
    %p151 = scmp.eq.s32.totalorder %s27, 0
    %p152 = por %p150, %p151
    %p153 = scmp.ne.s32.totalorder %s139, %s140
    %p154 = scmp.eq.s32.totalorder %s28, 1
    %p155 = por %p153, %p154
    %p157 = scmp.ne.s32.totalorder %s140, %s156
    %p158 = scmp.eq.s32.totalorder %s28, 0
    %p159 = por %p157, %p158
    %s160 = ssub.s32 %s22, %s29
    %p161 = scmp.eq.s32.totalorder %s160, 0
    %s163 = sadd.s32 %s162, 1
    %s164 = scalar_select %p161, %s162, %s163
    %p167 = pneg %p161
    %p168 = scmp.eq.s32.totalorder %s22, 1
    %p169 = por %p167, %p168
    %p170 = scmp.ne.s32.totalorder %s162, %s165
    %p171 = scmp.eq.s32.totalorder %s22, 0
    %p172 = por %p170, %p171
    %p173 = scmp.ne.s32.totalorder %s162, %s165
    %p174 = scmp.eq.s32.totalorder %s27, 1
    %p175 = por %p173, %p174
    %p176 = scmp.ne.s32.totalorder %s165, %s166
    %p177 = scmp.eq.s32.totalorder %s27, 0
    %p178 = por %p176, %p177
    %p179 = scmp.ne.s32.totalorder %s165, %s166
    %p180 = scmp.eq.s32.totalorder %s28, 1
    %p181 = por %p179, %p180
    %p183 = scmp.ne.s32.totalorder %s166, %s182
    %p184 = scmp.eq.s32.totalorder %s28, 0
    %p185 = por %p183, %p184
    %s187 = sadd.s32 %s186, 1
    %p190 = scmp.eq.s32.totalorder %s22, 1
    %p191 = scmp.ne.s32.totalorder %s186, %s188
    %p192 = scmp.eq.s32.totalorder %s22, 0
    %p193 = por %p191, %p192
    %p194 = scmp.ne.s32.totalorder %s186, %s188
    %p195 = scmp.eq.s32.totalorder %s27, 1
    %p196 = por %p194, %p195
    %p197 = scmp.ne.s32.totalorder %s188, %s189
    %p198 = scmp.eq.s32.totalorder %s27, 0
    %p199 = por %p197, %p198
    %p200 = scmp.ne.s32.totalorder %s188, %s189
    %p201 = scmp.eq.s32.totalorder %s28, 1
    %p202 = por %p200, %p201
    %p204 = scmp.ne.s32.totalorder %s189, %s203
    %p205 = scmp.eq.s32.totalorder %s28, 0
    %p206 = por %p204, %p205
    %s208 = sadd.s32 %s207, 1
    %p211 = scmp.eq.s32.totalorder %s22, 1
    %p212 = scmp.ne.s32.totalorder %s207, %s209
    %p213 = scmp.eq.s32.totalorder %s22, 0
    %p214 = por %p212, %p213
    %p215 = scmp.ne.s32.totalorder %s207, %s209
    %p216 = scmp.eq.s32.totalorder %s27, 1
    %p217 = por %p215, %p216
    %p218 = scmp.ne.s32.totalorder %s209, %s210
    %p219 = scmp.eq.s32.totalorder %s27, 0
    %p220 = por %p218, %p219
    %p221 = scmp.ne.s32.totalorder %s209, %s210
    %p222 = scmp.eq.s32.totalorder %s28, 1
    %p223 = por %p221, %p222
    %p225 = scmp.ne.s32.totalorder %s210, %s224
    %p226 = scmp.eq.s32.totalorder %s28, 0
    %p227 = por %p225, %p226
    %s229 = sadd.s32 %s228, 1
    %p232 = scmp.eq.s32.totalorder %s22, 1
    %p233 = scmp.ne.s32.totalorder %s228, %s230
    %p234 = scmp.eq.s32.totalorder %s22, 0
    %p235 = por %p233, %p234
    %p236 = scmp.ne.s32.totalorder %s228, %s230
    %p237 = scmp.eq.s32.totalorder %s27, 1
    %p238 = por %p236, %p237
    %p239 = scmp.ne.s32.totalorder %s230, %s231
    %p240 = scmp.eq.s32.totalorder %s27, 0
    %p241 = por %p239, %p240
    %p242 = scmp.ne.s32.totalorder %s230, %s231
    %p243 = scmp.eq.s32.totalorder %s28, 1
    %p244 = por %p242, %p243
    %p246 = scmp.ne.s32.totalorder %s231, %s245
    %p247 = scmp.eq.s32.totalorder %s28, 0
    %p248 = por %p246, %p247
    %s250 = sadd.s32 %s249, 1
    %p253 = scmp.eq.s32.totalorder %s22, 1
    %p254 = scmp.ne.s32.totalorder %s249, %s251
    %p255 = scmp.eq.s32.totalorder %s22, 0
    %p256 = por %p254, %p255
    %p257 = scmp.ne.s32.totalorder %s249, %s251
    %p258 = scmp.eq.s32.totalorder %s27, 1
    %p259 = por %p257, %p258
    %p260 = scmp.ne.s32.totalorder %s251, %s252
    %p261 = scmp.eq.s32.totalorder %s27, 0
    %p262 = por %p260, %p261
    %p263 = scmp.ne.s32.totalorder %s251, %s252
    %p264 = scmp.eq.s32.totalorder %s28, 1
    %p265 = por %p263, %p264
    %p267 = scmp.ne.s32.totalorder %s252, %s266
    %p268 = scmp.eq.s32.totalorder %s28, 0
    %p269 = por %p267, %p268
    %s271 = sadd.s32 %s270, 1
    %p274 = scmp.eq.s32.totalorder %s22, 1
    %p275 = scmp.ne.s32.totalorder %s270, %s272
    %p276 = scmp.eq.s32.totalorder %s22, 0
    %p277 = por %p275, %p276
    %p278 = scmp.ne.s32.totalorder %s270, %s272
    %p279 = scmp.eq.s32.totalorder %s27, 1
    %p280 = por %p278, %p279
    %p281 = scmp.ne.s32.totalorder %s272, %s273
    %p282 = scmp.eq.s32.totalorder %s27, 0
    %p283 = por %p281, %p282
    %p284 = scmp.ne.s32.totalorder %s272, %s273
    %p285 = scmp.eq.s32.totalorder %s28, 1
    %p286 = por %p284, %p285
    %p288 = scmp.ne.s32.totalorder %s273, %s287
    %p289 = scmp.eq.s32.totalorder %s28, 0
    %p290 = por %p288, %p289
    %s292 = sadd.s32 %s291, 1
    %p295 = scmp.eq.s32.totalorder %s22, 1
    %p296 = scmp.ne.s32.totalorder %s291, %s293
    %p297 = scmp.eq.s32.totalorder %s22, 0
    %p298 = por %p296, %p297
    %p299 = scmp.ne.s32.totalorder %s291, %s293
    %p300 = scmp.eq.s32.totalorder %s27, 1
    %p301 = por %p299, %p300
    %p302 = scmp.ne.s32.totalorder %s293, %s294
    %p303 = scmp.eq.s32.totalorder %s27, 0
    %p304 = por %p302, %p303
    %p305 = scmp.ne.s32.totalorder %s293, %s294
    %p306 = scmp.eq.s32.totalorder %s28, 1
    %p307 = por %p305, %p306
    %p309 = scmp.ne.s32.totalorder %s294, %s308
    %p310 = scmp.eq.s32.totalorder %s28, 0
    %p311 = por %p309, %p310
    %s313 = sadd.s32 %s312, 1
    %p316 = scmp.eq.s32.totalorder %s22, 1
    %p317 = scmp.ne.s32.totalorder %s312, %s314
    %p318 = scmp.eq.s32.totalorder %s22, 0
    %p319 = por %p317, %p318
    %p320 = scmp.ne.s32.totalorder %s312, %s314
    %p321 = scmp.eq.s32.totalorder %s27, 1
    %p322 = por %p320, %p321
    %p323 = scmp.ne.s32.totalorder %s314, %s315
    %p324 = scmp.eq.s32.totalorder %s27, 0
    %p325 = por %p323, %p324
    %p326 = scmp.ne.s32.totalorder %s314, %s315
    %p327 = scmp.eq.s32.totalorder %s28, 1
    %p328 = por %p326, %p327
    %p330 = scmp.ne.s32.totalorder %s315, %s329
    %p331 = scmp.eq.s32.totalorder %s28, 0
    %p332 = por %p330, %p331
    %s334 = sadd.s32 %s333, 1
    %p337 = scmp.eq.s32.totalorder %s22, 1
    %p338 = scmp.ne.s32.totalorder %s333, %s335
    %p339 = scmp.eq.s32.totalorder %s22, 0
    %p340 = por %p338, %p339
    %p341 = scmp.ne.s32.totalorder %s333, %s335
    %p342 = scmp.eq.s32.totalorder %s27, 1
    %p343 = por %p341, %p342
    %p344 = scmp.ne.s32.totalorder %s335, %s336
    %p345 = scmp.eq.s32.totalorder %s27, 0
    %p346 = por %p344, %p345
    %p347 = scmp.ne.s32.totalorder %s335, %s336
    %p348 = scmp.eq.s32.totalorder %s28, 1
    %p349 = por %p347, %p348
    %p351 = scmp.ne.s32.totalorder %s336, %s350
    %p352 = scmp.eq.s32.totalorder %s28, 0
    %p353 = por %p351, %p352
    %s354 = ssub.s32 %s22, %s29
    %p355 = scmp.eq.s32.totalorder %s354, 0
    %s357 = sadd.s32 %s356, 1
    %s358 = scalar_select %p355, %s356, %s357
    %p361 = pneg %p355
    %p362 = scmp.eq.s32.totalorder %s22, 1
    %p363 = por %p361, %p362
    %p364 = scmp.ne.s32.totalorder %s356, %s359
    %p365 = scmp.eq.s32.totalorder %s22, 0
    %p366 = por %p364, %p365
    %p367 = scmp.ne.s32.totalorder %s356, %s359
    %p368 = scmp.eq.s32.totalorder %s27, 1
    %p369 = por %p367, %p368
    %p370 = scmp.ne.s32.totalorder %s359, %s360
    %p371 = scmp.eq.s32.totalorder %s27, 0
    %p372 = por %p370, %p371
    %p373 = scmp.ne.s32.totalorder %s359, %s360
    %p374 = scmp.eq.s32.totalorder %s28, 1
    %p375 = por %p373, %p374
    %p377 = scmp.ne.s32.totalorder %s360, %s376
    %p378 = scmp.eq.s32.totalorder %s28, 0
    %p379 = por %p377, %p378
    %s380 = ssub.s32 %s22, %s29
    %p381 = scmp.eq.s32.totalorder %s380, 0
    %s383 = sadd.s32 %s382, 1
    %s384 = scalar_select %p381, %s382, %s383
    %p387 = pneg %p381
    %p388 = scmp.eq.s32.totalorder %s22, 1
    %p389 = por %p387, %p388
    %p390 = scmp.ne.s32.totalorder %s382, %s385
    %p391 = scmp.eq.s32.totalorder %s22, 0
    %p392 = por %p390, %p391
    %p393 = scmp.ne.s32.totalorder %s382, %s385
    %p394 = scmp.eq.s32.totalorder %s27, 1
    %p395 = por %p393, %p394
    %p396 = scmp.ne.s32.totalorder %s385, %s386
    %p397 = scmp.eq.s32.totalorder %s27, 0
    %p398 = por %p396, %p397
    %p399 = scmp.ne.s32.totalorder %s385, %s386
    %p400 = scmp.eq.s32.totalorder %s28, 1
    %p401 = por %p399, %p400
    %p403 = scmp.ne.s32.totalorder %s386, %s402
    %p404 = scmp.eq.s32.totalorder %s28, 0
    %p405 = por %p403, %p404
    %p406 = scmp.le.s32.totalorder 1, %s22
    %p407 = scmp.lt.s32.totalorder %s22, 3
    %p408 = pnand %p406, %p407
    %p409 = pneg %p408
    // Predicated region
    $region9: #{tpu_custom_call.1} parent=5 // pred_check
      _
    $region10: #{tpu_custom_call.1} parent=5 // pred_check_branch
      %411 = sbr.rel (%p408) target = $region12
    $region11: #{tpu_custom_call.1} parent=5 // pred_region
      %s412 = ssub.s32 %s22, 1
      // Predicated region
      $region13: #{tpu_custom_call.1} parent=11 // pred_check
        %p413 = pneg %p199
      $region14: #{tpu_custom_call.1} parent=11 // pred_check_branch
        %415 = sbr.rel (%p413) target = $region16
      $region15: #{tpu_custom_call.1} parent=11 // pred_region
        _
      $region16: #{tpu_custom_call.1} parent=11 // pred_fallthru
        _
      // Predicated region
      $region17: #{tpu_custom_call.1} parent=11 // pred_check
        %p416 = pneg %p220
      $region18: #{tpu_custom_call.1} parent=11 // pred_check_branch
        %418 = sbr.rel (%p416) target = $region20
      $region19: #{tpu_custom_call.1} parent=11 // pred_region
        _
      $region20: #{tpu_custom_call.1} parent=11 // pred_fallthru
        _
      // Predicated region
      $region21: #{tpu_custom_call.1} parent=11 // pred_check
        %p419 = pneg %p241
      $region22: #{tpu_custom_call.1} parent=11 // pred_check_branch
        %421 = sbr.rel (%p419) target = $region24
      $region23: #{tpu_custom_call.1} parent=11 // pred_region
        _
      $region24: #{tpu_custom_call.1} parent=11 // pred_fallthru
        _
      // Predicated region
      $region25: #{tpu_custom_call.1} parent=11 // pred_check
        %p422 = pneg %p262
      $region26: #{tpu_custom_call.1} parent=11 // pred_check_branch
        %424 = sbr.rel (%p422) target = $region28
      $region27: #{tpu_custom_call.1} parent=11 // pred_region
        _
      $region28: #{tpu_custom_call.1} parent=11 // pred_fallthru
        _
      // Predicated region
      $region29: #{tpu_custom_call.1} parent=11 // pred_check
        %p425 = pneg %p283
      $region30: #{tpu_custom_call.1} parent=11 // pred_check_branch
        %427 = sbr.rel (%p425) target = $region32
      $region31: #{tpu_custom_call.1} parent=11 // pred_region
        _
      $region32: #{tpu_custom_call.1} parent=11 // pred_fallthru
        _
      // Predicated region
      $region33: #{tpu_custom_call.1} parent=11 // pred_check
        %p428 = pneg %p304
      $region34: #{tpu_custom_call.1} parent=11 // pred_check_branch
        %430 = sbr.rel (%p428) target = $region36
      $region35: #{tpu_custom_call.1} parent=11 // pred_region
        _
      $region36: #{tpu_custom_call.1} parent=11 // pred_fallthru
        _
      // Predicated region
      $region37: #{tpu_custom_call.1} parent=11 // pred_check
        %p431 = pneg %p325
      $region38: #{tpu_custom_call.1} parent=11 // pred_check_branch
        %433 = sbr.rel (%p431) target = $region40
      $region39: #{tpu_custom_call.1} parent=11 // pred_region
        _
      $region40: #{tpu_custom_call.1} parent=11 // pred_fallthru
        _
      // Predicated region
      $region41: #{tpu_custom_call.1} parent=11 // pred_check
        %p434 = pneg %p346
      $region42: #{tpu_custom_call.1} parent=11 // pred_check_branch
        %436 = sbr.rel (%p434) target = $region44
      $region43: #{tpu_custom_call.1} parent=11 // pred_region
        _
      $region44: #{tpu_custom_call.1} parent=11 // pred_fallthru
        _
    $region12: #{tpu_custom_call.1} parent=5 // pred_fallthru
      _
    %p437 = scmp.lt.s32.totalorder %s22, 2
    // Predicated region
    $region45: #{tpu_custom_call.1} parent=5 // pred_check
      %p438 = pneg %p437
    $region46: #{tpu_custom_call.1} parent=5 // pred_check_branch
      %440 = sbr.rel (%p438) target = $region48
    $region47: #{tpu_custom_call.1} parent=5 // pred_region
      // Predicated region
      $region49: #{tpu_custom_call.1} parent=47 // pred_check
        %p441 = pneg %p42
      $region50: #{tpu_custom_call.1} parent=47 // pred_check_branch
        %443 = sbr.rel (%p441) target = $region52
      $region51: #{tpu_custom_call.1} parent=47 // pred_region
        %s444 = smul.u32 32, %s22
        %p445 = scmp.lt.s32.totalorder %s444, 63
        %s446 = scalar_select %p445, %s444, 63
        %s447 = smul.addr %s446, 8
        %s448 = scalar_lea.vmem %s0, %s447
        %s449 = smul.u32 32, %s22
      $region52: #{tpu_custom_call.1} parent=47 // pred_fallthru
        _
      // Predicated region
      $region53: #{tpu_custom_call.1} parent=47 // pred_check
        %p450 = pneg %p68
      $region54: #{tpu_custom_call.1} parent=47 // pred_check_branch
        %452 = sbr.rel (%p450) target = $region56
      $region55: #{tpu_custom_call.1} parent=47 // pred_region
        %s453 = smul.u32 32, %s22
        %p454 = scmp.lt.s32.totalorder %s453, 63
        %s455 = scalar_select %p454, %s453, 63
        %s456 = smul.addr %s455, 8
        %s457 = scalar_lea.vmem %s1, %s456
        %s458 = smul.u32 32, %s22
      $region56: #{tpu_custom_call.1} parent=47 // pred_fallthru
        _
      // Predicated region
      $region57: #{tpu_custom_call.1} parent=47 // pred_check
        %p459 = pneg %p94
      $region58: #{tpu_custom_call.1} parent=47 // pred_check_branch
        %461 = sbr.rel (%p459) target = $region60
      $region59: #{tpu_custom_call.1} parent=47 // pred_region
        %s462 = smul.u32 16, %s22
        %p463 = scmp.lt.s32.totalorder %s462, 31
        %s464 = scalar_select %p463, %s462, 31
        %s465 = smul.addr %s464, 8
        %s466 = scalar_lea.vmem %s2, %s465
        %s467 = smul.u32 16, %s22
      $region60: #{tpu_custom_call.1} parent=47 // pred_fallthru
        _
      // Predicated region
      $region61: #{tpu_custom_call.1} parent=47 // pred_check
        %p468 = pneg %p120
      $region62: #{tpu_custom_call.1} parent=47 // pred_check_branch
        %470 = sbr.rel (%p468) target = $region64
      $region63: #{tpu_custom_call.1} parent=47 // pred_region
        %s471 = smul.u32 16, %s22
        %p472 = scmp.lt.s32.totalorder %s471, 31
        %s473 = scalar_select %p472, %s471, 31
        %s474 = smul.addr %s473, 8
        %s475 = scalar_lea.vmem %s3, %s474
        %s476 = smul.u32 16, %s22
      $region64: #{tpu_custom_call.1} parent=47 // pred_fallthru
        _
      // Predicated region
      $region65: #{tpu_custom_call.1} parent=47 // pred_check
        %p477 = pneg %p146
      $region66: #{tpu_custom_call.1} parent=47 // pred_check_branch
        %479 = sbr.rel (%p477) target = $region68
      $region67: #{tpu_custom_call.1} parent=47 // pred_region
        %s480 = smul.u32 16, %s22
        %p481 = scmp.lt.s32.totalorder %s480, 31
        %s482 = scalar_select %p481, %s480, 31
        %s483 = smul.addr %s482, 8
        %s484 = scalar_lea.vmem %s4, %s483
        %s485 = smul.u32 16, %s22
      $region68: #{tpu_custom_call.1} parent=47 // pred_fallthru
        _
      // Predicated region
      $region69: #{tpu_custom_call.1} parent=47 // pred_check
        %p486 = pneg %p172
      $region70: #{tpu_custom_call.1} parent=47 // pred_check_branch
        %488 = sbr.rel (%p486) target = $region72
      $region71: #{tpu_custom_call.1} parent=47 // pred_region
        %s489 = smul.u32 16, %s22
        %p490 = scmp.lt.s32.totalorder %s489, 31
        %s491 = scalar_select %p490, %s489, 31
        %s492 = smul.addr %s491, 8
        %s493 = scalar_lea.vmem %s5, %s492
        %s494 = smul.u32 16, %s22
      $region72: #{tpu_custom_call.1} parent=47 // pred_fallthru
        _
    $region48: #{tpu_custom_call.1} parent=5 // pred_fallthru
      _
    %p495 = scmp.le.s32.totalorder 1, %s22
    %p496 = scmp.lt.s32.totalorder %s22, 3
    %p497 = pnand %p495, %p496
    %p498 = pneg %p497
    // Predicated region
    $region73: #{tpu_custom_call.1} parent=5 // pred_check
      _
    $region74: #{tpu_custom_call.1} parent=5 // pred_check_branch
      %500 = sbr.rel (%p497) target = $region76
    $region75: #{tpu_custom_call.1} parent=5 // pred_region
      %s501 = ssub.s32 %s22, 1
      %s502 = smul.u32 32, %s27
      %p503 = scmp.lt.s32.totalorder %s502, 63
      %s504 = scalar_select %p503, %s502, 63
      %s505 = smul.addr %s504, 8
      %s506 = scalar_lea.vmem %s0, %s505
      %p507 = pneg %p48
      %p508 = pneg %p45
      %s509 = smul.u32 32, %s27
      %p510 = scmp.lt.s32.totalorder %s509, 63
      %s511 = scalar_select %p510, %s509, 63
      %s512 = smul.addr %s511, 8
      %s513 = scalar_lea.vmem %s1, %s512
      %p514 = pneg %p74
      %p515 = pneg %p71
      %s516 = smul.u32 16, %s27
      %p517 = scmp.lt.s32.totalorder %s516, 31
      %s518 = scalar_select %p517, %s516, 31
      %s519 = smul.addr %s518, 8
      %s520 = scalar_lea.vmem %s2, %s519
      %p521 = pneg %p100
      %p522 = pneg %p97
      %s523 = smul.u32 16, %s27
      %p524 = scmp.lt.s32.totalorder %s523, 31
      %s525 = scalar_select %p524, %s523, 31
      %s526 = smul.addr %s525, 8
      %s527 = scalar_lea.vmem %s3, %s526
      %p528 = pneg %p126
      %p529 = pneg %p123
      %s530 = smul.u32 16, %s27
      %p531 = scmp.lt.s32.totalorder %s530, 31
      %s532 = scalar_select %p531, %s530, 31
      %s533 = smul.addr %s532, 8
      %s534 = scalar_lea.vmem %s4, %s533
      %p535 = pneg %p152
      %p536 = pneg %p149
      %s537 = smul.u32 16, %s27
      %p538 = scmp.lt.s32.totalorder %s537, 31
      %s539 = scalar_select %p538, %s537, 31
      %s540 = smul.addr %s539, 8
      %s541 = scalar_lea.vmem %s5, %s540
      %p542 = pneg %p178
      %p543 = pneg %p175
      %p544 = pneg %p199
      %p545 = pneg %p196
      %p546 = pneg %p220
      %p547 = pneg %p217
      %p548 = pneg %p241
      %p549 = pneg %p238
      %p550 = pneg %p262
      %p551 = pneg %p259
      %p552 = pneg %p283
      %p553 = pneg %p280
      %p554 = pneg %p304
      %p555 = pneg %p301
      %p556 = pneg %p325
      %p557 = pneg %p322
      %p558 = pneg %p346
      %p559 = pneg %p343
      %p560 = pneg %p372
      %p561 = pneg %p369
      %s562 = smul.u32 32, %s27
      %p563 = scmp.lt.s32.totalorder %s562, 63
      %s564 = scalar_select %p563, %s562, 63
      %s565 = smul.addr %s564, 8
      %s566 = scalar_lea.vmem %s14, %s565
      %p567 = pneg %p398
      %p568 = pneg %p395
      %s569 = smul.u32 32, %s27
      %p570 = scmp.lt.s32.totalorder %s569, 63
      %s571 = scalar_select %p570, %s569, 63
      %s572 = smul.addr %s571, 8
      %s573 = scalar_lea.vmem %s15, %s572
      %s574 = smul.u32 32, %s27
      %p575 = scmp.lt.s32.totalorder %s574, 63
      %s576 = scalar_select %p575, %s574, 63
      %s577 = smul.addr %s576, 8
      %s578 = scalar_lea.vmem %s0, %s577
      %s579 = smul.u32 32, %s27
      %s580 = smul.u32 32, %s27
      %p581 = scmp.lt.s32.totalorder %s580, 63
      %s582 = scalar_select %p581, %s580, 63
      %s583 = smul.addr %s582, 8
      %s584 = scalar_lea.vmem %s1, %s583
      %s585 = smul.u32 32, %s27
      %s586 = smul.u32 16, %s27
      %p587 = scmp.lt.s32.totalorder %s586, 31
      %s588 = scalar_select %p587, %s586, 31
      %s589 = smul.addr %s588, 8
      %s590 = scalar_lea.vmem %s2, %s589
      %s591 = smul.u32 16, %s27
      %s592 = smul.u32 16, %s27
      %p593 = scmp.lt.s32.totalorder %s592, 31
      %s594 = scalar_select %p593, %s592, 31
      %s595 = smul.addr %s594, 8
      %s596 = scalar_lea.vmem %s3, %s595
      %s597 = smul.u32 16, %s27
      %s598 = smul.u32 16, %s27
      %p599 = scmp.lt.s32.totalorder %s598, 31
      %s600 = scalar_select %p599, %s598, 31
      %s601 = smul.addr %s600, 8
      %s602 = scalar_lea.vmem %s4, %s601
      %s603 = smul.u32 16, %s27
      %s604 = smul.u32 16, %s27
      %p605 = scmp.lt.s32.totalorder %s604, 31
      %s606 = scalar_select %p605, %s604, 31
      %s607 = smul.addr %s606, 8
      %s608 = scalar_lea.vmem %s5, %s607
      %s609 = smul.u32 16, %s27
      %s610 = smul.u32 32, %s27
      %p611 = scmp.lt.s32.totalorder %s610, 63
      %s612 = scalar_select %p611, %s610, 63
      %s613 = smul.addr %s612, 8
      %s614 = scalar_lea.vmem %s14, %s613
      %s615 = smul.u32 32, %s27
      %s616 = smul.u32 32, %s27
      %p617 = scmp.lt.s32.totalorder %s616, 63
      %s618 = scalar_select %p617, %s616, 63
      %s619 = smul.addr %s618, 8
      %s620 = scalar_lea.vmem %s15, %s619
      %s621 = smul.u32 32, %s27
      %v622 = vld [vmem:[%s602] sm:$0xff]
      %v623 = vld [vmem:[%s602 + $0x8] sm:$0xff]
      %v624 = vld [vmem:[%s602 + $0x10] sm:$0xff]
      %v625 = vld [vmem:[%s602 + $0x18] sm:$0xff]
      %v626 = vld [vmem:[%s602 + $0x20] sm:$0xff]
      %v627 = vld [vmem:[%s602 + $0x28] sm:$0xff]
      %v628 = vld [vmem:[%s602 + $0x30] sm:$0xff]
      %v629 = vld [vmem:[%s602 + $0x38] sm:$0xff]
      %v630 = vld [vmem:[%s602 + $0x40] sm:$0xff]
      %v631 = vld [vmem:[%s602 + $0x48] sm:$0xff]
      %v632 = vld [vmem:[%s602 + $0x50] sm:$0xff]
      %v633 = vld [vmem:[%s602 + $0x58] sm:$0xff]
      %v634 = vld [vmem:[%s602 + $0x60] sm:$0xff]
      %v635 = vld [vmem:[%s602 + $0x68] sm:$0xff]
      %v636 = vld [vmem:[%s602 + $0x70] sm:$0xff]
      %v637 = vld [vmem:[%s602 + $0x78] sm:$0xff]
      %v638 = vld [vmem:[%s608] sm:$0xff]
      %v639 = vld [vmem:[%s608 + $0x8] sm:$0xff]
      %v640 = vld [vmem:[%s608 + $0x10] sm:$0xff]
      %v641 = vld [vmem:[%s608 + $0x18] sm:$0xff]
      %v642 = vld [vmem:[%s608 + $0x20] sm:$0xff]
      %v643 = vld [vmem:[%s608 + $0x28] sm:$0xff]
      %v644 = vld [vmem:[%s608 + $0x30] sm:$0xff]
      %v645 = vld [vmem:[%s608 + $0x38] sm:$0xff]
      %v646 = vld [vmem:[%s608 + $0x40] sm:$0xff]
      %v647 = vld [vmem:[%s608 + $0x48] sm:$0xff]
      %v648 = vld [vmem:[%s608 + $0x50] sm:$0xff]
      %v649 = vld [vmem:[%s608 + $0x58] sm:$0xff]
      %v650 = vld [vmem:[%s608 + $0x60] sm:$0xff]
      %v651 = vld [vmem:[%s608 + $0x68] sm:$0xff]
      %v652 = vld [vmem:[%s608 + $0x70] sm:$0xff]
      %v653 = vld [vmem:[%s608 + $0x78] sm:$0xff]
      %v654 = vld [vmem:[%s6] sm:$0xff]
      %v655 = vld [vmem:[%s6 + $0x8] sm:$0xff]
      %v656 = vld [vmem:[%s7] sm:$0xff]
      %v657 = vld [vmem:[%s7 + $0x8] sm:$0xff]
      %vm658 = vcmask 130048
      %v660 = vsel %vm658, %v622, 0
      %v663 = vsel %vm658, %v623, 0
      %v666 = vsel %vm658, %v624, 0
      %v669 = vsel %vm658, %v625, 0
      %v672 = vsel %vm658, %v626, 0
      %v675 = vsel %vm658, %v627, 0
      %v678 = vsel %vm658, %v628, 0
      %v681 = vsel %vm658, %v629, 0
      %v684 = vsel %vm658, %v630, 0
      %v687 = vsel %vm658, %v631, 0
      %v690 = vsel %vm658, %v632, 0
      %v693 = vsel %vm658, %v633, 0
      %v696 = vsel %vm658, %v634, 0
      %v699 = vsel %vm658, %v635, 0
      %v702 = vsel %vm658, %v636, 0
      %v705 = vsel %vm658, %v637, 0
      %707 = vmatpush.msra.mxu0 0.0
      %708 = vmatpush.msra.mxu0 0.0
      %709 = vmatpush.msra.mxu0 0.0
      %710 = vmatpush.msra.mxu0 0.0
      %711 = vmatpush.msra.mxu0 0.0
      %712 = vmatpush.msra.mxu0 0.0
      %713 = vmatpush.msra.mxu0 0.0
      %714 = vmatpush.msra.mxu0 0.0
      %715 = vmatpush.msra.mxu0 0.0
      %716 = vmatpush.msra.mxu0 0.0
      %717 = vmatpush.msra.mxu0 0.0
      %718 = vmatpush.msra.mxu0 0.0
      %719 = vmatpush.msra.mxu0 0.0
      %720 = vmatpush.msra.mxu0 0.0
      %721 = vmatpush.msra.mxu0 %v655
      %722 = vmatpush.msra.mxu0 %v654
      %723 = vmatmul.f32.gmra.mxu0 %v660
      %v724 = vpop.f32.mrf.mxu0
      %v725 = vadd.f32 0.0, %v724
      %726 = vmatmul.f32.gmra.mxu0 %v663
      %v727 = vpop.f32.mrf.mxu0
      %v728 = vadd.f32 0.0, %v727
      %729 = vmatmul.f32.gmra.mxu0 %v666
      %v730 = vpop.f32.mrf.mxu0
      %v731 = vadd.f32 0.0, %v730
      %732 = vmatmul.f32.gmra.mxu0 %v669
      %v733 = vpop.f32.mrf.mxu0
      %v734 = vadd.f32 0.0, %v733
      %735 = vmatmul.f32.gmra.mxu0 %v672
      %v736 = vpop.f32.mrf.mxu0
      %v737 = vadd.f32 0.0, %v736
      %738 = vmatmul.f32.gmra.mxu0 %v675
      %v739 = vpop.f32.mrf.mxu0
      %v740 = vadd.f32 0.0, %v739
      %741 = vmatmul.f32.gmra.mxu0 %v678
      %v742 = vpop.f32.mrf.mxu0
      %v743 = vadd.f32 0.0, %v742
      %744 = vmatmul.f32.gmra.mxu0 %v681
      %v745 = vpop.f32.mrf.mxu0
      %v746 = vadd.f32 0.0, %v745
      %747 = vmatmul.f32.gmra.mxu0 %v684
      %v748 = vpop.f32.mrf.mxu0
      %v749 = vadd.f32 0.0, %v748
      %750 = vmatmul.f32.gmra.mxu0 %v687
      %v751 = vpop.f32.mrf.mxu0
      %v752 = vadd.f32 0.0, %v751
      %753 = vmatmul.f32.gmra.mxu0 %v690
      %v754 = vpop.f32.mrf.mxu0
      %v755 = vadd.f32 0.0, %v754
      %756 = vmatmul.f32.gmra.mxu0 %v693
      %v757 = vpop.f32.mrf.mxu0
      %v758 = vadd.f32 0.0, %v757
      %759 = vmatmul.f32.gmra.mxu0 %v696
      %v760 = vpop.f32.mrf.mxu0
      %v761 = vadd.f32 0.0, %v760
      %762 = vmatmul.f32.gmra.mxu0 %v699
      %v763 = vpop.f32.mrf.mxu0
      %v764 = vadd.f32 0.0, %v763
      %765 = vmatmul.f32.gmra.mxu0 %v702
      %v766 = vpop.f32.mrf.mxu0
      %v767 = vadd.f32 0.0, %v766
      %768 = vmatmul.f32.gmra.mxu0 %v705
      %v769 = vpop.f32.mrf.mxu0
      %v770 = vadd.f32 0.0, %v769
      %771 = vdwg.mxu0
      %v773 = vsel %vm658, %v638, 0
      %v776 = vsel %vm658, %v639, 0
      %v779 = vsel %vm658, %v640, 0
      %v782 = vsel %vm658, %v641, 0
      %v785 = vsel %vm658, %v642, 0
      %v788 = vsel %vm658, %v643, 0
      %v791 = vsel %vm658, %v644, 0
      %v794 = vsel %vm658, %v645, 0
      %v797 = vsel %vm658, %v646, 0
      %v800 = vsel %vm658, %v647, 0
      %v803 = vsel %vm658, %v648, 0
      %v806 = vsel %vm658, %v649, 0
      %v809 = vsel %vm658, %v650, 0
      %v812 = vsel %vm658, %v651, 0
      %v815 = vsel %vm658, %v652, 0
      %v818 = vsel %vm658, %v653, 0
      %820 = vmatpush.msra.mxu0 0.0
      %821 = vmatpush.msra.mxu0 0.0
      %822 = vmatpush.msra.mxu0 0.0
      %823 = vmatpush.msra.mxu0 0.0
      %824 = vmatpush.msra.mxu0 0.0
      %825 = vmatpush.msra.mxu0 0.0
      %826 = vmatpush.msra.mxu0 0.0
      %827 = vmatpush.msra.mxu0 0.0
      %828 = vmatpush.msra.mxu0 0.0
      %829 = vmatpush.msra.mxu0 0.0
      %830 = vmatpush.msra.mxu0 0.0
      %831 = vmatpush.msra.mxu0 0.0
      %832 = vmatpush.msra.mxu0 0.0
      %833 = vmatpush.msra.mxu0 0.0
      %834 = vmatpush.msra.mxu0 %v657
      %835 = vmatpush.msra.mxu0 %v656
      %836 = vmatmul.f32.gmra.mxu0 %v773
      %v837 = vpop.f32.mrf.mxu0
      %v838 = vadd.f32 0.0, %v837
      %839 = vmatmul.f32.gmra.mxu0 %v776
      %v840 = vpop.f32.mrf.mxu0
      %v841 = vadd.f32 0.0, %v840
      %842 = vmatmul.f32.gmra.mxu0 %v779
      %v843 = vpop.f32.mrf.mxu0
      %v844 = vadd.f32 0.0, %v843
      %845 = vmatmul.f32.gmra.mxu0 %v782
      %v846 = vpop.f32.mrf.mxu0
      %v847 = vadd.f32 0.0, %v846
      %848 = vmatmul.f32.gmra.mxu0 %v785
      %v849 = vpop.f32.mrf.mxu0
      %v850 = vadd.f32 0.0, %v849
      %851 = vmatmul.f32.gmra.mxu0 %v788
      %v852 = vpop.f32.mrf.mxu0
      %v853 = vadd.f32 0.0, %v852
      %854 = vmatmul.f32.gmra.mxu0 %v791
      %v855 = vpop.f32.mrf.mxu0
      %v856 = vadd.f32 0.0, %v855
      %857 = vmatmul.f32.gmra.mxu0 %v794
      %v858 = vpop.f32.mrf.mxu0
      %v859 = vadd.f32 0.0, %v858
      %860 = vmatmul.f32.gmra.mxu0 %v797
      %v861 = vpop.f32.mrf.mxu0
      %v862 = vadd.f32 0.0, %v861
      %863 = vmatmul.f32.gmra.mxu0 %v800
      %v864 = vpop.f32.mrf.mxu0
      %v865 = vadd.f32 0.0, %v864
      %866 = vmatmul.f32.gmra.mxu0 %v803
      %v867 = vpop.f32.mrf.mxu0
      %v868 = vadd.f32 0.0, %v867
      %869 = vmatmul.f32.gmra.mxu0 %v806
      %v870 = vpop.f32.mrf.mxu0
      %v871 = vadd.f32 0.0, %v870
      %872 = vmatmul.f32.gmra.mxu0 %v809
      %v873 = vpop.f32.mrf.mxu0
      %v874 = vadd.f32 0.0, %v873
      %875 = vmatmul.f32.gmra.mxu0 %v812
      %v876 = vpop.f32.mrf.mxu0
      %v877 = vadd.f32 0.0, %v876
      %878 = vmatmul.f32.gmra.mxu0 %v815
      %v879 = vpop.f32.mrf.mxu0
      %v880 = vadd.f32 0.0, %v879
      %881 = vmatmul.f32.gmra.mxu0 %v818
      %v882 = vpop.f32.mrf.mxu0
      %v883 = vadd.f32 0.0, %v882
      %884 = vdwg.mxu0
      %v885 = vsub.f32 %v725, %v838
      %v886 = vsub.f32 %v728, %v841
      %v887 = vsub.f32 %v731, %v844
      %v888 = vsub.f32 %v734, %v847
      %v889 = vsub.f32 %v737, %v850
      %v890 = vsub.f32 %v740, %v853
      %v891 = vsub.f32 %v743, %v856
      %v892 = vsub.f32 %v746, %v859
      %v893 = vsub.f32 %v749, %v862
      %v894 = vsub.f32 %v752, %v865
      %v895 = vsub.f32 %v755, %v868
      %v896 = vsub.f32 %v758, %v871
      %v897 = vsub.f32 %v761, %v874
      %v898 = vsub.f32 %v764, %v877
      %v899 = vsub.f32 %v767, %v880
      %v900 = vsub.f32 %v770, %v883
      %901 = vmatpush.msra.mxu0 0.0
      %902 = vmatpush.msra.mxu0 0.0
      %903 = vmatpush.msra.mxu0 0.0
      %904 = vmatpush.msra.mxu0 0.0
      %905 = vmatpush.msra.mxu0 0.0
      %906 = vmatpush.msra.mxu0 0.0
      %907 = vmatpush.msra.mxu0 0.0
      %908 = vmatpush.msra.mxu0 0.0
      %909 = vmatpush.msra.mxu0 0.0
      %910 = vmatpush.msra.mxu0 0.0
      %911 = vmatpush.msra.mxu0 0.0
      %912 = vmatpush.msra.mxu0 0.0
      %913 = vmatpush.msra.mxu0 0.0
      %914 = vmatpush.msra.mxu0 0.0
      %915 = vmatpush.msra.mxu0 %v655
      %916 = vmatpush.msra.mxu0 %v654
      %917 = vmatmul.f32.gmra.mxu0 %v773
      %v918 = vpop.f32.mrf.mxu0
      %v919 = vadd.f32 0.0, %v918
      %920 = vmatmul.f32.gmra.mxu0 %v776
      %v921 = vpop.f32.mrf.mxu0
      %v922 = vadd.f32 0.0, %v921
      %923 = vmatmul.f32.gmra.mxu0 %v779
      %v924 = vpop.f32.mrf.mxu0
      %v925 = vadd.f32 0.0, %v924
      %926 = vmatmul.f32.gmra.mxu0 %v782
      %v927 = vpop.f32.mrf.mxu0
      %v928 = vadd.f32 0.0, %v927
      %929 = vmatmul.f32.gmra.mxu0 %v785
      %v930 = vpop.f32.mrf.mxu0
      %v931 = vadd.f32 0.0, %v930
      %932 = vmatmul.f32.gmra.mxu0 %v788
      %v933 = vpop.f32.mrf.mxu0
      %v934 = vadd.f32 0.0, %v933
      %935 = vmatmul.f32.gmra.mxu0 %v791
      %v936 = vpop.f32.mrf.mxu0
      %v937 = vadd.f32 0.0, %v936
      %938 = vmatmul.f32.gmra.mxu0 %v794
      %v939 = vpop.f32.mrf.mxu0
      %v940 = vadd.f32 0.0, %v939
      %941 = vmatmul.f32.gmra.mxu0 %v797
      %v942 = vpop.f32.mrf.mxu0
      %v943 = vadd.f32 0.0, %v942
      %944 = vmatmul.f32.gmra.mxu0 %v800
      %v945 = vpop.f32.mrf.mxu0
      %v946 = vadd.f32 0.0, %v945
      %947 = vmatmul.f32.gmra.mxu0 %v803
      %v948 = vpop.f32.mrf.mxu0
      %v949 = vadd.f32 0.0, %v948
      %950 = vmatmul.f32.gmra.mxu0 %v806
      %v951 = vpop.f32.mrf.mxu0
      %v952 = vadd.f32 0.0, %v951
      %953 = vmatmul.f32.gmra.mxu0 %v809
      %v954 = vpop.f32.mrf.mxu0
      %v955 = vadd.f32 0.0, %v954
      %956 = vmatmul.f32.gmra.mxu0 %v812
      %v957 = vpop.f32.mrf.mxu0
      %v958 = vadd.f32 0.0, %v957
      %959 = vmatmul.f32.gmra.mxu0 %v815
      %v960 = vpop.f32.mrf.mxu0
      %v961 = vadd.f32 0.0, %v960
      %962 = vmatmul.f32.gmra.mxu0 %v818
      %v963 = vpop.f32.mrf.mxu0
      %v964 = vadd.f32 0.0, %v963
      %965 = vdwg.mxu0
      %966 = vmatpush.msra.mxu0 0.0
      %967 = vmatpush.msra.mxu0 0.0
      %968 = vmatpush.msra.mxu0 0.0
      %969 = vmatpush.msra.mxu0 0.0
      %970 = vmatpush.msra.mxu0 0.0
      %971 = vmatpush.msra.mxu0 0.0
      %972 = vmatpush.msra.mxu0 0.0
      %973 = vmatpush.msra.mxu0 0.0
      %974 = vmatpush.msra.mxu0 0.0
      %975 = vmatpush.msra.mxu0 0.0
      %976 = vmatpush.msra.mxu0 0.0
      %977 = vmatpush.msra.mxu0 0.0
      %978 = vmatpush.msra.mxu0 0.0
      %979 = vmatpush.msra.mxu0 0.0
      %980 = vmatpush.msra.mxu0 %v657
      %981 = vmatpush.msra.mxu0 %v656
      %982 = vmatmul.f32.gmra.mxu0 %v660
      %v983 = vpop.f32.mrf.mxu0
      %v984 = vadd.f32 %v919, %v983
      %985 = vmatmul.f32.gmra.mxu0 %v663
      %v986 = vpop.f32.mrf.mxu0
      %v987 = vadd.f32 %v922, %v986
      %988 = vmatmul.f32.gmra.mxu0 %v666
      %v989 = vpop.f32.mrf.mxu0
      %v990 = vadd.f32 %v925, %v989
      %991 = vmatmul.f32.gmra.mxu0 %v669
      %v992 = vpop.f32.mrf.mxu0
      %v993 = vadd.f32 %v928, %v992
      %994 = vmatmul.f32.gmra.mxu0 %v672
      %v995 = vpop.f32.mrf.mxu0
      %v996 = vadd.f32 %v931, %v995
      %997 = vmatmul.f32.gmra.mxu0 %v675
      %v998 = vpop.f32.mrf.mxu0
      %v999 = vadd.f32 %v934, %v998
      %1000 = vmatmul.f32.gmra.mxu0 %v678
      %v1001 = vpop.f32.mrf.mxu0
      %v1002 = vadd.f32 %v937, %v1001
      %1003 = vmatmul.f32.gmra.mxu0 %v681
      %v1004 = vpop.f32.mrf.mxu0
      %v1005 = vadd.f32 %v940, %v1004
      %1006 = vmatmul.f32.gmra.mxu0 %v684
      %v1007 = vpop.f32.mrf.mxu0
      %v1008 = vadd.f32 %v943, %v1007
      %1009 = vmatmul.f32.gmra.mxu0 %v687
      %v1010 = vpop.f32.mrf.mxu0
      %v1011 = vadd.f32 %v946, %v1010
      %1012 = vmatmul.f32.gmra.mxu0 %v690
      %v1013 = vpop.f32.mrf.mxu0
      %v1014 = vadd.f32 %v949, %v1013
      %1015 = vmatmul.f32.gmra.mxu0 %v693
      %v1016 = vpop.f32.mrf.mxu0
      %v1017 = vadd.f32 %v952, %v1016
      %1018 = vmatmul.f32.gmra.mxu0 %v696
      %v1019 = vpop.f32.mrf.mxu0
      %v1020 = vadd.f32 %v955, %v1019
      %1021 = vmatmul.f32.gmra.mxu0 %v699
      %v1022 = vpop.f32.mrf.mxu0
      %v1023 = vadd.f32 %v958, %v1022
      %1024 = vmatmul.f32.gmra.mxu0 %v702
      %v1025 = vpop.f32.mrf.mxu0
      %v1026 = vadd.f32 %v961, %v1025
      %1027 = vmatmul.f32.gmra.mxu0 %v705
      %v1028 = vpop.f32.mrf.mxu0
      %v1029 = vadd.f32 %v964, %v1028
      %1030 = vdwg.mxu0
      %1031 = vxpose.xlu0.b32.start [1/16] %v885, 128
      %1032 = vxpose.xlu0.b32.cont [2/16] %v886, 128
      %1033 = vxpose.xlu0.b32.cont [3/16] 0.0, 128
      %1034 = vxpose.xlu0.b32.cont [4/16] 0.0, 128
      %1035 = vxpose.xlu0.b32.cont [5/16] 0.0, 128
      %1036 = vxpose.xlu0.b32.cont [6/16] 0.0, 128
      %1037 = vxpose.xlu0.b32.cont [7/16] 0.0, 128
      %1038 = vxpose.xlu0.b32.cont [8/16] 0.0, 128
      %1039 = vxpose.xlu0.b32.cont [9/16] 0.0, 128
      %1040 = vxpose.xlu0.b32.cont [10/16] 0.0, 128
      %1041 = vxpose.xlu0.b32.cont [11/16] 0.0, 128
      %1042 = vxpose.xlu0.b32.cont [12/16] 0.0, 128
      %1043 = vxpose.xlu0.b32.cont [13/16] 0.0, 128
      %1044 = vxpose.xlu0.b32.cont [14/16] 0.0, 128
      %1045 = vxpose.xlu0.b32.cont [15/16] 0.0, 128
      %1046 = vxpose.xlu0.b32.end [16/16] 0.0, 128
      %v1047 = vpop.trf.xlu0
      %v1048 = vpop.trf.xlu0
      %v1049 = vpop.trf.xlu0
      %v1050 = vpop.trf.xlu0
      %v1051 = vpop.trf.xlu0
      %v1052 = vpop.trf.xlu0
      %v1053 = vpop.trf.xlu0
      %v1054 = vpop.trf.xlu0
      %v1055 = vpop.trf.xlu0
      %v1056 = vpop.trf.xlu0
      %v1057 = vpop.trf.xlu0
      %v1058 = vpop.trf.xlu0
      %v1059 = vpop.trf.xlu0
      %v1060 = vpop.trf.xlu0
      %v1061 = vpop.trf.xlu0
      %v1062 = vpop.trf.xlu0
      %1063 = vxpose.xlu0.b32.start [1/16] %v887, 128
      %1064 = vxpose.xlu0.b32.cont [2/16] %v888, 128
      %1065 = vxpose.xlu0.b32.cont [3/16] 0.0, 128
      %1066 = vxpose.xlu0.b32.cont [4/16] 0.0, 128
      %1067 = vxpose.xlu0.b32.cont [5/16] 0.0, 128
      %1068 = vxpose.xlu0.b32.cont [6/16] 0.0, 128
      %1069 = vxpose.xlu0.b32.cont [7/16] 0.0, 128
      %1070 = vxpose.xlu0.b32.cont [8/16] 0.0, 128
      %1071 = vxpose.xlu0.b32.cont [9/16] 0.0, 128
      %1072 = vxpose.xlu0.b32.cont [10/16] 0.0, 128
      %1073 = vxpose.xlu0.b32.cont [11/16] 0.0, 128
      %1074 = vxpose.xlu0.b32.cont [12/16] 0.0, 128
      %1075 = vxpose.xlu0.b32.cont [13/16] 0.0, 128
      %1076 = vxpose.xlu0.b32.cont [14/16] 0.0, 128
      %1077 = vxpose.xlu0.b32.cont [15/16] 0.0, 128
      %1078 = vxpose.xlu0.b32.end [16/16] 0.0, 128
      %v1079 = vpop.trf.xlu0
      %v1080 = vpop.trf.xlu0
      %v1081 = vpop.trf.xlu0
      %v1082 = vpop.trf.xlu0
      %v1083 = vpop.trf.xlu0
      %v1084 = vpop.trf.xlu0
      %v1085 = vpop.trf.xlu0
      %v1086 = vpop.trf.xlu0
      %v1087 = vpop.trf.xlu0
      %v1088 = vpop.trf.xlu0
      %v1089 = vpop.trf.xlu0
      %v1090 = vpop.trf.xlu0
      %v1091 = vpop.trf.xlu0
      %v1092 = vpop.trf.xlu0
      %v1093 = vpop.trf.xlu0
      %v1094 = vpop.trf.xlu0
      %1095 = vxpose.xlu0.b32.start [1/16] %v889, 128
      %1096 = vxpose.xlu0.b32.cont [2/16] %v890, 128
      %1097 = vxpose.xlu0.b32.cont [3/16] 0.0, 128
      %1098 = vxpose.xlu0.b32.cont [4/16] 0.0, 128
      %1099 = vxpose.xlu0.b32.cont [5/16] 0.0, 128
      %1100 = vxpose.xlu0.b32.cont [6/16] 0.0, 128
      %1101 = vxpose.xlu0.b32.cont [7/16] 0.0, 128
      %1102 = vxpose.xlu0.b32.cont [8/16] 0.0, 128
      %1103 = vxpose.xlu0.b32.cont [9/16] 0.0, 128
      %1104 = vxpose.xlu0.b32.cont [10/16] 0.0, 128
      %1105 = vxpose.xlu0.b32.cont [11/16] 0.0, 128
      %1106 = vxpose.xlu0.b32.cont [12/16] 0.0, 128
      %1107 = vxpose.xlu0.b32.cont [13/16] 0.0, 128
      %1108 = vxpose.xlu0.b32.cont [14/16] 0.0, 128
      %1109 = vxpose.xlu0.b32.cont [15/16] 0.0, 128
      %1110 = vxpose.xlu0.b32.end [16/16] 0.0, 128
      %v1111 = vpop.trf.xlu0
      %v1112 = vpop.trf.xlu0
      %v1113 = vpop.trf.xlu0
      %v1114 = vpop.trf.xlu0
      %v1115 = vpop.trf.xlu0
      %v1116 = vpop.trf.xlu0
      %v1117 = vpop.trf.xlu0
      %v1118 = vpop.trf.xlu0
      %v1119 = vpop.trf.xlu0
      %v1120 = vpop.trf.xlu0
      %v1121 = vpop.trf.xlu0
      %v1122 = vpop.trf.xlu0
      %v1123 = vpop.trf.xlu0
      %v1124 = vpop.trf.xlu0
      %v1125 = vpop.trf.xlu0
      %v1126 = vpop.trf.xlu0
      %1127 = vxpose.xlu0.b32.start [1/16] %v891, 128
      %1128 = vxpose.xlu0.b32.cont [2/16] %v892, 128
      %1129 = vxpose.xlu0.b32.cont [3/16] 0.0, 128
      %1130 = vxpose.xlu0.b32.cont [4/16] 0.0, 128
      %1131 = vxpose.xlu0.b32.cont [5/16] 0.0, 128
      %1132 = vxpose.xlu0.b32.cont [6/16] 0.0, 128
      %1133 = vxpose.xlu0.b32.cont [7/16] 0.0, 128
      %1134 = vxpose.xlu0.b32.cont [8/16] 0.0, 128
      %1135 = vxpose.xlu0.b32.cont [9/16] 0.0, 128
      %1136 = vxpose.xlu0.b32.cont [10/16] 0.0, 128
      %1137 = vxpose.xlu0.b32.cont [11/16] 0.0, 128
      %1138 = vxpose.xlu0.b32.cont [12/16] 0.0, 128
      %1139 = vxpose.xlu0.b32.cont [13/16] 0.0, 128
      %1140 = vxpose.xlu0.b32.cont [14/16] 0.0, 128
      %1141 = vxpose.xlu0.b32.cont [15/16] 0.0, 128
      %1142 = vxpose.xlu0.b32.end [16/16] 0.0, 128
      %v1143 = vpop.trf.xlu0
      %v1144 = vpop.trf.xlu0
      %v1145 = vpop.trf.xlu0
      %v1146 = vpop.trf.xlu0
      %v1147 = vpop.trf.xlu0
      %v1148 = vpop.trf.xlu0
      %v1149 = vpop.trf.xlu0
      %v1150 = vpop.trf.xlu0
      %v1151 = vpop.trf.xlu0
      %v1152 = vpop.trf.xlu0
      %v1153 = vpop.trf.xlu0
      %v1154 = vpop.trf.xlu0
      %v1155 = vpop.trf.xlu0
      %v1156 = vpop.trf.xlu0
      %v1157 = vpop.trf.xlu0
      %v1158 = vpop.trf.xlu0
      %1159 = vxpose.xlu0.b32.start [1/16] %v893, 128
      %1160 = vxpose.xlu0.b32.cont [2/16] %v894, 128
      %1161 = vxpose.xlu0.b32.cont [3/16] 0.0, 128
      %1162 = vxpose.xlu0.b32.cont [4/16] 0.0, 128
      %1163 = vxpose.xlu0.b32.cont [5/16] 0.0, 128
      %1164 = vxpose.xlu0.b32.cont [6/16] 0.0, 128
      %1165 = vxpose.xlu0.b32.cont [7/16] 0.0, 128
      %1166 = vxpose.xlu0.b32.cont [8/16] 0.0, 128
      %1167 = vxpose.xlu0.b32.cont [9/16] 0.0, 128
      %1168 = vxpose.xlu0.b32.cont [10/16] 0.0, 128
      %1169 = vxpose.xlu0.b32.cont [11/16] 0.0, 128
      %1170 = vxpose.xlu0.b32.cont [12/16] 0.0, 128
      %1171 = vxpose.xlu0.b32.cont [13/16] 0.0, 128
      %1172 = vxpose.xlu0.b32.cont [14/16] 0.0, 128
      %1173 = vxpose.xlu0.b32.cont [15/16] 0.0, 128
      %1174 = vxpose.xlu0.b32.end [16/16] 0.0, 128
      %v1175 = vpop.trf.xlu0
      %v1176 = vpop.trf.xlu0
      %v1177 = vpop.trf.xlu0
      %v1178 = vpop.trf.xlu0
      %v1179 = vpop.trf.xlu0
      %v1180 = vpop.trf.xlu0
      %v1181 = vpop.trf.xlu0
      %v1182 = vpop.trf.xlu0
      %v1183 = vpop.trf.xlu0
      %v1184 = vpop.trf.xlu0
      %v1185 = vpop.trf.xlu0
      %v1186 = vpop.trf.xlu0
      %v1187 = vpop.trf.xlu0
      %v1188 = vpop.trf.xlu0
      %v1189 = vpop.trf.xlu0
      %v1190 = vpop.trf.xlu0
      %1191 = vxpose.xlu0.b32.start [1/16] %v895, 128
      %1192 = vxpose.xlu0.b32.cont [2/16] %v896, 128
      %1193 = vxpose.xlu0.b32.cont [3/16] 0.0, 128
      %1194 = vxpose.xlu0.b32.cont [4/16] 0.0, 128
      %1195 = vxpose.xlu0.b32.cont [5/16] 0.0, 128
      %1196 = vxpose.xlu0.b32.cont [6/16] 0.0, 128
      %1197 = vxpose.xlu0.b32.cont [7/16] 0.0, 128
      %1198 = vxpose.xlu0.b32.cont [8/16] 0.0, 128
      %1199 = vxpose.xlu0.b32.cont [9/16] 0.0, 128
      %1200 = vxpose.xlu0.b32.cont [10/16] 0.0, 128
      %1201 = vxpose.xlu0.b32.cont [11/16] 0.0, 128
      %1202 = vxpose.xlu0.b32.cont [12/16] 0.0, 128
      %1203 = vxpose.xlu0.b32.cont [13/16] 0.0, 128
      %1204 = vxpose.xlu0.b32.cont [14/16] 0.0, 128
      %1205 = vxpose.xlu0.b32.cont [15/16] 0.0, 128
      %1206 = vxpose.xlu0.b32.end [16/16] 0.0, 128
      %v1207 = vpop.trf.xlu0
      %v1208 = vpop.trf.xlu0
      %v1209 = vpop.trf.xlu0
      %v1210 = vpop.trf.xlu0
      %v1211 = vpop.trf.xlu0
      %v1212 = vpop.trf.xlu0
      %v1213 = vpop.trf.xlu0
      %v1214 = vpop.trf.xlu0
      %v1215 = vpop.trf.xlu0
      %v1216 = vpop.trf.xlu0
      %v1217 = vpop.trf.xlu0
      %v1218 = vpop.trf.xlu0
      %v1219 = vpop.trf.xlu0
      %v1220 = vpop.trf.xlu0
      %v1221 = vpop.trf.xlu0
      %v1222 = vpop.trf.xlu0
      %1223 = vxpose.xlu0.b32.start [1/16] %v897, 128
      %1224 = vxpose.xlu0.b32.cont [2/16] %v898, 128
      %1225 = vxpose.xlu0.b32.cont [3/16] 0.0, 128
      %1226 = vxpose.xlu0.b32.cont [4/16] 0.0, 128
      %1227 = vxpose.xlu0.b32.cont [5/16] 0.0, 128
      %1228 = vxpose.xlu0.b32.cont [6/16] 0.0, 128
      %1229 = vxpose.xlu0.b32.cont [7/16] 0.0, 128
      %1230 = vxpose.xlu0.b32.cont [8/16] 0.0, 128
      %1231 = vxpose.xlu0.b32.cont [9/16] 0.0, 128
      %1232 = vxpose.xlu0.b32.cont [10/16] 0.0, 128
      %1233 = vxpose.xlu0.b32.cont [11/16] 0.0, 128
      %1234 = vxpose.xlu0.b32.cont [12/16] 0.0, 128
      %1235 = vxpose.xlu0.b32.cont [13/16] 0.0, 128
      %1236 = vxpose.xlu0.b32.cont [14/16] 0.0, 128
      %1237 = vxpose.xlu0.b32.cont [15/16] 0.0, 128
      %1238 = vxpose.xlu0.b32.end [16/16] 0.0, 128
      %v1239 = vpop.trf.xlu0
      %v1240 = vpop.trf.xlu0
      %v1241 = vpop.trf.xlu0
      %v1242 = vpop.trf.xlu0
      %v1243 = vpop.trf.xlu0
      %v1244 = vpop.trf.xlu0
      %v1245 = vpop.trf.xlu0
      %v1246 = vpop.trf.xlu0
      %v1247 = vpop.trf.xlu0
      %v1248 = vpop.trf.xlu0
      %v1249 = vpop.trf.xlu0
      %v1250 = vpop.trf.xlu0
      %v1251 = vpop.trf.xlu0
      %v1252 = vpop.trf.xlu0
      %v1253 = vpop.trf.xlu0
      %v1254 = vpop.trf.xlu0
      %1255 = vxpose.xlu0.b32.start [1/16] %v899, 128
      %1256 = vxpose.xlu0.b32.cont [2/16] %v900, 128
      %1257 = vxpose.xlu0.b32.cont [3/16] 0.0, 128
      %1258 = vxpose.xlu0.b32.cont [4/16] 0.0, 128
      %1259 = vxpose.xlu0.b32.cont [5/16] 0.0, 128
      %1260 = vxpose.xlu0.b32.cont [6/16] 0.0, 128
      %1261 = vxpose.xlu0.b32.cont [7/16] 0.0, 128
      %1262 = vxpose.xlu0.b32.cont [8/16] 0.0, 128
      %1263 = vxpose.xlu0.b32.cont [9/16] 0.0, 128
      %1264 = vxpose.xlu0.b32.cont [10/16] 0.0, 128
      %1265 = vxpose.xlu0.b32.cont [11/16] 0.0, 128
      %1266 = vxpose.xlu0.b32.cont [12/16] 0.0, 128
      %1267 = vxpose.xlu0.b32.cont [13/16] 0.0, 128
      %1268 = vxpose.xlu0.b32.cont [14/16] 0.0, 128
      %1269 = vxpose.xlu0.b32.cont [15/16] 0.0, 128
      %1270 = vxpose.xlu0.b32.end [16/16] 0.0, 128
      %v1271 = vpop.trf.xlu0
      %v1272 = vpop.trf.xlu0
      %v1273 = vpop.trf.xlu0
      %v1274 = vpop.trf.xlu0
      %v1275 = vpop.trf.xlu0
      %v1276 = vpop.trf.xlu0
      %v1277 = vpop.trf.xlu0
      %v1278 = vpop.trf.xlu0
      %v1279 = vpop.trf.xlu0
      %v1280 = vpop.trf.xlu0
      %v1281 = vpop.trf.xlu0
      %v1282 = vpop.trf.xlu0
      %v1283 = vpop.trf.xlu0
      %v1284 = vpop.trf.xlu0
      %v1285 = vpop.trf.xlu0
      %v1286 = vpop.trf.xlu0
      %1287 = vxpose.xlu0.b32.start [1/16] %v984, 128
      %1288 = vxpose.xlu0.b32.cont [2/16] %v987, 128
      %1289 = vxpose.xlu0.b32.cont [3/16] 0.0, 128
      %1290 = vxpose.xlu0.b32.cont [4/16] 0.0, 128
      %1291 = vxpose.xlu0.b32.cont [5/16] 0.0, 128
      %1292 = vxpose.xlu0.b32.cont [6/16] 0.0, 128
      %1293 = vxpose.xlu0.b32.cont [7/16] 0.0, 128
      %1294 = vxpose.xlu0.b32.cont [8/16] 0.0, 128
      %1295 = vxpose.xlu0.b32.cont [9/16] 0.0, 128
      %1296 = vxpose.xlu0.b32.cont [10/16] 0.0, 128
      %1297 = vxpose.xlu0.b32.cont [11/16] 0.0, 128
      %1298 = vxpose.xlu0.b32.cont [12/16] 0.0, 128
      %1299 = vxpose.xlu0.b32.cont [13/16] 0.0, 128
      %1300 = vxpose.xlu0.b32.cont [14/16] 0.0, 128
      %1301 = vxpose.xlu0.b32.cont [15/16] 0.0, 128
      %1302 = vxpose.xlu0.b32.end [16/16] 0.0, 128
      %v1303 = vpop.trf.xlu0
      %v1304 = vpop.trf.xlu0
      %v1305 = vpop.trf.xlu0
      %v1306 = vpop.trf.xlu0
      %v1307 = vpop.trf.xlu0
      %v1308 = vpop.trf.xlu0
      %v1309 = vpop.trf.xlu0
      %v1310 = vpop.trf.xlu0
      %v1311 = vpop.trf.xlu0
      %v1312 = vpop.trf.xlu0
      %v1313 = vpop.trf.xlu0
      %v1314 = vpop.trf.xlu0
      %v1315 = vpop.trf.xlu0
      %v1316 = vpop.trf.xlu0
      %v1317 = vpop.trf.xlu0
      %v1318 = vpop.trf.xlu0
      %1319 = vxpose.xlu0.b32.start [1/16] %v990, 128
      %1320 = vxpose.xlu0.b32.cont [2/16] %v993, 128
      %1321 = vxpose.xlu0.b32.cont [3/16] 0.0, 128
      %1322 = vxpose.xlu0.b32.cont [4/16] 0.0, 128
      %1323 = vxpose.xlu0.b32.cont [5/16] 0.0, 128
      %1324 = vxpose.xlu0.b32.cont [6/16] 0.0, 128
      %1325 = vxpose.xlu0.b32.cont [7/16] 0.0, 128
      %1326 = vxpose.xlu0.b32.cont [8/16] 0.0, 128
      %1327 = vxpose.xlu0.b32.cont [9/16] 0.0, 128
      %1328 = vxpose.xlu0.b32.cont [10/16] 0.0, 128
      %1329 = vxpose.xlu0.b32.cont [11/16] 0.0, 128
      %1330 = vxpose.xlu0.b32.cont [12/16] 0.0, 128
      %1331 = vxpose.xlu0.b32.cont [13/16] 0.0, 128
      %1332 = vxpose.xlu0.b32.cont [14/16] 0.0, 128
      %1333 = vxpose.xlu0.b32.cont [15/16] 0.0, 128
      %1334 = vxpose.xlu0.b32.end [16/16] 0.0, 128
      %v1335 = vpop.trf.xlu0
      %v1336 = vpop.trf.xlu0
      %v1337 = vpop.trf.xlu0
      %v1338 = vpop.trf.xlu0
      %v1339 = vpop.trf.xlu0
      %v1340 = vpop.trf.xlu0
      %v1341 = vpop.trf.xlu0
      %v1342 = vpop.trf.xlu0
      %v1343 = vpop.trf.xlu0
      %v1344 = vpop.trf.xlu0
      %v1345 = vpop.trf.xlu0
      %v1346 = vpop.trf.xlu0
      %v1347 = vpop.trf.xlu0
      %v1348 = vpop.trf.xlu0
      %v1349 = vpop.trf.xlu0
      %v1350 = vpop.trf.xlu0
      %1351 = vxpose.xlu0.b32.start [1/16] %v996, 128
      %1352 = vxpose.xlu0.b32.cont [2/16] %v999, 128
      %1353 = vxpose.xlu0.b32.cont [3/16] 0.0, 128
      %1354 = vxpose.xlu0.b32.cont [4/16] 0.0, 128
      %1355 = vxpose.xlu0.b32.cont [5/16] 0.0, 128
      %1356 = vxpose.xlu0.b32.cont [6/16] 0.0, 128
      %1357 = vxpose.xlu0.b32.cont [7/16] 0.0, 128
      %1358 = vxpose.xlu0.b32.cont [8/16] 0.0, 128
      %1359 = vxpose.xlu0.b32.cont [9/16] 0.0, 128
      %1360 = vxpose.xlu0.b32.cont [10/16] 0.0, 128
      %1361 = vxpose.xlu0.b32.cont [11/16] 0.0, 128
      %1362 = vxpose.xlu0.b32.cont [12/16] 0.0, 128
      %1363 = vxpose.xlu0.b32.cont [13/16] 0.0, 128
      %1364 = vxpose.xlu0.b32.cont [14/16] 0.0, 128
      %1365 = vxpose.xlu0.b32.cont [15/16] 0.0, 128
      %1366 = vxpose.xlu0.b32.end [16/16] 0.0, 128
      %v1367 = vpop.trf.xlu0
      %v1368 = vpop.trf.xlu0
      %v1369 = vpop.trf.xlu0
      %v1370 = vpop.trf.xlu0
      %v1371 = vpop.trf.xlu0
      %v1372 = vpop.trf.xlu0
      %v1373 = vpop.trf.xlu0
      %v1374 = vpop.trf.xlu0
      %v1375 = vpop.trf.xlu0
      %v1376 = vpop.trf.xlu0
      %v1377 = vpop.trf.xlu0
      %v1378 = vpop.trf.xlu0
      %v1379 = vpop.trf.xlu0
      %v1380 = vpop.trf.xlu0
      %v1381 = vpop.trf.xlu0
      %v1382 = vpop.trf.xlu0
      %1383 = vxpose.xlu0.b32.start [1/16] %v1002, 128
      %1384 = vxpose.xlu0.b32.cont [2/16] %v1005, 128
      %1385 = vxpose.xlu0.b32.cont [3/16] 0.0, 128
      %1386 = vxpose.xlu0.b32.cont [4/16] 0.0, 128
      %1387 = vxpose.xlu0.b32.cont [5/16] 0.0, 128
      %1388 = vxpose.xlu0.b32.cont [6/16] 0.0, 128
      %1389 = vxpose.xlu0.b32.cont [7/16] 0.0, 128
      %1390 = vxpose.xlu0.b32.cont [8/16] 0.0, 128
      %1391 = vxpose.xlu0.b32.cont [9/16] 0.0, 128
      %1392 = vxpose.xlu0.b32.cont [10/16] 0.0, 128
      %1393 = vxpose.xlu0.b32.cont [11/16] 0.0, 128
      %1394 = vxpose.xlu0.b32.cont [12/16] 0.0, 128
      %1395 = vxpose.xlu0.b32.cont [13/16] 0.0, 128
      %1396 = vxpose.xlu0.b32.cont [14/16] 0.0, 128
      %1397 = vxpose.xlu0.b32.cont [15/16] 0.0, 128
      %1398 = vxpose.xlu0.b32.end [16/16] 0.0, 128
      %v1399 = vpop.trf.xlu0
      %v1400 = vpop.trf.xlu0
      %v1401 = vpop.trf.xlu0
      %v1402 = vpop.trf.xlu0
      %v1403 = vpop.trf.xlu0
      %v1404 = vpop.trf.xlu0
      %v1405 = vpop.trf.xlu0
      %v1406 = vpop.trf.xlu0
      %v1407 = vpop.trf.xlu0
      %v1408 = vpop.trf.xlu0
      %v1409 = vpop.trf.xlu0
      %v1410 = vpop.trf.xlu0
      %v1411 = vpop.trf.xlu0
      %v1412 = vpop.trf.xlu0
      %v1413 = vpop.trf.xlu0
      %v1414 = vpop.trf.xlu0
      %1415 = vxpose.xlu0.b32.start [1/16] %v1008, 128
      %1416 = vxpose.xlu0.b32.cont [2/16] %v1011, 128
      %1417 = vxpose.xlu0.b32.cont [3/16] 0.0, 128
      %1418 = vxpose.xlu0.b32.cont [4/16] 0.0, 128
      %1419 = vxpose.xlu0.b32.cont [5/16] 0.0, 128
      %1420 = vxpose.xlu0.b32.cont [6/16] 0.0, 128
      %1421 = vxpose.xlu0.b32.cont [7/16] 0.0, 128
      %1422 = vxpose.xlu0.b32.cont [8/16] 0.0, 128
      %1423 = vxpose.xlu0.b32.cont [9/16] 0.0, 128
      %1424 = vxpose.xlu0.b32.cont [10/16] 0.0, 128
      %1425 = vxpose.xlu0.b32.cont [11/16] 0.0, 128
      %1426 = vxpose.xlu0.b32.cont [12/16] 0.0, 128
      %1427 = vxpose.xlu0.b32.cont [13/16] 0.0, 128
      %1428 = vxpose.xlu0.b32.cont [14/16] 0.0, 128
      %1429 = vxpose.xlu0.b32.cont [15/16] 0.0, 128
      %1430 = vxpose.xlu0.b32.end [16/16] 0.0, 128
      %v1431 = vpop.trf.xlu0
      %v1432 = vpop.trf.xlu0
      %v1433 = vpop.trf.xlu0
      %v1434 = vpop.trf.xlu0
      %v1435 = vpop.trf.xlu0
      %v1436 = vpop.trf.xlu0
      %v1437 = vpop.trf.xlu0
      %v1438 = vpop.trf.xlu0
      %v1439 = vpop.trf.xlu0
      %v1440 = vpop.trf.xlu0
      %v1441 = vpop.trf.xlu0
      %v1442 = vpop.trf.xlu0
      %v1443 = vpop.trf.xlu0
      %v1444 = vpop.trf.xlu0
      %v1445 = vpop.trf.xlu0
      %v1446 = vpop.trf.xlu0
      %1447 = vxpose.xlu0.b32.start [1/16] %v1014, 128
      %1448 = vxpose.xlu0.b32.cont [2/16] %v1017, 128
      %1449 = vxpose.xlu0.b32.cont [3/16] 0.0, 128
      %1450 = vxpose.xlu0.b32.cont [4/16] 0.0, 128
      %1451 = vxpose.xlu0.b32.cont [5/16] 0.0, 128
      %1452 = vxpose.xlu0.b32.cont [6/16] 0.0, 128
      %1453 = vxpose.xlu0.b32.cont [7/16] 0.0, 128
      %1454 = vxpose.xlu0.b32.cont [8/16] 0.0, 128
      %1455 = vxpose.xlu0.b32.cont [9/16] 0.0, 128
      %1456 = vxpose.xlu0.b32.cont [10/16] 0.0, 128
      %1457 = vxpose.xlu0.b32.cont [11/16] 0.0, 128
      %1458 = vxpose.xlu0.b32.cont [12/16] 0.0, 128
      %1459 = vxpose.xlu0.b32.cont [13/16] 0.0, 128
      %1460 = vxpose.xlu0.b32.cont [14/16] 0.0, 128
      %1461 = vxpose.xlu0.b32.cont [15/16] 0.0, 128
      %1462 = vxpose.xlu0.b32.end [16/16] 0.0, 128
      %v1463 = vpop.trf.xlu0
      %v1464 = vpop.trf.xlu0
      %v1465 = vpop.trf.xlu0
      %v1466 = vpop.trf.xlu0
      %v1467 = vpop.trf.xlu0
      %v1468 = vpop.trf.xlu0
      %v1469 = vpop.trf.xlu0
      %v1470 = vpop.trf.xlu0
      %v1471 = vpop.trf.xlu0
      %v1472 = vpop.trf.xlu0
      %v1473 = vpop.trf.xlu0
      %v1474 = vpop.trf.xlu0
      %v1475 = vpop.trf.xlu0
      %v1476 = vpop.trf.xlu0
      %v1477 = vpop.trf.xlu0
      %v1478 = vpop.trf.xlu0
      %1479 = vxpose.xlu0.b32.start [1/16] %v1020, 128
      %1480 = vxpose.xlu0.b32.cont [2/16] %v1023, 128
      %1481 = vxpose.xlu0.b32.cont [3/16] 0.0, 128
      %1482 = vxpose.xlu0.b32.cont [4/16] 0.0, 128
      %1483 = vxpose.xlu0.b32.cont [5/16] 0.0, 128
      %1484 = vxpose.xlu0.b32.cont [6/16] 0.0, 128
      %1485 = vxpose.xlu0.b32.cont [7/16] 0.0, 128
      %1486 = vxpose.xlu0.b32.cont [8/16] 0.0, 128
      %1487 = vxpose.xlu0.b32.cont [9/16] 0.0, 128
      %1488 = vxpose.xlu0.b32.cont [10/16] 0.0, 128
      %1489 = vxpose.xlu0.b32.cont [11/16] 0.0, 128
      %1490 = vxpose.xlu0.b32.cont [12/16] 0.0, 128
      %1491 = vxpose.xlu0.b32.cont [13/16] 0.0, 128
      %1492 = vxpose.xlu0.b32.cont [14/16] 0.0, 128
      %1493 = vxpose.xlu0.b32.cont [15/16] 0.0, 128
      %1494 = vxpose.xlu0.b32.end [16/16] 0.0, 128
      %v1495 = vpop.trf.xlu0
      %v1496 = vpop.trf.xlu0
      %v1497 = vpop.trf.xlu0
      %v1498 = vpop.trf.xlu0
      %v1499 = vpop.trf.xlu0
      %v1500 = vpop.trf.xlu0
      %v1501 = vpop.trf.xlu0
      %v1502 = vpop.trf.xlu0
      %v1503 = vpop.trf.xlu0
      %v1504 = vpop.trf.xlu0
      %v1505 = vpop.trf.xlu0
      %v1506 = vpop.trf.xlu0
      %v1507 = vpop.trf.xlu0
      %v1508 = vpop.trf.xlu0
      %v1509 = vpop.trf.xlu0
      %v1510 = vpop.trf.xlu0
      %1511 = vxpose.xlu0.b32.start [1/16] %v1026, 128
      %1512 = vxpose.xlu0.b32.cont [2/16] %v1029, 128
      %1513 = vxpose.xlu0.b32.cont [3/16] 0.0, 128
      %1514 = vxpose.xlu0.b32.cont [4/16] 0.0, 128
      %1515 = vxpose.xlu0.b32.cont [5/16] 0.0, 128
      %1516 = vxpose.xlu0.b32.cont [6/16] 0.0, 128
      %1517 = vxpose.xlu0.b32.cont [7/16] 0.0, 128
      %1518 = vxpose.xlu0.b32.cont [8/16] 0.0, 128
      %1519 = vxpose.xlu0.b32.cont [9/16] 0.0, 128
      %1520 = vxpose.xlu0.b32.cont [10/16] 0.0, 128
      %1521 = vxpose.xlu0.b32.cont [11/16] 0.0, 128
      %1522 = vxpose.xlu0.b32.cont [12/16] 0.0, 128
      %1523 = vxpose.xlu0.b32.cont [13/16] 0.0, 128
      %1524 = vxpose.xlu0.b32.cont [14/16] 0.0, 128
      %1525 = vxpose.xlu0.b32.cont [15/16] 0.0, 128
      %1526 = vxpose.xlu0.b32.end [16/16] 0.0, 128
      %v1527 = vpop.trf.xlu0
      %v1528 = vpop.trf.xlu0
      %v1529 = vpop.trf.xlu0
      %v1530 = vpop.trf.xlu0
      %v1531 = vpop.trf.xlu0
      %v1532 = vpop.trf.xlu0
      %v1533 = vpop.trf.xlu0
      %v1534 = vpop.trf.xlu0
      %v1535 = vpop.trf.xlu0
      %v1536 = vpop.trf.xlu0
      %v1537 = vpop.trf.xlu0
      %v1538 = vpop.trf.xlu0
      %v1539 = vpop.trf.xlu0
      %v1540 = vpop.trf.xlu0
      %v1541 = vpop.trf.xlu0
      %v1542 = vpop.trf.xlu0
      %v1543 = vld [vmem:[%s8] sm:$0xff]
      %v1544 = vld [vmem:[%s8 + $0x8] sm:$0xff]
      %v1545 = vld [vmem:[%s9] sm:$0xff]
      %v1546 = vld [vmem:[%s9 + $0x8] sm:$0xff]
      %v1548 = vsel %vm658, %v1047, 0
      %v1551 = vsel %vm658, %v1048, 0
      %v1554 = vsel %vm658, %v1079, 0
      %v1557 = vsel %vm658, %v1080, 0
      %v1560 = vsel %vm658, %v1111, 0
      %v1563 = vsel %vm658, %v1112, 0
      %v1566 = vsel %vm658, %v1143, 0
      %v1569 = vsel %vm658, %v1144, 0
      %v1572 = vsel %vm658, %v1175, 0
      %v1575 = vsel %vm658, %v1176, 0
      %v1578 = vsel %vm658, %v1207, 0
      %v1581 = vsel %vm658, %v1208, 0
      %v1584 = vsel %vm658, %v1239, 0
      %v1587 = vsel %vm658, %v1240, 0
      %v1590 = vsel %vm658, %v1271, 0
      %v1593 = vsel %vm658, %v1272, 0
      %1595 = vmatpush.msra.mxu0 0.0
      %1596 = vmatpush.msra.mxu0 0.0
      %1597 = vmatpush.msra.mxu0 0.0
      %1598 = vmatpush.msra.mxu0 0.0
      %1599 = vmatpush.msra.mxu0 0.0
      %1600 = vmatpush.msra.mxu0 0.0
      %1601 = vmatpush.msra.mxu0 0.0
      %1602 = vmatpush.msra.mxu0 0.0
      %1603 = vmatpush.msra.mxu0 0.0
      %1604 = vmatpush.msra.mxu0 0.0
      %1605 = vmatpush.msra.mxu0 0.0
      %1606 = vmatpush.msra.mxu0 0.0
      %1607 = vmatpush.msra.mxu0 0.0
      %1608 = vmatpush.msra.mxu0 0.0
      %1609 = vmatpush.msra.mxu0 %v1544
      %1610 = vmatpush.msra.mxu0 %v1543
      %1611 = vmatmul.f32.gmra.mxu0 %v1548
      %v1612 = vpop.f32.mrf.mxu0
      %v1613 = vadd.f32 0.0, %v1612
      %1614 = vmatmul.f32.gmra.mxu0 %v1551
      %v1615 = vpop.f32.mrf.mxu0
      %v1616 = vadd.f32 0.0, %v1615
      %1617 = vmatmul.f32.gmra.mxu0 %v1554
      %v1618 = vpop.f32.mrf.mxu0
      %v1619 = vadd.f32 0.0, %v1618
      %1620 = vmatmul.f32.gmra.mxu0 %v1557
      %v1621 = vpop.f32.mrf.mxu0
      %v1622 = vadd.f32 0.0, %v1621
      %1623 = vmatmul.f32.gmra.mxu0 %v1560
      %v1624 = vpop.f32.mrf.mxu0
      %v1625 = vadd.f32 0.0, %v1624
      %1626 = vmatmul.f32.gmra.mxu0 %v1563
      %v1627 = vpop.f32.mrf.mxu0
      %v1628 = vadd.f32 0.0, %v1627
      %1629 = vmatmul.f32.gmra.mxu0 %v1566
      %v1630 = vpop.f32.mrf.mxu0
      %v1631 = vadd.f32 0.0, %v1630
      %1632 = vmatmul.f32.gmra.mxu0 %v1569
      %v1633 = vpop.f32.mrf.mxu0
      %v1634 = vadd.f32 0.0, %v1633
      %1635 = vmatmul.f32.gmra.mxu0 %v1572
      %v1636 = vpop.f32.mrf.mxu0
      %v1637 = vadd.f32 0.0, %v1636
      %1638 = vmatmul.f32.gmra.mxu0 %v1575
      %v1639 = vpop.f32.mrf.mxu0
      %v1640 = vadd.f32 0.0, %v1639
      %1641 = vmatmul.f32.gmra.mxu0 %v1578
      %v1642 = vpop.f32.mrf.mxu0
      %v1643 = vadd.f32 0.0, %v1642
      %1644 = vmatmul.f32.gmra.mxu0 %v1581
      %v1645 = vpop.f32.mrf.mxu0
      %v1646 = vadd.f32 0.0, %v1645
      %1647 = vmatmul.f32.gmra.mxu0 %v1584
      %v1648 = vpop.f32.mrf.mxu0
      %v1649 = vadd.f32 0.0, %v1648
      %1650 = vmatmul.f32.gmra.mxu0 %v1587
      %v1651 = vpop.f32.mrf.mxu0
      %v1652 = vadd.f32 0.0, %v1651
      %1653 = vmatmul.f32.gmra.mxu0 %v1590
      %v1654 = vpop.f32.mrf.mxu0
      %v1655 = vadd.f32 0.0, %v1654
      %1656 = vmatmul.f32.gmra.mxu0 %v1593
      %v1657 = vpop.f32.mrf.mxu0
      %v1658 = vadd.f32 0.0, %v1657
      %1659 = vdwg.mxu0
      %v1661 = vsel %vm658, %v1303, 0
      %v1664 = vsel %vm658, %v1304, 0
      %v1667 = vsel %vm658, %v1335, 0
      %v1670 = vsel %vm658, %v1336, 0
      %v1673 = vsel %vm658, %v1367, 0
      %v1676 = vsel %vm658, %v1368, 0
      %v1679 = vsel %vm658, %v1399, 0
      %v1682 = vsel %vm658, %v1400, 0
      %v1685 = vsel %vm658, %v1431, 0
      %v1688 = vsel %vm658, %v1432, 0
      %v1691 = vsel %vm658, %v1463, 0
      %v1694 = vsel %vm658, %v1464, 0
      %v1697 = vsel %vm658, %v1495, 0
      %v1700 = vsel %vm658, %v1496, 0
      %v1703 = vsel %vm658, %v1527, 0
      %v1706 = vsel %vm658, %v1528, 0
      %1708 = vmatpush.msra.mxu0 0.0
      %1709 = vmatpush.msra.mxu0 0.0
      %1710 = vmatpush.msra.mxu0 0.0
      %1711 = vmatpush.msra.mxu0 0.0
      %1712 = vmatpush.msra.mxu0 0.0
      %1713 = vmatpush.msra.mxu0 0.0
      %1714 = vmatpush.msra.mxu0 0.0
      %1715 = vmatpush.msra.mxu0 0.0
      %1716 = vmatpush.msra.mxu0 0.0
      %1717 = vmatpush.msra.mxu0 0.0
      %1718 = vmatpush.msra.mxu0 0.0
      %1719 = vmatpush.msra.mxu0 0.0
      %1720 = vmatpush.msra.mxu0 0.0
      %1721 = vmatpush.msra.mxu0 0.0
      %1722 = vmatpush.msra.mxu0 %v1546
      %1723 = vmatpush.msra.mxu0 %v1545
      %1724 = vmatmul.f32.gmra.mxu0 %v1661
      %v1725 = vpop.f32.mrf.mxu0
      %v1726 = vadd.f32 0.0, %v1725
      %1727 = vmatmul.f32.gmra.mxu0 %v1664
      %v1728 = vpop.f32.mrf.mxu0
      %v1729 = vadd.f32 0.0, %v1728
      %1730 = vmatmul.f32.gmra.mxu0 %v1667
      %v1731 = vpop.f32.mrf.mxu0
      %v1732 = vadd.f32 0.0, %v1731
      %1733 = vmatmul.f32.gmra.mxu0 %v1670
      %v1734 = vpop.f32.mrf.mxu0
      %v1735 = vadd.f32 0.0, %v1734
      %1736 = vmatmul.f32.gmra.mxu0 %v1673
      %v1737 = vpop.f32.mrf.mxu0
      %v1738 = vadd.f32 0.0, %v1737
      %1739 = vmatmul.f32.gmra.mxu0 %v1676
      %v1740 = vpop.f32.mrf.mxu0
      %v1741 = vadd.f32 0.0, %v1740
      %1742 = vmatmul.f32.gmra.mxu0 %v1679
      %v1743 = vpop.f32.mrf.mxu0
      %v1744 = vadd.f32 0.0, %v1743
      %1745 = vmatmul.f32.gmra.mxu0 %v1682
      %v1746 = vpop.f32.mrf.mxu0
      %v1747 = vadd.f32 0.0, %v1746
      %1748 = vmatmul.f32.gmra.mxu0 %v1685
      %v1749 = vpop.f32.mrf.mxu0
      %v1750 = vadd.f32 0.0, %v1749
      %1751 = vmatmul.f32.gmra.mxu0 %v1688
      %v1752 = vpop.f32.mrf.mxu0
      %v1753 = vadd.f32 0.0, %v1752
      %1754 = vmatmul.f32.gmra.mxu0 %v1691
      %v1755 = vpop.f32.mrf.mxu0
      %v1756 = vadd.f32 0.0, %v1755
      %1757 = vmatmul.f32.gmra.mxu0 %v1694
      %v1758 = vpop.f32.mrf.mxu0
      %v1759 = vadd.f32 0.0, %v1758
      %1760 = vmatmul.f32.gmra.mxu0 %v1697
      %v1761 = vpop.f32.mrf.mxu0
      %v1762 = vadd.f32 0.0, %v1761
      %1763 = vmatmul.f32.gmra.mxu0 %v1700
      %v1764 = vpop.f32.mrf.mxu0
      %v1765 = vadd.f32 0.0, %v1764
      %1766 = vmatmul.f32.gmra.mxu0 %v1703
      %v1767 = vpop.f32.mrf.mxu0
      %v1768 = vadd.f32 0.0, %v1767
      %1769 = vmatmul.f32.gmra.mxu0 %v1706
      %v1770 = vpop.f32.mrf.mxu0
      %v1771 = vadd.f32 0.0, %v1770
      %1772 = vdwg.mxu0
      %v1773 = vsub.f32 %v1613, %v1726
      %v1774 = vsub.f32 %v1616, %v1729
      %v1775 = vsub.f32 %v1619, %v1732
      %v1776 = vsub.f32 %v1622, %v1735
      %v1777 = vsub.f32 %v1625, %v1738
      %v1778 = vsub.f32 %v1628, %v1741
      %v1779 = vsub.f32 %v1631, %v1744
      %v1780 = vsub.f32 %v1634, %v1747
      %v1781 = vsub.f32 %v1637, %v1750
      %v1782 = vsub.f32 %v1640, %v1753
      %v1783 = vsub.f32 %v1643, %v1756
      %v1784 = vsub.f32 %v1646, %v1759
      %v1785 = vsub.f32 %v1649, %v1762
      %v1786 = vsub.f32 %v1652, %v1765
      %v1787 = vsub.f32 %v1655, %v1768
      %v1788 = vsub.f32 %v1658, %v1771
      %1789 = vmatpush.msra.mxu0 0.0
      %1790 = vmatpush.msra.mxu0 0.0
      %1791 = vmatpush.msra.mxu0 0.0
      %1792 = vmatpush.msra.mxu0 0.0
      %1793 = vmatpush.msra.mxu0 0.0
      %1794 = vmatpush.msra.mxu0 0.0
      %1795 = vmatpush.msra.mxu0 0.0
      %1796 = vmatpush.msra.mxu0 0.0
      %1797 = vmatpush.msra.mxu0 0.0
      %1798 = vmatpush.msra.mxu0 0.0
      %1799 = vmatpush.msra.mxu0 0.0
      %1800 = vmatpush.msra.mxu0 0.0
      %1801 = vmatpush.msra.mxu0 0.0
      %1802 = vmatpush.msra.mxu0 0.0
      %1803 = vmatpush.msra.mxu0 %v1544
      %1804 = vmatpush.msra.mxu0 %v1543
      %1805 = vmatmul.f32.gmra.mxu0 %v1661
      %v1806 = vpop.f32.mrf.mxu0
      %v1807 = vadd.f32 0.0, %v1806
      %1808 = vmatmul.f32.gmra.mxu0 %v1664
      %v1809 = vpop.f32.mrf.mxu0
      %v1810 = vadd.f32 0.0, %v1809
      %1811 = vmatmul.f32.gmra.mxu0 %v1667
      %v1812 = vpop.f32.mrf.mxu0
      %v1813 = vadd.f32 0.0, %v1812
      %1814 = vmatmul.f32.gmra.mxu0 %v1670
      %v1815 = vpop.f32.mrf.mxu0
      %v1816 = vadd.f32 0.0, %v1815
      %1817 = vmatmul.f32.gmra.mxu0 %v1673
      %v1818 = vpop.f32.mrf.mxu0
      %v1819 = vadd.f32 0.0, %v1818
      %1820 = vmatmul.f32.gmra.mxu0 %v1676
      %v1821 = vpop.f32.mrf.mxu0
      %v1822 = vadd.f32 0.0, %v1821
      %1823 = vmatmul.f32.gmra.mxu0 %v1679
      %v1824 = vpop.f32.mrf.mxu0
      %v1825 = vadd.f32 0.0, %v1824
      %1826 = vmatmul.f32.gmra.mxu0 %v1682
      %v1827 = vpop.f32.mrf.mxu0
      %v1828 = vadd.f32 0.0, %v1827
      %1829 = vmatmul.f32.gmra.mxu0 %v1685
      %v1830 = vpop.f32.mrf.mxu0
      %v1831 = vadd.f32 0.0, %v1830
      %1832 = vmatmul.f32.gmra.mxu0 %v1688
      %v1833 = vpop.f32.mrf.mxu0
      %v1834 = vadd.f32 0.0, %v1833
      %1835 = vmatmul.f32.gmra.mxu0 %v1691
      %v1836 = vpop.f32.mrf.mxu0
      %v1837 = vadd.f32 0.0, %v1836
      %1838 = vmatmul.f32.gmra.mxu0 %v1694
      %v1839 = vpop.f32.mrf.mxu0
      %v1840 = vadd.f32 0.0, %v1839
      %1841 = vmatmul.f32.gmra.mxu0 %v1697
      %v1842 = vpop.f32.mrf.mxu0
      %v1843 = vadd.f32 0.0, %v1842
      %1844 = vmatmul.f32.gmra.mxu0 %v1700
      %v1845 = vpop.f32.mrf.mxu0
      %v1846 = vadd.f32 0.0, %v1845
      %1847 = vmatmul.f32.gmra.mxu0 %v1703
      %v1848 = vpop.f32.mrf.mxu0
      %v1849 = vadd.f32 0.0, %v1848
      %1850 = vmatmul.f32.gmra.mxu0 %v1706
      %v1851 = vpop.f32.mrf.mxu0
      %v1852 = vadd.f32 0.0, %v1851
      %1853 = vdwg.mxu0
      %1854 = vmatpush.msra.mxu0 0.0
      %1855 = vmatpush.msra.mxu0 0.0
      %1856 = vmatpush.msra.mxu0 0.0
      %1857 = vmatpush.msra.mxu0 0.0
      %1858 = vmatpush.msra.mxu0 0.0
      %1859 = vmatpush.msra.mxu0 0.0
      %1860 = vmatpush.msra.mxu0 0.0
      %1861 = vmatpush.msra.mxu0 0.0
      %1862 = vmatpush.msra.mxu0 0.0
      %1863 = vmatpush.msra.mxu0 0.0
      %1864 = vmatpush.msra.mxu0 0.0
      %1865 = vmatpush.msra.mxu0 0.0
      %1866 = vmatpush.msra.mxu0 0.0
      %1867 = vmatpush.msra.mxu0 0.0
      %1868 = vmatpush.msra.mxu0 %v1546
      %1869 = vmatpush.msra.mxu0 %v1545
      %1870 = vmatmul.f32.gmra.mxu0 %v1548
      %v1871 = vpop.f32.mrf.mxu0
      %v1872 = vadd.f32 %v1807, %v1871
      %1873 = vmatmul.f32.gmra.mxu0 %v1551
      %v1874 = vpop.f32.mrf.mxu0
      %v1875 = vadd.f32 %v1810, %v1874
      %1876 = vmatmul.f32.gmra.mxu0 %v1554
      %v1877 = vpop.f32.mrf.mxu0
      %v1878 = vadd.f32 %v1813, %v1877
      %1879 = vmatmul.f32.gmra.mxu0 %v1557
      %v1880 = vpop.f32.mrf.mxu0
      %v1881 = vadd.f32 %v1816, %v1880
      %1882 = vmatmul.f32.gmra.mxu0 %v1560
      %v1883 = vpop.f32.mrf.mxu0
      %v1884 = vadd.f32 %v1819, %v1883
      %1885 = vmatmul.f32.gmra.mxu0 %v1563
      %v1886 = vpop.f32.mrf.mxu0
      %v1887 = vadd.f32 %v1822, %v1886
      %1888 = vmatmul.f32.gmra.mxu0 %v1566
      %v1889 = vpop.f32.mrf.mxu0
      %v1890 = vadd.f32 %v1825, %v1889
      %1891 = vmatmul.f32.gmra.mxu0 %v1569
      %v1892 = vpop.f32.mrf.mxu0
      %v1893 = vadd.f32 %v1828, %v1892
      %1894 = vmatmul.f32.gmra.mxu0 %v1572
      %v1895 = vpop.f32.mrf.mxu0
      %v1896 = vadd.f32 %v1831, %v1895
      %1897 = vmatmul.f32.gmra.mxu0 %v1575
      %v1898 = vpop.f32.mrf.mxu0
      %v1899 = vadd.f32 %v1834, %v1898
      %1900 = vmatmul.f32.gmra.mxu0 %v1578
      %v1901 = vpop.f32.mrf.mxu0
      %v1902 = vadd.f32 %v1837, %v1901
      %1903 = vmatmul.f32.gmra.mxu0 %v1581
      %v1904 = vpop.f32.mrf.mxu0
      %v1905 = vadd.f32 %v1840, %v1904
      %1906 = vmatmul.f32.gmra.mxu0 %v1584
      %v1907 = vpop.f32.mrf.mxu0
      %v1908 = vadd.f32 %v1843, %v1907
      %1909 = vmatmul.f32.gmra.mxu0 %v1587
      %v1910 = vpop.f32.mrf.mxu0
      %v1911 = vadd.f32 %v1846, %v1910
      %1912 = vmatmul.f32.gmra.mxu0 %v1590
      %v1913 = vpop.f32.mrf.mxu0
      %v1914 = vadd.f32 %v1849, %v1913
      %1915 = vmatmul.f32.gmra.mxu0 %v1593
      %v1916 = vpop.f32.mrf.mxu0
      %v1917 = vadd.f32 %v1852, %v1916
      %1918 = vdwg.mxu0
      %v1919 = vld [vmem:[%s590] sm:$0xff]
      %v1920 = vld [vmem:[%s590 + $0x8] sm:$0xff]
      %v1921 = vld [vmem:[%s590 + $0x10] sm:$0xff]
      %v1922 = vld [vmem:[%s590 + $0x18] sm:$0xff]
      %v1923 = vld [vmem:[%s590 + $0x20] sm:$0xff]
      %v1924 = vld [vmem:[%s590 + $0x28] sm:$0xff]
      %v1925 = vld [vmem:[%s590 + $0x30] sm:$0xff]
      %v1926 = vld [vmem:[%s590 + $0x38] sm:$0xff]
      %v1927 = vld [vmem:[%s590 + $0x40] sm:$0xff]
      %v1928 = vld [vmem:[%s590 + $0x48] sm:$0xff]
      %v1929 = vld [vmem:[%s590 + $0x50] sm:$0xff]
      %v1930 = vld [vmem:[%s590 + $0x58] sm:$0xff]
      %v1931 = vld [vmem:[%s590 + $0x60] sm:$0xff]
      %v1932 = vld [vmem:[%s590 + $0x68] sm:$0xff]
      %v1933 = vld [vmem:[%s590 + $0x70] sm:$0xff]
      %v1934 = vld [vmem:[%s590 + $0x78] sm:$0xff]
      %v1935 = vld [vmem:[%s596] sm:$0xff]
      %v1936 = vld [vmem:[%s596 + $0x8] sm:$0xff]
      %v1937 = vld [vmem:[%s596 + $0x10] sm:$0xff]
      %v1938 = vld [vmem:[%s596 + $0x18] sm:$0xff]
      %v1939 = vld [vmem:[%s596 + $0x20] sm:$0xff]
      %v1940 = vld [vmem:[%s596 + $0x28] sm:$0xff]
      %v1941 = vld [vmem:[%s596 + $0x30] sm:$0xff]
      %v1942 = vld [vmem:[%s596 + $0x38] sm:$0xff]
      %v1943 = vld [vmem:[%s596 + $0x40] sm:$0xff]
      %v1944 = vld [vmem:[%s596 + $0x48] sm:$0xff]
      %v1945 = vld [vmem:[%s596 + $0x50] sm:$0xff]
      %v1946 = vld [vmem:[%s596 + $0x58] sm:$0xff]
      %v1947 = vld [vmem:[%s596 + $0x60] sm:$0xff]
      %v1948 = vld [vmem:[%s596 + $0x68] sm:$0xff]
      %v1949 = vld [vmem:[%s596 + $0x70] sm:$0xff]
      %v1950 = vld [vmem:[%s596 + $0x78] sm:$0xff]
      %v1951 = vmul.f32 %v1773, %v1919
      %v1952 = vmul.f32 %v1774, %v1920
      %v1953 = vmul.f32 %v1775, %v1921
      %v1954 = vmul.f32 %v1776, %v1922
      %v1955 = vmul.f32 %v1777, %v1923
      %v1956 = vmul.f32 %v1778, %v1924
      %v1957 = vmul.f32 %v1779, %v1925
      %v1958 = vmul.f32 %v1780, %v1926
      %v1959 = vmul.f32 %v1781, %v1927
      %v1960 = vmul.f32 %v1782, %v1928
      %v1961 = vmul.f32 %v1783, %v1929
      %v1962 = vmul.f32 %v1784, %v1930
      %v1963 = vmul.f32 %v1785, %v1931
      %v1964 = vmul.f32 %v1786, %v1932
      %v1965 = vmul.f32 %v1787, %v1933
      %v1966 = vmul.f32 %v1788, %v1934
      %v1967 = vmul.f32 %v1872, %v1935
      %v1968 = vmul.f32 %v1875, %v1936
      %v1969 = vmul.f32 %v1878, %v1937
      %v1970 = vmul.f32 %v1881, %v1938
      %v1971 = vmul.f32 %v1884, %v1939
      %v1972 = vmul.f32 %v1887, %v1940
      %v1973 = vmul.f32 %v1890, %v1941
      %v1974 = vmul.f32 %v1893, %v1942
      %v1975 = vmul.f32 %v1896, %v1943
      %v1976 = vmul.f32 %v1899, %v1944
      %v1977 = vmul.f32 %v1902, %v1945
      %v1978 = vmul.f32 %v1905, %v1946
      %v1979 = vmul.f32 %v1908, %v1947
      %v1980 = vmul.f32 %v1911, %v1948
      %v1981 = vmul.f32 %v1914, %v1949
      %v1982 = vmul.f32 %v1917, %v1950
      %v1983 = vadd.f32 %v1951, %v1967
      %v1984 = vadd.f32 %v1952, %v1968
      %v1985 = vadd.f32 %v1953, %v1969
      %v1986 = vadd.f32 %v1954, %v1970
      %v1987 = vadd.f32 %v1955, %v1971
      %v1988 = vadd.f32 %v1956, %v1972
      %v1989 = vadd.f32 %v1957, %v1973
      %v1990 = vadd.f32 %v1958, %v1974
      %v1991 = vadd.f32 %v1959, %v1975
      %v1992 = vadd.f32 %v1960, %v1976
      %v1993 = vadd.f32 %v1961, %v1977
      %v1994 = vadd.f32 %v1962, %v1978
      %v1995 = vadd.f32 %v1963, %v1979
      %v1996 = vadd.f32 %v1964, %v1980
      %v1997 = vadd.f32 %v1965, %v1981
      %v1998 = vadd.f32 %v1966, %v1982
      %v1999 = vsel %vm658, %v1983, 0.0
      %2000 = vadd.xlane.f32.xlu0 %v1999
      %v2001 = vpop.xlane.xlu0 %2000
      %v2002 = vsel %vm658, %v1984, 0.0
      %2003 = vadd.xlane.f32.xlu0 %v2002
      %v2004 = vpop.xlane.xlu0 %2003
      %v2005 = vsel %vm658, %v1985, 0.0
      %2006 = vadd.xlane.f32.xlu0 %v2005
      %v2007 = vpop.xlane.xlu0 %2006
      %v2008 = vsel %vm658, %v1986, 0.0
      %2009 = vadd.xlane.f32.xlu0 %v2008
      %v2010 = vpop.xlane.xlu0 %2009
      %v2011 = vsel %vm658, %v1987, 0.0
      %2012 = vadd.xlane.f32.xlu0 %v2011
      %v2013 = vpop.xlane.xlu0 %2012
      %v2014 = vsel %vm658, %v1988, 0.0
      %2015 = vadd.xlane.f32.xlu0 %v2014
      %v2016 = vpop.xlane.xlu0 %2015
      %v2017 = vsel %vm658, %v1989, 0.0
      %2018 = vadd.xlane.f32.xlu0 %v2017
      %v2019 = vpop.xlane.xlu0 %2018
      %v2020 = vsel %vm658, %v1990, 0.0
      %2021 = vadd.xlane.f32.xlu0 %v2020
      %v2022 = vpop.xlane.xlu0 %2021
      %v2023 = vsel %vm658, %v1991, 0.0
      %2024 = vadd.xlane.f32.xlu0 %v2023
      %v2025 = vpop.xlane.xlu0 %2024
      %v2026 = vsel %vm658, %v1992, 0.0
      %2027 = vadd.xlane.f32.xlu0 %v2026
      %v2028 = vpop.xlane.xlu0 %2027
      %v2029 = vsel %vm658, %v1993, 0.0
      %2030 = vadd.xlane.f32.xlu0 %v2029
      %v2031 = vpop.xlane.xlu0 %2030
      %v2032 = vsel %vm658, %v1994, 0.0
      %2033 = vadd.xlane.f32.xlu0 %v2032
      %v2034 = vpop.xlane.xlu0 %2033
      %v2035 = vsel %vm658, %v1995, 0.0
      %2036 = vadd.xlane.f32.xlu0 %v2035
      %v2037 = vpop.xlane.xlu0 %2036
      %v2038 = vsel %vm658, %v1996, 0.0
      %2039 = vadd.xlane.f32.xlu0 %v2038
      %v2040 = vpop.xlane.xlu0 %2039
      %v2041 = vsel %vm658, %v1997, 0.0
      %2042 = vadd.xlane.f32.xlu0 %v2041
      %v2043 = vpop.xlane.xlu0 %2042
      %v2044 = vsel %vm658, %v1998, 0.0
      %2045 = vadd.xlane.f32.xlu0 %v2044
      %v2046 = vpop.xlane.xlu0 %2045
      %v2047 = vmul.f32 %v1773, %v1935
      %v2048 = vmul.f32 %v1774, %v1936
      %v2049 = vmul.f32 %v1775, %v1937
      %v2050 = vmul.f32 %v1776, %v1938
      %v2051 = vmul.f32 %v1777, %v1939
      %v2052 = vmul.f32 %v1778, %v1940
      %v2053 = vmul.f32 %v1779, %v1941
      %v2054 = vmul.f32 %v1780, %v1942
      %v2055 = vmul.f32 %v1781, %v1943
      %v2056 = vmul.f32 %v1782, %v1944
      %v2057 = vmul.f32 %v1783, %v1945
      %v2058 = vmul.f32 %v1784, %v1946
      %v2059 = vmul.f32 %v1785, %v1947
      %v2060 = vmul.f32 %v1786, %v1948
      %v2061 = vmul.f32 %v1787, %v1949
      %v2062 = vmul.f32 %v1788, %v1950
      %v2063 = vmul.f32 %v1872, %v1919
      %v2064 = vmul.f32 %v1875, %v1920
      %v2065 = vmul.f32 %v1878, %v1921
      %v2066 = vmul.f32 %v1881, %v1922
      %v2067 = vmul.f32 %v1884, %v1923
      %v2068 = vmul.f32 %v1887, %v1924
      %v2069 = vmul.f32 %v1890, %v1925
      %v2070 = vmul.f32 %v1893, %v1926
      %v2071 = vmul.f32 %v1896, %v1927
      %v2072 = vmul.f32 %v1899, %v1928
      %v2073 = vmul.f32 %v1902, %v1929
      %v2074 = vmul.f32 %v1905, %v1930
      %v2075 = vmul.f32 %v1908, %v1931
      %v2076 = vmul.f32 %v1911, %v1932
      %v2077 = vmul.f32 %v1914, %v1933
      %v2078 = vmul.f32 %v1917, %v1934
      %v2079 = vsub.f32 %v2047, %v2063
      %v2080 = vsub.f32 %v2048, %v2064
      %v2081 = vsub.f32 %v2049, %v2065
      %v2082 = vsub.f32 %v2050, %v2066
      %v2083 = vsub.f32 %v2051, %v2067
      %v2084 = vsub.f32 %v2052, %v2068
      %v2085 = vsub.f32 %v2053, %v2069
      %v2086 = vsub.f32 %v2054, %v2070
      %v2087 = vsub.f32 %v2055, %v2071
      %v2088 = vsub.f32 %v2056, %v2072
      %v2089 = vsub.f32 %v2057, %v2073
      %v2090 = vsub.f32 %v2058, %v2074
      %v2091 = vsub.f32 %v2059, %v2075
      %v2092 = vsub.f32 %v2060, %v2076
      %v2093 = vsub.f32 %v2061, %v2077
      %v2094 = vsub.f32 %v2062, %v2078
      %v2095 = vsel %vm658, %v2079, 0.0
      %2096 = vadd.xlane.f32.xlu0 %v2095
      %v2097 = vpop.xlane.xlu0 %2096
      %v2098 = vsel %vm658, %v2080, 0.0
      %2099 = vadd.xlane.f32.xlu0 %v2098
      %v2100 = vpop.xlane.xlu0 %2099
      %v2101 = vsel %vm658, %v2081, 0.0
      %2102 = vadd.xlane.f32.xlu0 %v2101
      %v2103 = vpop.xlane.xlu0 %2102
      %v2104 = vsel %vm658, %v2082, 0.0
      %2105 = vadd.xlane.f32.xlu0 %v2104
      %v2106 = vpop.xlane.xlu0 %2105
      %v2107 = vsel %vm658, %v2083, 0.0
      %2108 = vadd.xlane.f32.xlu0 %v2107
      %v2109 = vpop.xlane.xlu0 %2108
      %v2110 = vsel %vm658, %v2084, 0.0
      %2111 = vadd.xlane.f32.xlu0 %v2110
      %v2112 = vpop.xlane.xlu0 %2111
      %v2113 = vsel %vm658, %v2085, 0.0
      %2114 = vadd.xlane.f32.xlu0 %v2113
      %v2115 = vpop.xlane.xlu0 %2114
      %v2116 = vsel %vm658, %v2086, 0.0
      %2117 = vadd.xlane.f32.xlu0 %v2116
      %v2118 = vpop.xlane.xlu0 %2117
      %v2119 = vsel %vm658, %v2087, 0.0
      %2120 = vadd.xlane.f32.xlu0 %v2119
      %v2121 = vpop.xlane.xlu0 %2120
      %v2122 = vsel %vm658, %v2088, 0.0
      %2123 = vadd.xlane.f32.xlu0 %v2122
      %v2124 = vpop.xlane.xlu0 %2123
      %v2125 = vsel %vm658, %v2089, 0.0
      %2126 = vadd.xlane.f32.xlu0 %v2125
      %v2127 = vpop.xlane.xlu0 %2126
      %v2128 = vsel %vm658, %v2090, 0.0
      %2129 = vadd.xlane.f32.xlu0 %v2128
      %v2130 = vpop.xlane.xlu0 %2129
      %v2131 = vsel %vm658, %v2091, 0.0
      %2132 = vadd.xlane.f32.xlu0 %v2131
      %v2133 = vpop.xlane.xlu0 %2132
      %v2134 = vsel %vm658, %v2092, 0.0
      %2135 = vadd.xlane.f32.xlu0 %v2134
      %v2136 = vpop.xlane.xlu0 %2135
      %v2137 = vsel %vm658, %v2093, 0.0
      %2138 = vadd.xlane.f32.xlu0 %v2137
      %v2139 = vpop.xlane.xlu0 %2138
      %v2140 = vsel %vm658, %v2094, 0.0
      %2141 = vadd.xlane.f32.xlu0 %v2140
      %v2142 = vpop.xlane.xlu0 %2141
      %v2143 = vmul.f32 %v2001, %v2001
      %v2144 = vmul.f32 %v2004, %v2004
      %v2145 = vmul.f32 %v2007, %v2007
      %v2146 = vmul.f32 %v2010, %v2010
      %v2147 = vmul.f32 %v2013, %v2013
      %v2148 = vmul.f32 %v2016, %v2016
      %v2149 = vmul.f32 %v2019, %v2019
      %v2150 = vmul.f32 %v2022, %v2022
      %v2151 = vmul.f32 %v2025, %v2025
      %v2152 = vmul.f32 %v2028, %v2028
      %v2153 = vmul.f32 %v2031, %v2031
      %v2154 = vmul.f32 %v2034, %v2034
      %v2155 = vmul.f32 %v2037, %v2037
      %v2156 = vmul.f32 %v2040, %v2040
      %v2157 = vmul.f32 %v2043, %v2043
      %v2158 = vmul.f32 %v2046, %v2046
      %v2159 = vmul.f32 %v2097, %v2097
      %v2160 = vmul.f32 %v2100, %v2100
      %v2161 = vmul.f32 %v2103, %v2103
      %v2162 = vmul.f32 %v2106, %v2106
      %v2163 = vmul.f32 %v2109, %v2109
      %v2164 = vmul.f32 %v2112, %v2112
      %v2165 = vmul.f32 %v2115, %v2115
      %v2166 = vmul.f32 %v2118, %v2118
      %v2167 = vmul.f32 %v2121, %v2121
      %v2168 = vmul.f32 %v2124, %v2124
      %v2169 = vmul.f32 %v2127, %v2127
      %v2170 = vmul.f32 %v2130, %v2130
      %v2171 = vmul.f32 %v2133, %v2133
      %v2172 = vmul.f32 %v2136, %v2136
      %v2173 = vmul.f32 %v2139, %v2139
      %v2174 = vmul.f32 %v2142, %v2142
      %v2175 = vadd.f32 %v2143, %v2159
      %v2176 = vadd.f32 %v2144, %v2160
      %v2177 = vadd.f32 %v2145, %v2161
      %v2178 = vadd.f32 %v2146, %v2162
      %v2179 = vadd.f32 %v2147, %v2163
      %v2180 = vadd.f32 %v2148, %v2164
      %v2181 = vadd.f32 %v2149, %v2165
      %v2182 = vadd.f32 %v2150, %v2166
      %v2183 = vadd.f32 %v2151, %v2167
      %v2184 = vadd.f32 %v2152, %v2168
      %v2185 = vadd.f32 %v2153, %v2169
      %v2186 = vadd.f32 %v2154, %v2170
      %v2187 = vadd.f32 %v2155, %v2171
      %v2188 = vadd.f32 %v2156, %v2172
      %v2189 = vadd.f32 %v2157, %v2173
      %v2190 = vadd.f32 %v2158, %v2174
      %vm2191 = vcmp.gt.f32.partialorder %v2175, 0.0
      %vm2192 = vcmp.gt.f32.partialorder %v2176, 0.0
      %vm2193 = vcmp.gt.f32.partialorder %v2177, 0.0
      %vm2194 = vcmp.gt.f32.partialorder %v2178, 0.0
      %vm2195 = vcmp.gt.f32.partialorder %v2179, 0.0
      %vm2196 = vcmp.gt.f32.partialorder %v2180, 0.0
      %vm2197 = vcmp.gt.f32.partialorder %v2181, 0.0
      %vm2198 = vcmp.gt.f32.partialorder %v2182, 0.0
      %vm2199 = vcmp.gt.f32.partialorder %v2183, 0.0
      %vm2200 = vcmp.gt.f32.partialorder %v2184, 0.0
      %vm2201 = vcmp.gt.f32.partialorder %v2185, 0.0
      %vm2202 = vcmp.gt.f32.partialorder %v2186, 0.0
      %vm2203 = vcmp.gt.f32.partialorder %v2187, 0.0
      %vm2204 = vcmp.gt.f32.partialorder %v2188, 0.0
      %vm2205 = vcmp.gt.f32.partialorder %v2189, 0.0
      %vm2206 = vcmp.gt.f32.partialorder %v2190, 0.0
      %v2207 = vsel %vm2191, %v2175, 1.0
      %v2208 = vsel %vm2192, %v2176, 1.0
      %v2209 = vsel %vm2193, %v2177, 1.0
      %v2210 = vsel %vm2194, %v2178, 1.0
      %v2211 = vsel %vm2195, %v2179, 1.0
      %v2212 = vsel %vm2196, %v2180, 1.0
      %v2213 = vsel %vm2197, %v2181, 1.0
      %v2214 = vsel %vm2198, %v2182, 1.0
      %v2215 = vsel %vm2199, %v2183, 1.0
      %v2216 = vsel %vm2200, %v2184, 1.0
      %v2217 = vsel %vm2201, %v2185, 1.0
      %v2218 = vsel %vm2202, %v2186, 1.0
      %v2219 = vsel %vm2203, %v2187, 1.0
      %v2220 = vsel %vm2204, %v2188, 1.0
      %v2221 = vsel %vm2205, %v2189, 1.0
      %v2222 = vsel %vm2206, %v2190, 1.0
      %v2223 = vrsqrt.pop %v2207
      %v2224 = vmul.f32 %v2223, %v2207
      %v2225 = vmul.f32 %v2224, %v2223
      %v2226 = vmul.f32 0.5, %v2225
      %v2227 = vsub.f32 1.5, %v2226
      %v2228 = vmul.f32 %v2223, %v2227
      %vm2229 = vweird.f32 %v2207
      %vm2230 = vweird.f32 %v2223
      %vm2231 = vmor %vm2229, %vm2230
      %v2232 = vsel %vm2231, %v2223, %v2228
      %v2233 = vrsqrt.pop %v2208
      %v2234 = vmul.f32 %v2233, %v2208
      %v2235 = vmul.f32 %v2234, %v2233
      %v2236 = vmul.f32 0.5, %v2235
      %v2237 = vsub.f32 1.5, %v2236
      %v2238 = vmul.f32 %v2233, %v2237
      %vm2239 = vweird.f32 %v2208
      %vm2240 = vweird.f32 %v2233
      %vm2241 = vmor %vm2239, %vm2240
      %v2242 = vsel %vm2241, %v2233, %v2238
      %v2243 = vrsqrt.pop %v2209
      %v2244 = vmul.f32 %v2243, %v2209
      %v2245 = vmul.f32 %v2244, %v2243
      %v2246 = vmul.f32 0.5, %v2245
      %v2247 = vsub.f32 1.5, %v2246
      %v2248 = vmul.f32 %v2243, %v2247
      %vm2249 = vweird.f32 %v2209
      %vm2250 = vweird.f32 %v2243
      %vm2251 = vmor %vm2249, %vm2250
      %v2252 = vsel %vm2251, %v2243, %v2248
      %v2253 = vrsqrt.pop %v2210
      %v2254 = vmul.f32 %v2253, %v2210
      %v2255 = vmul.f32 %v2254, %v2253
      %v2256 = vmul.f32 0.5, %v2255
      %v2257 = vsub.f32 1.5, %v2256
      %v2258 = vmul.f32 %v2253, %v2257
      %vm2259 = vweird.f32 %v2210
      %vm2260 = vweird.f32 %v2253
      %vm2261 = vmor %vm2259, %vm2260
      %v2262 = vsel %vm2261, %v2253, %v2258
      %v2263 = vrsqrt.pop %v2211
      %v2264 = vmul.f32 %v2263, %v2211
      %v2265 = vmul.f32 %v2264, %v2263
      %v2266 = vmul.f32 0.5, %v2265
      %v2267 = vsub.f32 1.5, %v2266
      %v2268 = vmul.f32 %v2263, %v2267
      %vm2269 = vweird.f32 %v2211
      %vm2270 = vweird.f32 %v2263
      %vm2271 = vmor %vm2269, %vm2270
      %v2272 = vsel %vm2271, %v2263, %v2268
      %v2273 = vrsqrt.pop %v2212
      %v2274 = vmul.f32 %v2273, %v2212
      %v2275 = vmul.f32 %v2274, %v2273
      %v2276 = vmul.f32 0.5, %v2275
      %v2277 = vsub.f32 1.5, %v2276
      %v2278 = vmul.f32 %v2273, %v2277
      %vm2279 = vweird.f32 %v2212
      %vm2280 = vweird.f32 %v2273
      %vm2281 = vmor %vm2279, %vm2280
      %v2282 = vsel %vm2281, %v2273, %v2278
      %v2283 = vrsqrt.pop %v2213
      %v2284 = vmul.f32 %v2283, %v2213
      %v2285 = vmul.f32 %v2284, %v2283
      %v2286 = vmul.f32 0.5, %v2285
      %v2287 = vsub.f32 1.5, %v2286
      %v2288 = vmul.f32 %v2283, %v2287
      %vm2289 = vweird.f32 %v2213
      %vm2290 = vweird.f32 %v2283
      %vm2291 = vmor %vm2289, %vm2290
      %v2292 = vsel %vm2291, %v2283, %v2288
      %v2293 = vrsqrt.pop %v2214
      %v2294 = vmul.f32 %v2293, %v2214
      %v2295 = vmul.f32 %v2294, %v2293
      %v2296 = vmul.f32 0.5, %v2295
      %v2297 = vsub.f32 1.5, %v2296
      %v2298 = vmul.f32 %v2293, %v2297
      %vm2299 = vweird.f32 %v2214
      %vm2300 = vweird.f32 %v2293
      %vm2301 = vmor %vm2299, %vm2300
      %v2302 = vsel %vm2301, %v2293, %v2298
      %v2303 = vrsqrt.pop %v2215
      %v2304 = vmul.f32 %v2303, %v2215
      %v2305 = vmul.f32 %v2304, %v2303
      %v2306 = vmul.f32 0.5, %v2305
      %v2307 = vsub.f32 1.5, %v2306
      %v2308 = vmul.f32 %v2303, %v2307
      %vm2309 = vweird.f32 %v2215
      %vm2310 = vweird.f32 %v2303
      %vm2311 = vmor %vm2309, %vm2310
      %v2312 = vsel %vm2311, %v2303, %v2308
      %v2313 = vrsqrt.pop %v2216
      %v2314 = vmul.f32 %v2313, %v2216
      %v2315 = vmul.f32 %v2314, %v2313
      %v2316 = vmul.f32 0.5, %v2315
      %v2317 = vsub.f32 1.5, %v2316
      %v2318 = vmul.f32 %v2313, %v2317
      %vm2319 = vweird.f32 %v2216
      %vm2320 = vweird.f32 %v2313
      %vm2321 = vmor %vm2319, %vm2320
      %v2322 = vsel %vm2321, %v2313, %v2318
      %v2323 = vrsqrt.pop %v2217
      %v2324 = vmul.f32 %v2323, %v2217
      %v2325 = vmul.f32 %v2324, %v2323
      %v2326 = vmul.f32 0.5, %v2325
      %v2327 = vsub.f32 1.5, %v2326
      %v2328 = vmul.f32 %v2323, %v2327
      %vm2329 = vweird.f32 %v2217
      %vm2330 = vweird.f32 %v2323
      %vm2331 = vmor %vm2329, %vm2330
      %v2332 = vsel %vm2331, %v2323, %v2328
      %v2333 = vrsqrt.pop %v2218
      %v2334 = vmul.f32 %v2333, %v2218
      %v2335 = vmul.f32 %v2334, %v2333
      %v2336 = vmul.f32 0.5, %v2335
      %v2337 = vsub.f32 1.5, %v2336
      %v2338 = vmul.f32 %v2333, %v2337
      %vm2339 = vweird.f32 %v2218
      %vm2340 = vweird.f32 %v2333
      %vm2341 = vmor %vm2339, %vm2340
      %v2342 = vsel %vm2341, %v2333, %v2338
      %v2343 = vrsqrt.pop %v2219
      %v2344 = vmul.f32 %v2343, %v2219
      %v2345 = vmul.f32 %v2344, %v2343
      %v2346 = vmul.f32 0.5, %v2345
      %v2347 = vsub.f32 1.5, %v2346
      %v2348 = vmul.f32 %v2343, %v2347
      %vm2349 = vweird.f32 %v2219
      %vm2350 = vweird.f32 %v2343
      %vm2351 = vmor %vm2349, %vm2350
      %v2352 = vsel %vm2351, %v2343, %v2348
      %v2353 = vrsqrt.pop %v2220
      %v2354 = vmul.f32 %v2353, %v2220
      %v2355 = vmul.f32 %v2354, %v2353
      %v2356 = vmul.f32 0.5, %v2355
      %v2357 = vsub.f32 1.5, %v2356
      %v2358 = vmul.f32 %v2353, %v2357
      %vm2359 = vweird.f32 %v2220
      %vm2360 = vweird.f32 %v2353
      %vm2361 = vmor %vm2359, %vm2360
      %v2362 = vsel %vm2361, %v2353, %v2358
      %v2363 = vrsqrt.pop %v2221
      %v2364 = vmul.f32 %v2363, %v2221
      %v2365 = vmul.f32 %v2364, %v2363
      %v2366 = vmul.f32 0.5, %v2365
      %v2367 = vsub.f32 1.5, %v2366
      %v2368 = vmul.f32 %v2363, %v2367
      %vm2369 = vweird.f32 %v2221
      %vm2370 = vweird.f32 %v2363
      %vm2371 = vmor %vm2369, %vm2370
      %v2372 = vsel %vm2371, %v2363, %v2368
      %v2373 = vrsqrt.pop %v2222
      %v2374 = vmul.f32 %v2373, %v2222
      %v2375 = vmul.f32 %v2374, %v2373
      %v2376 = vmul.f32 0.5, %v2375
      %v2377 = vsub.f32 1.5, %v2376
      %v2378 = vmul.f32 %v2373, %v2377
      %vm2379 = vweird.f32 %v2222
      %vm2380 = vweird.f32 %v2373
      %vm2381 = vmor %vm2379, %vm2380
      %v2382 = vsel %vm2381, %v2373, %v2378
      %v2383 = vmul.f32 %v2097, %v2232
      %v2384 = vmul.f32 %v2100, %v2242
      %v2385 = vmul.f32 %v2103, %v2252
      %v2386 = vmul.f32 %v2106, %v2262
      %v2387 = vmul.f32 %v2109, %v2272
      %v2388 = vmul.f32 %v2112, %v2282
      %v2389 = vmul.f32 %v2115, %v2292
      %v2390 = vmul.f32 %v2118, %v2302
      %v2391 = vmul.f32 %v2121, %v2312
      %v2392 = vmul.f32 %v2124, %v2322
      %v2393 = vmul.f32 %v2127, %v2332
      %v2394 = vmul.f32 %v2130, %v2342
      %v2395 = vmul.f32 %v2133, %v2352
      %v2396 = vmul.f32 %v2136, %v2362
      %v2397 = vmul.f32 %v2139, %v2372
      %v2398 = vmul.f32 %v2142, %v2382
      %v2399 = vsel %vm2191, %v2383, 1.0
      %v2400 = vsel %vm2192, %v2384, 1.0
      %v2401 = vsel %vm2193, %v2385, 1.0
      %v2402 = vsel %vm2194, %v2386, 1.0
      %v2403 = vsel %vm2195, %v2387, 1.0
      %v2404 = vsel %vm2196, %v2388, 1.0
      %v2405 = vsel %vm2197, %v2389, 1.0
      %v2406 = vsel %vm2198, %v2390, 1.0
      %v2407 = vsel %vm2199, %v2391, 1.0
      %v2408 = vsel %vm2200, %v2392, 1.0
      %v2409 = vsel %vm2201, %v2393, 1.0
      %v2410 = vsel %vm2202, %v2394, 1.0
      %v2411 = vsel %vm2203, %v2395, 1.0
      %v2412 = vsel %vm2204, %v2396, 1.0
      %v2413 = vsel %vm2205, %v2397, 1.0
      %v2414 = vsel %vm2206, %v2398, 1.0
      %v2415 = vmul.f32 %v2001, %v2232
      %v2416 = vmul.f32 %v2004, %v2242
      %v2417 = vmul.f32 %v2007, %v2252
      %v2418 = vmul.f32 %v2010, %v2262
      %v2419 = vmul.f32 %v2013, %v2272
      %v2420 = vmul.f32 %v2016, %v2282
      %v2421 = vmul.f32 %v2019, %v2292
      %v2422 = vmul.f32 %v2022, %v2302
      %v2423 = vmul.f32 %v2025, %v2312
      %v2424 = vmul.f32 %v2028, %v2322
      %v2425 = vmul.f32 %v2031, %v2332
      %v2426 = vmul.f32 %v2034, %v2342
      %v2427 = vmul.f32 %v2037, %v2352
      %v2428 = vmul.f32 %v2040, %v2362
      %v2429 = vmul.f32 %v2043, %v2372
      %v2430 = vmul.f32 %v2046, %v2382
      %v2431 = vsel %vm2191, %v2415, 0.0
      %v2432 = vsel %vm2192, %v2416, 0.0
      %v2433 = vsel %vm2193, %v2417, 0.0
      %v2434 = vsel %vm2194, %v2418, 0.0
      %v2435 = vsel %vm2195, %v2419, 0.0
      %v2436 = vsel %vm2196, %v2420, 0.0
      %v2437 = vsel %vm2197, %v2421, 0.0
      %v2438 = vsel %vm2198, %v2422, 0.0
      %v2439 = vsel %vm2199, %v2423, 0.0
      %v2440 = vsel %vm2200, %v2424, 0.0
      %v2441 = vsel %vm2201, %v2425, 0.0
      %v2442 = vsel %vm2202, %v2426, 0.0
      %v2443 = vsel %vm2203, %v2427, 0.0
      %v2444 = vsel %vm2204, %v2428, 0.0
      %v2445 = vsel %vm2205, %v2429, 0.0
      %v2446 = vsel %vm2206, %v2430, 0.0
      %v2447 = vmul.f32 %v1919, %v2399
      %v2448 = vmul.f32 %v1920, %v2400
      %v2449 = vmul.f32 %v1921, %v2401
      %v2450 = vmul.f32 %v1922, %v2402
      %v2451 = vmul.f32 %v1923, %v2403
      %v2452 = vmul.f32 %v1924, %v2404
      %v2453 = vmul.f32 %v1925, %v2405
      %v2454 = vmul.f32 %v1926, %v2406
      %v2455 = vmul.f32 %v1927, %v2407
      %v2456 = vmul.f32 %v1928, %v2408
      %v2457 = vmul.f32 %v1929, %v2409
      %v2458 = vmul.f32 %v1930, %v2410
      %v2459 = vmul.f32 %v1931, %v2411
      %v2460 = vmul.f32 %v1932, %v2412
      %v2461 = vmul.f32 %v1933, %v2413
      %v2462 = vmul.f32 %v1934, %v2414
      %v2463 = vmul.f32 %v1935, %v2431
      %v2464 = vmul.f32 %v1936, %v2432
      %v2465 = vmul.f32 %v1937, %v2433
      %v2466 = vmul.f32 %v1938, %v2434
      %v2467 = vmul.f32 %v1939, %v2435
      %v2468 = vmul.f32 %v1940, %v2436
      %v2469 = vmul.f32 %v1941, %v2437
      %v2470 = vmul.f32 %v1942, %v2438
      %v2471 = vmul.f32 %v1943, %v2439
      %v2472 = vmul.f32 %v1944, %v2440
      %v2473 = vmul.f32 %v1945, %v2441
      %v2474 = vmul.f32 %v1946, %v2442
      %v2475 = vmul.f32 %v1947, %v2443
      %v2476 = vmul.f32 %v1948, %v2444
      %v2477 = vmul.f32 %v1949, %v2445
      %v2478 = vmul.f32 %v1950, %v2446
      %v2479 = vsub.f32 %v2447, %v2463
      %v2480 = vsub.f32 %v2448, %v2464
      %v2481 = vsub.f32 %v2449, %v2465
      %v2482 = vsub.f32 %v2450, %v2466
      %v2483 = vsub.f32 %v2451, %v2467
      %v2484 = vsub.f32 %v2452, %v2468
      %v2485 = vsub.f32 %v2453, %v2469
      %v2486 = vsub.f32 %v2454, %v2470
      %v2487 = vsub.f32 %v2455, %v2471
      %v2488 = vsub.f32 %v2456, %v2472
      %v2489 = vsub.f32 %v2457, %v2473
      %v2490 = vsub.f32 %v2458, %v2474
      %v2491 = vsub.f32 %v2459, %v2475
      %v2492 = vsub.f32 %v2460, %v2476
      %v2493 = vsub.f32 %v2461, %v2477
      %v2494 = vsub.f32 %v2462, %v2478
      %v2495 = vmul.f32 %v1919, %v2431
      %v2496 = vmul.f32 %v1920, %v2432
      %v2497 = vmul.f32 %v1921, %v2433
      %v2498 = vmul.f32 %v1922, %v2434
      %v2499 = vmul.f32 %v1923, %v2435
      %v2500 = vmul.f32 %v1924, %v2436
      %v2501 = vmul.f32 %v1925, %v2437
      %v2502 = vmul.f32 %v1926, %v2438
      %v2503 = vmul.f32 %v1927, %v2439
      %v2504 = vmul.f32 %v1928, %v2440
      %v2505 = vmul.f32 %v1929, %v2441
      %v2506 = vmul.f32 %v1930, %v2442
      %v2507 = vmul.f32 %v1931, %v2443
      %v2508 = vmul.f32 %v1932, %v2444
      %v2509 = vmul.f32 %v1933, %v2445
      %v2510 = vmul.f32 %v1934, %v2446
      %v2511 = vmul.f32 %v1935, %v2399
      %v2512 = vmul.f32 %v1936, %v2400
      %v2513 = vmul.f32 %v1937, %v2401
      %v2514 = vmul.f32 %v1938, %v2402
      %v2515 = vmul.f32 %v1939, %v2403
      %v2516 = vmul.f32 %v1940, %v2404
      %v2517 = vmul.f32 %v1941, %v2405
      %v2518 = vmul.f32 %v1942, %v2406
      %v2519 = vmul.f32 %v1943, %v2407
      %v2520 = vmul.f32 %v1944, %v2408
      %v2521 = vmul.f32 %v1945, %v2409
      %v2522 = vmul.f32 %v1946, %v2410
      %v2523 = vmul.f32 %v1947, %v2411
      %v2524 = vmul.f32 %v1948, %v2412
      %v2525 = vmul.f32 %v1949, %v2413
      %v2526 = vmul.f32 %v1950, %v2414
      %v2527 = vadd.f32 %v2495, %v2511
      %v2528 = vadd.f32 %v2496, %v2512
      %v2529 = vadd.f32 %v2497, %v2513
      %v2530 = vadd.f32 %v2498, %v2514
      %v2531 = vadd.f32 %v2499, %v2515
      %v2532 = vadd.f32 %v2500, %v2516
      %v2533 = vadd.f32 %v2501, %v2517
      %v2534 = vadd.f32 %v2502, %v2518
      %v2535 = vadd.f32 %v2503, %v2519
      %v2536 = vadd.f32 %v2504, %v2520
      %v2537 = vadd.f32 %v2505, %v2521
      %v2538 = vadd.f32 %v2506, %v2522
      %v2539 = vadd.f32 %v2507, %v2523
      %v2540 = vadd.f32 %v2508, %v2524
      %v2541 = vadd.f32 %v2509, %v2525
      %v2542 = vadd.f32 %v2510, %v2526
      %v2543 = vld [vmem:[%s10] sm:$0xff]
      %v2544 = vld [vmem:[%s10 + $0x8] sm:$0xff]
      %v2545 = vld [vmem:[%s11] sm:$0xff]
      %v2546 = vld [vmem:[%s11 + $0x8] sm:$0xff]
      %v2548 = vsel %vm658, %v2479, 0
      %v2551 = vsel %vm658, %v2480, 0
      %v2554 = vsel %vm658, %v2481, 0
      %v2557 = vsel %vm658, %v2482, 0
      %v2560 = vsel %vm658, %v2483, 0
      %v2563 = vsel %vm658, %v2484, 0
      %v2566 = vsel %vm658, %v2485, 0
      %v2569 = vsel %vm658, %v2486, 0
      %v2572 = vsel %vm658, %v2487, 0
      %v2575 = vsel %vm658, %v2488, 0
      %v2578 = vsel %vm658, %v2489, 0
      %v2581 = vsel %vm658, %v2490, 0
      %v2584 = vsel %vm658, %v2491, 0
      %v2587 = vsel %vm658, %v2492, 0
      %v2590 = vsel %vm658, %v2493, 0
      %v2593 = vsel %vm658, %v2494, 0
      %2595 = vmatpush.msra.mxu0 0.0
      %2596 = vmatpush.msra.mxu0 0.0
      %2597 = vmatpush.msra.mxu0 0.0
      %2598 = vmatpush.msra.mxu0 0.0
      %2599 = vmatpush.msra.mxu0 0.0
      %2600 = vmatpush.msra.mxu0 0.0
      %2601 = vmatpush.msra.mxu0 0.0
      %2602 = vmatpush.msra.mxu0 0.0
      %2603 = vmatpush.msra.mxu0 0.0
      %2604 = vmatpush.msra.mxu0 0.0
      %2605 = vmatpush.msra.mxu0 0.0
      %2606 = vmatpush.msra.mxu0 0.0
      %2607 = vmatpush.msra.mxu0 0.0
      %2608 = vmatpush.msra.mxu0 0.0
      %2609 = vmatpush.msra.mxu0 %v2544
      %2610 = vmatpush.msra.mxu0 %v2543
      %2611 = vmatmul.f32.gmra.mxu0 %v2548
      %v2612 = vpop.f32.mrf.mxu0
      %v2613 = vadd.f32 0.0, %v2612
      %2614 = vmatmul.f32.gmra.mxu0 %v2551
      %v2615 = vpop.f32.mrf.mxu0
      %v2616 = vadd.f32 0.0, %v2615
      %2617 = vmatmul.f32.gmra.mxu0 %v2554
      %v2618 = vpop.f32.mrf.mxu0
      %v2619 = vadd.f32 0.0, %v2618
      %2620 = vmatmul.f32.gmra.mxu0 %v2557
      %v2621 = vpop.f32.mrf.mxu0
      %v2622 = vadd.f32 0.0, %v2621
      %2623 = vmatmul.f32.gmra.mxu0 %v2560
      %v2624 = vpop.f32.mrf.mxu0
      %v2625 = vadd.f32 0.0, %v2624
      %2626 = vmatmul.f32.gmra.mxu0 %v2563
      %v2627 = vpop.f32.mrf.mxu0
      %v2628 = vadd.f32 0.0, %v2627
      %2629 = vmatmul.f32.gmra.mxu0 %v2566
      %v2630 = vpop.f32.mrf.mxu0
      %v2631 = vadd.f32 0.0, %v2630
      %2632 = vmatmul.f32.gmra.mxu0 %v2569
      %v2633 = vpop.f32.mrf.mxu0
      %v2634 = vadd.f32 0.0, %v2633
      %2635 = vmatmul.f32.gmra.mxu0 %v2572
      %v2636 = vpop.f32.mrf.mxu0
      %v2637 = vadd.f32 0.0, %v2636
      %2638 = vmatmul.f32.gmra.mxu0 %v2575
      %v2639 = vpop.f32.mrf.mxu0
      %v2640 = vadd.f32 0.0, %v2639
      %2641 = vmatmul.f32.gmra.mxu0 %v2578
      %v2642 = vpop.f32.mrf.mxu0
      %v2643 = vadd.f32 0.0, %v2642
      %2644 = vmatmul.f32.gmra.mxu0 %v2581
      %v2645 = vpop.f32.mrf.mxu0
      %v2646 = vadd.f32 0.0, %v2645
      %2647 = vmatmul.f32.gmra.mxu0 %v2584
      %v2648 = vpop.f32.mrf.mxu0
      %v2649 = vadd.f32 0.0, %v2648
      %2650 = vmatmul.f32.gmra.mxu0 %v2587
      %v2651 = vpop.f32.mrf.mxu0
      %v2652 = vadd.f32 0.0, %v2651
      %2653 = vmatmul.f32.gmra.mxu0 %v2590
      %v2654 = vpop.f32.mrf.mxu0
      %v2655 = vadd.f32 0.0, %v2654
      %2656 = vmatmul.f32.gmra.mxu0 %v2593
      %v2657 = vpop.f32.mrf.mxu0
      %v2658 = vadd.f32 0.0, %v2657
      %2659 = vdwg.mxu0
      %v2661 = vsel %vm658, %v2527, 0
      %v2664 = vsel %vm658, %v2528, 0
      %v2667 = vsel %vm658, %v2529, 0
      %v2670 = vsel %vm658, %v2530, 0
      %v2673 = vsel %vm658, %v2531, 0
      %v2676 = vsel %vm658, %v2532, 0
      %v2679 = vsel %vm658, %v2533, 0
      %v2682 = vsel %vm658, %v2534, 0
      %v2685 = vsel %vm658, %v2535, 0
      %v2688 = vsel %vm658, %v2536, 0
      %v2691 = vsel %vm658, %v2537, 0
      %v2694 = vsel %vm658, %v2538, 0
      %v2697 = vsel %vm658, %v2539, 0
      %v2700 = vsel %vm658, %v2540, 0
      %v2703 = vsel %vm658, %v2541, 0
      %v2706 = vsel %vm658, %v2542, 0
      %2708 = vmatpush.msra.mxu0 0.0
      %2709 = vmatpush.msra.mxu0 0.0
      %2710 = vmatpush.msra.mxu0 0.0
      %2711 = vmatpush.msra.mxu0 0.0
      %2712 = vmatpush.msra.mxu0 0.0
      %2713 = vmatpush.msra.mxu0 0.0
      %2714 = vmatpush.msra.mxu0 0.0
      %2715 = vmatpush.msra.mxu0 0.0
      %2716 = vmatpush.msra.mxu0 0.0
      %2717 = vmatpush.msra.mxu0 0.0
      %2718 = vmatpush.msra.mxu0 0.0
      %2719 = vmatpush.msra.mxu0 0.0
      %2720 = vmatpush.msra.mxu0 0.0
      %2721 = vmatpush.msra.mxu0 0.0
      %2722 = vmatpush.msra.mxu0 %v2546
      %2723 = vmatpush.msra.mxu0 %v2545
      %2724 = vmatmul.f32.gmra.mxu0 %v2661
      %v2725 = vpop.f32.mrf.mxu0
      %v2726 = vadd.f32 0.0, %v2725
      %2727 = vmatmul.f32.gmra.mxu0 %v2664
      %v2728 = vpop.f32.mrf.mxu0
      %v2729 = vadd.f32 0.0, %v2728
      %2730 = vmatmul.f32.gmra.mxu0 %v2667
      %v2731 = vpop.f32.mrf.mxu0
      %v2732 = vadd.f32 0.0, %v2731
      %2733 = vmatmul.f32.gmra.mxu0 %v2670
      %v2734 = vpop.f32.mrf.mxu0
      %v2735 = vadd.f32 0.0, %v2734
      %2736 = vmatmul.f32.gmra.mxu0 %v2673
      %v2737 = vpop.f32.mrf.mxu0
      %v2738 = vadd.f32 0.0, %v2737
      %2739 = vmatmul.f32.gmra.mxu0 %v2676
      %v2740 = vpop.f32.mrf.mxu0
      %v2741 = vadd.f32 0.0, %v2740
      %2742 = vmatmul.f32.gmra.mxu0 %v2679
      %v2743 = vpop.f32.mrf.mxu0
      %v2744 = vadd.f32 0.0, %v2743
      %2745 = vmatmul.f32.gmra.mxu0 %v2682
      %v2746 = vpop.f32.mrf.mxu0
      %v2747 = vadd.f32 0.0, %v2746
      %2748 = vmatmul.f32.gmra.mxu0 %v2685
      %v2749 = vpop.f32.mrf.mxu0
      %v2750 = vadd.f32 0.0, %v2749
      %2751 = vmatmul.f32.gmra.mxu0 %v2688
      %v2752 = vpop.f32.mrf.mxu0
      %v2753 = vadd.f32 0.0, %v2752
      %2754 = vmatmul.f32.gmra.mxu0 %v2691
      %v2755 = vpop.f32.mrf.mxu0
      %v2756 = vadd.f32 0.0, %v2755
      %2757 = vmatmul.f32.gmra.mxu0 %v2694
      %v2758 = vpop.f32.mrf.mxu0
      %v2759 = vadd.f32 0.0, %v2758
      %2760 = vmatmul.f32.gmra.mxu0 %v2697
      %v2761 = vpop.f32.mrf.mxu0
      %v2762 = vadd.f32 0.0, %v2761
      %2763 = vmatmul.f32.gmra.mxu0 %v2700
      %v2764 = vpop.f32.mrf.mxu0
      %v2765 = vadd.f32 0.0, %v2764
      %2766 = vmatmul.f32.gmra.mxu0 %v2703
      %v2767 = vpop.f32.mrf.mxu0
      %v2768 = vadd.f32 0.0, %v2767
      %2769 = vmatmul.f32.gmra.mxu0 %v2706
      %v2770 = vpop.f32.mrf.mxu0
      %v2771 = vadd.f32 0.0, %v2770
      %2772 = vdwg.mxu0
      %v2773 = vsub.f32 %v2613, %v2726
      %v2774 = vsub.f32 %v2616, %v2729
      %v2775 = vsub.f32 %v2619, %v2732
      %v2776 = vsub.f32 %v2622, %v2735
      %v2777 = vsub.f32 %v2625, %v2738
      %v2778 = vsub.f32 %v2628, %v2741
      %v2779 = vsub.f32 %v2631, %v2744
      %v2780 = vsub.f32 %v2634, %v2747
      %v2781 = vsub.f32 %v2637, %v2750
      %v2782 = vsub.f32 %v2640, %v2753
      %v2783 = vsub.f32 %v2643, %v2756
      %v2784 = vsub.f32 %v2646, %v2759
      %v2785 = vsub.f32 %v2649, %v2762
      %v2786 = vsub.f32 %v2652, %v2765
      %v2787 = vsub.f32 %v2655, %v2768
      %v2788 = vsub.f32 %v2658, %v2771
      %2789 = vmatpush.msra.mxu0 0.0
      %2790 = vmatpush.msra.mxu0 0.0
      %2791 = vmatpush.msra.mxu0 0.0
      %2792 = vmatpush.msra.mxu0 0.0
      %2793 = vmatpush.msra.mxu0 0.0
      %2794 = vmatpush.msra.mxu0 0.0
      %2795 = vmatpush.msra.mxu0 0.0
      %2796 = vmatpush.msra.mxu0 0.0
      %2797 = vmatpush.msra.mxu0 0.0
      %2798 = vmatpush.msra.mxu0 0.0
      %2799 = vmatpush.msra.mxu0 0.0
      %2800 = vmatpush.msra.mxu0 0.0
      %2801 = vmatpush.msra.mxu0 0.0
      %2802 = vmatpush.msra.mxu0 0.0
      %2803 = vmatpush.msra.mxu0 %v2544
      %2804 = vmatpush.msra.mxu0 %v2543
      %2805 = vmatmul.f32.gmra.mxu0 %v2661
      %v2806 = vpop.f32.mrf.mxu0
      %v2807 = vadd.f32 0.0, %v2806
      %2808 = vmatmul.f32.gmra.mxu0 %v2664
      %v2809 = vpop.f32.mrf.mxu0
      %v2810 = vadd.f32 0.0, %v2809
      %2811 = vmatmul.f32.gmra.mxu0 %v2667
      %v2812 = vpop.f32.mrf.mxu0
      %v2813 = vadd.f32 0.0, %v2812
      %2814 = vmatmul.f32.gmra.mxu0 %v2670
      %v2815 = vpop.f32.mrf.mxu0
      %v2816 = vadd.f32 0.0, %v2815
      %2817 = vmatmul.f32.gmra.mxu0 %v2673
      %v2818 = vpop.f32.mrf.mxu0
      %v2819 = vadd.f32 0.0, %v2818
      %2820 = vmatmul.f32.gmra.mxu0 %v2676
      %v2821 = vpop.f32.mrf.mxu0
      %v2822 = vadd.f32 0.0, %v2821
      %2823 = vmatmul.f32.gmra.mxu0 %v2679
      %v2824 = vpop.f32.mrf.mxu0
      %v2825 = vadd.f32 0.0, %v2824
      %2826 = vmatmul.f32.gmra.mxu0 %v2682
      %v2827 = vpop.f32.mrf.mxu0
      %v2828 = vadd.f32 0.0, %v2827
      %2829 = vmatmul.f32.gmra.mxu0 %v2685
      %v2830 = vpop.f32.mrf.mxu0
      %v2831 = vadd.f32 0.0, %v2830
      %2832 = vmatmul.f32.gmra.mxu0 %v2688
      %v2833 = vpop.f32.mrf.mxu0
      %v2834 = vadd.f32 0.0, %v2833
      %2835 = vmatmul.f32.gmra.mxu0 %v2691
      %v2836 = vpop.f32.mrf.mxu0
      %v2837 = vadd.f32 0.0, %v2836
      %2838 = vmatmul.f32.gmra.mxu0 %v2694
      %v2839 = vpop.f32.mrf.mxu0
      %v2840 = vadd.f32 0.0, %v2839
      %2841 = vmatmul.f32.gmra.mxu0 %v2697
      %v2842 = vpop.f32.mrf.mxu0
      %v2843 = vadd.f32 0.0, %v2842
      %2844 = vmatmul.f32.gmra.mxu0 %v2700
      %v2845 = vpop.f32.mrf.mxu0
      %v2846 = vadd.f32 0.0, %v2845
      %2847 = vmatmul.f32.gmra.mxu0 %v2703
      %v2848 = vpop.f32.mrf.mxu0
      %v2849 = vadd.f32 0.0, %v2848
      %2850 = vmatmul.f32.gmra.mxu0 %v2706
      %v2851 = vpop.f32.mrf.mxu0
      %v2852 = vadd.f32 0.0, %v2851
      %2853 = vdwg.mxu0
      %2854 = vmatpush.msra.mxu0 0.0
      %2855 = vmatpush.msra.mxu0 0.0
      %2856 = vmatpush.msra.mxu0 0.0
      %2857 = vmatpush.msra.mxu0 0.0
      %2858 = vmatpush.msra.mxu0 0.0
      %2859 = vmatpush.msra.mxu0 0.0
      %2860 = vmatpush.msra.mxu0 0.0
      %2861 = vmatpush.msra.mxu0 0.0
      %2862 = vmatpush.msra.mxu0 0.0
      %2863 = vmatpush.msra.mxu0 0.0
      %2864 = vmatpush.msra.mxu0 0.0
      %2865 = vmatpush.msra.mxu0 0.0
      %2866 = vmatpush.msra.mxu0 0.0
      %2867 = vmatpush.msra.mxu0 0.0
      %2868 = vmatpush.msra.mxu0 %v2546
      %2869 = vmatpush.msra.mxu0 %v2545
      %2870 = vmatmul.f32.gmra.mxu0 %v2548
      %v2871 = vpop.f32.mrf.mxu0
      %v2872 = vadd.f32 %v2807, %v2871
      %2873 = vmatmul.f32.gmra.mxu0 %v2551
      %v2874 = vpop.f32.mrf.mxu0
      %v2875 = vadd.f32 %v2810, %v2874
      %2876 = vmatmul.f32.gmra.mxu0 %v2554
      %v2877 = vpop.f32.mrf.mxu0
      %v2878 = vadd.f32 %v2813, %v2877
      %2879 = vmatmul.f32.gmra.mxu0 %v2557
      %v2880 = vpop.f32.mrf.mxu0
      %v2881 = vadd.f32 %v2816, %v2880
      %2882 = vmatmul.f32.gmra.mxu0 %v2560
      %v2883 = vpop.f32.mrf.mxu0
      %v2884 = vadd.f32 %v2819, %v2883
      %2885 = vmatmul.f32.gmra.mxu0 %v2563
      %v2886 = vpop.f32.mrf.mxu0
      %v2887 = vadd.f32 %v2822, %v2886
      %2888 = vmatmul.f32.gmra.mxu0 %v2566
      %v2889 = vpop.f32.mrf.mxu0
      %v2890 = vadd.f32 %v2825, %v2889
      %2891 = vmatmul.f32.gmra.mxu0 %v2569
      %v2892 = vpop.f32.mrf.mxu0
      %v2893 = vadd.f32 %v2828, %v2892
      %2894 = vmatmul.f32.gmra.mxu0 %v2572
      %v2895 = vpop.f32.mrf.mxu0
      %v2896 = vadd.f32 %v2831, %v2895
      %2897 = vmatmul.f32.gmra.mxu0 %v2575
      %v2898 = vpop.f32.mrf.mxu0
      %v2899 = vadd.f32 %v2834, %v2898
      %2900 = vmatmul.f32.gmra.mxu0 %v2578
      %v2901 = vpop.f32.mrf.mxu0
      %v2902 = vadd.f32 %v2837, %v2901
      %2903 = vmatmul.f32.gmra.mxu0 %v2581
      %v2904 = vpop.f32.mrf.mxu0
      %v2905 = vadd.f32 %v2840, %v2904
      %2906 = vmatmul.f32.gmra.mxu0 %v2584
      %v2907 = vpop.f32.mrf.mxu0
      %v2908 = vadd.f32 %v2843, %v2907
      %2909 = vmatmul.f32.gmra.mxu0 %v2587
      %v2910 = vpop.f32.mrf.mxu0
      %v2911 = vadd.f32 %v2846, %v2910
      %2912 = vmatmul.f32.gmra.mxu0 %v2590
      %v2913 = vpop.f32.mrf.mxu0
      %v2914 = vadd.f32 %v2849, %v2913
      %2915 = vmatmul.f32.gmra.mxu0 %v2593
      %v2916 = vpop.f32.mrf.mxu0
      %v2917 = vadd.f32 %v2852, %v2916
      %2918 = vdwg.mxu0
      %2919 = vxpose.xlu0.b32.start [1/16] %v2773, 128
      %2920 = vxpose.xlu0.b32.cont [2/16] %v2774, 128
      %2921 = vxpose.xlu0.b32.cont [3/16] 0.0, 128
      %2922 = vxpose.xlu0.b32.cont [4/16] 0.0, 128
      %2923 = vxpose.xlu0.b32.cont [5/16] 0.0, 128
      %2924 = vxpose.xlu0.b32.cont [6/16] 0.0, 128
      %2925 = vxpose.xlu0.b32.cont [7/16] 0.0, 128
      %2926 = vxpose.xlu0.b32.cont [8/16] 0.0, 128
      %2927 = vxpose.xlu0.b32.cont [9/16] 0.0, 128
      %2928 = vxpose.xlu0.b32.cont [10/16] 0.0, 128
      %2929 = vxpose.xlu0.b32.cont [11/16] 0.0, 128
      %2930 = vxpose.xlu0.b32.cont [12/16] 0.0, 128
      %2931 = vxpose.xlu0.b32.cont [13/16] 0.0, 128
      %2932 = vxpose.xlu0.b32.cont [14/16] 0.0, 128
      %2933 = vxpose.xlu0.b32.cont [15/16] 0.0, 128
      %2934 = vxpose.xlu0.b32.end [16/16] 0.0, 128
      %v2935 = vpop.trf.xlu0
      %v2936 = vpop.trf.xlu0
      %v2937 = vpop.trf.xlu0
      %v2938 = vpop.trf.xlu0
      %v2939 = vpop.trf.xlu0
      %v2940 = vpop.trf.xlu0
      %v2941 = vpop.trf.xlu0
      %v2942 = vpop.trf.xlu0
      %v2943 = vpop.trf.xlu0
      %v2944 = vpop.trf.xlu0
      %v2945 = vpop.trf.xlu0
      %v2946 = vpop.trf.xlu0
      %v2947 = vpop.trf.xlu0
      %v2948 = vpop.trf.xlu0
      %v2949 = vpop.trf.xlu0
      %v2950 = vpop.trf.xlu0
      %2951 = vxpose.xlu0.b32.start [1/16] %v2775, 128
      %2952 = vxpose.xlu0.b32.cont [2/16] %v2776, 128
      %2953 = vxpose.xlu0.b32.cont [3/16] 0.0, 128
      %2954 = vxpose.xlu0.b32.cont [4/16] 0.0, 128
      %2955 = vxpose.xlu0.b32.cont [5/16] 0.0, 128
      %2956 = vxpose.xlu0.b32.cont [6/16] 0.0, 128
      %2957 = vxpose.xlu0.b32.cont [7/16] 0.0, 128
      %2958 = vxpose.xlu0.b32.cont [8/16] 0.0, 128
      %2959 = vxpose.xlu0.b32.cont [9/16] 0.0, 128
      %2960 = vxpose.xlu0.b32.cont [10/16] 0.0, 128
      %2961 = vxpose.xlu0.b32.cont [11/16] 0.0, 128
      %2962 = vxpose.xlu0.b32.cont [12/16] 0.0, 128
      %2963 = vxpose.xlu0.b32.cont [13/16] 0.0, 128
      %2964 = vxpose.xlu0.b32.cont [14/16] 0.0, 128
      %2965 = vxpose.xlu0.b32.cont [15/16] 0.0, 128
      %2966 = vxpose.xlu0.b32.end [16/16] 0.0, 128
      %v2967 = vpop.trf.xlu0
      %v2968 = vpop.trf.xlu0
      %v2969 = vpop.trf.xlu0
      %v2970 = vpop.trf.xlu0
      %v2971 = vpop.trf.xlu0
      %v2972 = vpop.trf.xlu0
      %v2973 = vpop.trf.xlu0
      %v2974 = vpop.trf.xlu0
      %v2975 = vpop.trf.xlu0
      %v2976 = vpop.trf.xlu0
      %v2977 = vpop.trf.xlu0
      %v2978 = vpop.trf.xlu0
      %v2979 = vpop.trf.xlu0
      %v2980 = vpop.trf.xlu0
      %v2981 = vpop.trf.xlu0
      %v2982 = vpop.trf.xlu0
      %2983 = vxpose.xlu0.b32.start [1/16] %v2777, 128
      %2984 = vxpose.xlu0.b32.cont [2/16] %v2778, 128
      %2985 = vxpose.xlu0.b32.cont [3/16] 0.0, 128
      %2986 = vxpose.xlu0.b32.cont [4/16] 0.0, 128
      %2987 = vxpose.xlu0.b32.cont [5/16] 0.0, 128
      %2988 = vxpose.xlu0.b32.cont [6/16] 0.0, 128
      %2989 = vxpose.xlu0.b32.cont [7/16] 0.0, 128
      %2990 = vxpose.xlu0.b32.cont [8/16] 0.0, 128
      %2991 = vxpose.xlu0.b32.cont [9/16] 0.0, 128
      %2992 = vxpose.xlu0.b32.cont [10/16] 0.0, 128
      %2993 = vxpose.xlu0.b32.cont [11/16] 0.0, 128
      %2994 = vxpose.xlu0.b32.cont [12/16] 0.0, 128
      %2995 = vxpose.xlu0.b32.cont [13/16] 0.0, 128
      %2996 = vxpose.xlu0.b32.cont [14/16] 0.0, 128
      %2997 = vxpose.xlu0.b32.cont [15/16] 0.0, 128
      %2998 = vxpose.xlu0.b32.end [16/16] 0.0, 128
      %v2999 = vpop.trf.xlu0
      %v3000 = vpop.trf.xlu0
      %v3001 = vpop.trf.xlu0
      %v3002 = vpop.trf.xlu0
      %v3003 = vpop.trf.xlu0
      %v3004 = vpop.trf.xlu0
      %v3005 = vpop.trf.xlu0
      %v3006 = vpop.trf.xlu0
      %v3007 = vpop.trf.xlu0
      %v3008 = vpop.trf.xlu0
      %v3009 = vpop.trf.xlu0
      %v3010 = vpop.trf.xlu0
      %v3011 = vpop.trf.xlu0
      %v3012 = vpop.trf.xlu0
      %v3013 = vpop.trf.xlu0
      %v3014 = vpop.trf.xlu0
      %3015 = vxpose.xlu0.b32.start [1/16] %v2779, 128
      %3016 = vxpose.xlu0.b32.cont [2/16] %v2780, 128
      %3017 = vxpose.xlu0.b32.cont [3/16] 0.0, 128
      %3018 = vxpose.xlu0.b32.cont [4/16] 0.0, 128
      %3019 = vxpose.xlu0.b32.cont [5/16] 0.0, 128
      %3020 = vxpose.xlu0.b32.cont [6/16] 0.0, 128
      %3021 = vxpose.xlu0.b32.cont [7/16] 0.0, 128
      %3022 = vxpose.xlu0.b32.cont [8/16] 0.0, 128
      %3023 = vxpose.xlu0.b32.cont [9/16] 0.0, 128
      %3024 = vxpose.xlu0.b32.cont [10/16] 0.0, 128
      %3025 = vxpose.xlu0.b32.cont [11/16] 0.0, 128
      %3026 = vxpose.xlu0.b32.cont [12/16] 0.0, 128
      %3027 = vxpose.xlu0.b32.cont [13/16] 0.0, 128
      %3028 = vxpose.xlu0.b32.cont [14/16] 0.0, 128
      %3029 = vxpose.xlu0.b32.cont [15/16] 0.0, 128
      %3030 = vxpose.xlu0.b32.end [16/16] 0.0, 128
      %v3031 = vpop.trf.xlu0
      %v3032 = vpop.trf.xlu0
      %v3033 = vpop.trf.xlu0
      %v3034 = vpop.trf.xlu0
      %v3035 = vpop.trf.xlu0
      %v3036 = vpop.trf.xlu0
      %v3037 = vpop.trf.xlu0
      %v3038 = vpop.trf.xlu0
      %v3039 = vpop.trf.xlu0
      %v3040 = vpop.trf.xlu0
      %v3041 = vpop.trf.xlu0
      %v3042 = vpop.trf.xlu0
      %v3043 = vpop.trf.xlu0
      %v3044 = vpop.trf.xlu0
      %v3045 = vpop.trf.xlu0
      %v3046 = vpop.trf.xlu0
      %3047 = vxpose.xlu0.b32.start [1/16] %v2781, 128
      %3048 = vxpose.xlu0.b32.cont [2/16] %v2782, 128
      %3049 = vxpose.xlu0.b32.cont [3/16] 0.0, 128
      %3050 = vxpose.xlu0.b32.cont [4/16] 0.0, 128
      %3051 = vxpose.xlu0.b32.cont [5/16] 0.0, 128
      %3052 = vxpose.xlu0.b32.cont [6/16] 0.0, 128
      %3053 = vxpose.xlu0.b32.cont [7/16] 0.0, 128
      %3054 = vxpose.xlu0.b32.cont [8/16] 0.0, 128
      %3055 = vxpose.xlu0.b32.cont [9/16] 0.0, 128
      %3056 = vxpose.xlu0.b32.cont [10/16] 0.0, 128
      %3057 = vxpose.xlu0.b32.cont [11/16] 0.0, 128
      %3058 = vxpose.xlu0.b32.cont [12/16] 0.0, 128
      %3059 = vxpose.xlu0.b32.cont [13/16] 0.0, 128
      %3060 = vxpose.xlu0.b32.cont [14/16] 0.0, 128
      %3061 = vxpose.xlu0.b32.cont [15/16] 0.0, 128
      %3062 = vxpose.xlu0.b32.end [16/16] 0.0, 128
      %v3063 = vpop.trf.xlu0
      %v3064 = vpop.trf.xlu0
      %v3065 = vpop.trf.xlu0
      %v3066 = vpop.trf.xlu0
      %v3067 = vpop.trf.xlu0
      %v3068 = vpop.trf.xlu0
      %v3069 = vpop.trf.xlu0
      %v3070 = vpop.trf.xlu0
      %v3071 = vpop.trf.xlu0
      %v3072 = vpop.trf.xlu0
      %v3073 = vpop.trf.xlu0
      %v3074 = vpop.trf.xlu0
      %v3075 = vpop.trf.xlu0
      %v3076 = vpop.trf.xlu0
      %v3077 = vpop.trf.xlu0
      %v3078 = vpop.trf.xlu0
      %3079 = vxpose.xlu0.b32.start [1/16] %v2783, 128
      %3080 = vxpose.xlu0.b32.cont [2/16] %v2784, 128
      %3081 = vxpose.xlu0.b32.cont [3/16] 0.0, 128
      %3082 = vxpose.xlu0.b32.cont [4/16] 0.0, 128
      %3083 = vxpose.xlu0.b32.cont [5/16] 0.0, 128
      %3084 = vxpose.xlu0.b32.cont [6/16] 0.0, 128
      %3085 = vxpose.xlu0.b32.cont [7/16] 0.0, 128
      %3086 = vxpose.xlu0.b32.cont [8/16] 0.0, 128
      %3087 = vxpose.xlu0.b32.cont [9/16] 0.0, 128
      %3088 = vxpose.xlu0.b32.cont [10/16] 0.0, 128
      %3089 = vxpose.xlu0.b32.cont [11/16] 0.0, 128
      %3090 = vxpose.xlu0.b32.cont [12/16] 0.0, 128
      %3091 = vxpose.xlu0.b32.cont [13/16] 0.0, 128
      %3092 = vxpose.xlu0.b32.cont [14/16] 0.0, 128
      %3093 = vxpose.xlu0.b32.cont [15/16] 0.0, 128
      %3094 = vxpose.xlu0.b32.end [16/16] 0.0, 128
      %v3095 = vpop.trf.xlu0
      %v3096 = vpop.trf.xlu0
      %v3097 = vpop.trf.xlu0
      %v3098 = vpop.trf.xlu0
      %v3099 = vpop.trf.xlu0
      %v3100 = vpop.trf.xlu0
      %v3101 = vpop.trf.xlu0
      %v3102 = vpop.trf.xlu0
      %v3103 = vpop.trf.xlu0
      %v3104 = vpop.trf.xlu0
      %v3105 = vpop.trf.xlu0
      %v3106 = vpop.trf.xlu0
      %v3107 = vpop.trf.xlu0
      %v3108 = vpop.trf.xlu0
      %v3109 = vpop.trf.xlu0
      %v3110 = vpop.trf.xlu0
      %3111 = vxpose.xlu0.b32.start [1/16] %v2785, 128
      %3112 = vxpose.xlu0.b32.cont [2/16] %v2786, 128
      %3113 = vxpose.xlu0.b32.cont [3/16] 0.0, 128
      %3114 = vxpose.xlu0.b32.cont [4/16] 0.0, 128
      %3115 = vxpose.xlu0.b32.cont [5/16] 0.0, 128
      %3116 = vxpose.xlu0.b32.cont [6/16] 0.0, 128
      %3117 = vxpose.xlu0.b32.cont [7/16] 0.0, 128
      %3118 = vxpose.xlu0.b32.cont [8/16] 0.0, 128
      %3119 = vxpose.xlu0.b32.cont [9/16] 0.0, 128
      %3120 = vxpose.xlu0.b32.cont [10/16] 0.0, 128
      %3121 = vxpose.xlu0.b32.cont [11/16] 0.0, 128
      %3122 = vxpose.xlu0.b32.cont [12/16] 0.0, 128
      %3123 = vxpose.xlu0.b32.cont [13/16] 0.0, 128
      %3124 = vxpose.xlu0.b32.cont [14/16] 0.0, 128
      %3125 = vxpose.xlu0.b32.cont [15/16] 0.0, 128
      %3126 = vxpose.xlu0.b32.end [16/16] 0.0, 128
      %v3127 = vpop.trf.xlu0
      %v3128 = vpop.trf.xlu0
      %v3129 = vpop.trf.xlu0
      %v3130 = vpop.trf.xlu0
      %v3131 = vpop.trf.xlu0
      %v3132 = vpop.trf.xlu0
      %v3133 = vpop.trf.xlu0
      %v3134 = vpop.trf.xlu0
      %v3135 = vpop.trf.xlu0
      %v3136 = vpop.trf.xlu0
      %v3137 = vpop.trf.xlu0
      %v3138 = vpop.trf.xlu0
      %v3139 = vpop.trf.xlu0
      %v3140 = vpop.trf.xlu0
      %v3141 = vpop.trf.xlu0
      %v3142 = vpop.trf.xlu0
      %3143 = vxpose.xlu0.b32.start [1/16] %v2787, 128
      %3144 = vxpose.xlu0.b32.cont [2/16] %v2788, 128
      %3145 = vxpose.xlu0.b32.cont [3/16] 0.0, 128
      %3146 = vxpose.xlu0.b32.cont [4/16] 0.0, 128
      %3147 = vxpose.xlu0.b32.cont [5/16] 0.0, 128
      %3148 = vxpose.xlu0.b32.cont [6/16] 0.0, 128
      %3149 = vxpose.xlu0.b32.cont [7/16] 0.0, 128
      %3150 = vxpose.xlu0.b32.cont [8/16] 0.0, 128
      %3151 = vxpose.xlu0.b32.cont [9/16] 0.0, 128
      %3152 = vxpose.xlu0.b32.cont [10/16] 0.0, 128
      %3153 = vxpose.xlu0.b32.cont [11/16] 0.0, 128
      %3154 = vxpose.xlu0.b32.cont [12/16] 0.0, 128
      %3155 = vxpose.xlu0.b32.cont [13/16] 0.0, 128
      %3156 = vxpose.xlu0.b32.cont [14/16] 0.0, 128
      %3157 = vxpose.xlu0.b32.cont [15/16] 0.0, 128
      %3158 = vxpose.xlu0.b32.end [16/16] 0.0, 128
      %v3159 = vpop.trf.xlu0
      %v3160 = vpop.trf.xlu0
      %v3161 = vpop.trf.xlu0
      %v3162 = vpop.trf.xlu0
      %v3163 = vpop.trf.xlu0
      %v3164 = vpop.trf.xlu0
      %v3165 = vpop.trf.xlu0
      %v3166 = vpop.trf.xlu0
      %v3167 = vpop.trf.xlu0
      %v3168 = vpop.trf.xlu0
      %v3169 = vpop.trf.xlu0
      %v3170 = vpop.trf.xlu0
      %v3171 = vpop.trf.xlu0
      %v3172 = vpop.trf.xlu0
      %v3173 = vpop.trf.xlu0
      %v3174 = vpop.trf.xlu0
      %3175 = vxpose.xlu0.b32.start [1/16] %v2872, 128
      %3176 = vxpose.xlu0.b32.cont [2/16] %v2875, 128
      %3177 = vxpose.xlu0.b32.cont [3/16] 0.0, 128
      %3178 = vxpose.xlu0.b32.cont [4/16] 0.0, 128
      %3179 = vxpose.xlu0.b32.cont [5/16] 0.0, 128
      %3180 = vxpose.xlu0.b32.cont [6/16] 0.0, 128
      %3181 = vxpose.xlu0.b32.cont [7/16] 0.0, 128
      %3182 = vxpose.xlu0.b32.cont [8/16] 0.0, 128
      %3183 = vxpose.xlu0.b32.cont [9/16] 0.0, 128
      %3184 = vxpose.xlu0.b32.cont [10/16] 0.0, 128
      %3185 = vxpose.xlu0.b32.cont [11/16] 0.0, 128
      %3186 = vxpose.xlu0.b32.cont [12/16] 0.0, 128
      %3187 = vxpose.xlu0.b32.cont [13/16] 0.0, 128
      %3188 = vxpose.xlu0.b32.cont [14/16] 0.0, 128
      %3189 = vxpose.xlu0.b32.cont [15/16] 0.0, 128
      %3190 = vxpose.xlu0.b32.end [16/16] 0.0, 128
      %v3191 = vpop.trf.xlu0
      %v3192 = vpop.trf.xlu0
      %v3193 = vpop.trf.xlu0
      %v3194 = vpop.trf.xlu0
      %v3195 = vpop.trf.xlu0
      %v3196 = vpop.trf.xlu0
      %v3197 = vpop.trf.xlu0
      %v3198 = vpop.trf.xlu0
      %v3199 = vpop.trf.xlu0
      %v3200 = vpop.trf.xlu0
      %v3201 = vpop.trf.xlu0
      %v3202 = vpop.trf.xlu0
      %v3203 = vpop.trf.xlu0
      %v3204 = vpop.trf.xlu0
      %v3205 = vpop.trf.xlu0
      %v3206 = vpop.trf.xlu0
      %3207 = vxpose.xlu0.b32.start [1/16] %v2878, 128
      %3208 = vxpose.xlu0.b32.cont [2/16] %v2881, 128
      %3209 = vxpose.xlu0.b32.cont [3/16] 0.0, 128
      %3210 = vxpose.xlu0.b32.cont [4/16] 0.0, 128
      %3211 = vxpose.xlu0.b32.cont [5/16] 0.0, 128
      %3212 = vxpose.xlu0.b32.cont [6/16] 0.0, 128
      %3213 = vxpose.xlu0.b32.cont [7/16] 0.0, 128
      %3214 = vxpose.xlu0.b32.cont [8/16] 0.0, 128
      %3215 = vxpose.xlu0.b32.cont [9/16] 0.0, 128
      %3216 = vxpose.xlu0.b32.cont [10/16] 0.0, 128
      %3217 = vxpose.xlu0.b32.cont [11/16] 0.0, 128
      %3218 = vxpose.xlu0.b32.cont [12/16] 0.0, 128
      %3219 = vxpose.xlu0.b32.cont [13/16] 0.0, 128
      %3220 = vxpose.xlu0.b32.cont [14/16] 0.0, 128
      %3221 = vxpose.xlu0.b32.cont [15/16] 0.0, 128
      %3222 = vxpose.xlu0.b32.end [16/16] 0.0, 128
      %v3223 = vpop.trf.xlu0
      %v3224 = vpop.trf.xlu0
      %v3225 = vpop.trf.xlu0
      %v3226 = vpop.trf.xlu0
      %v3227 = vpop.trf.xlu0
      %v3228 = vpop.trf.xlu0
      %v3229 = vpop.trf.xlu0
      %v3230 = vpop.trf.xlu0
      %v3231 = vpop.trf.xlu0
      %v3232 = vpop.trf.xlu0
      %v3233 = vpop.trf.xlu0
      %v3234 = vpop.trf.xlu0
      %v3235 = vpop.trf.xlu0
      %v3236 = vpop.trf.xlu0
      %v3237 = vpop.trf.xlu0
      %v3238 = vpop.trf.xlu0
      %3239 = vxpose.xlu0.b32.start [1/16] %v2884, 128
      %3240 = vxpose.xlu0.b32.cont [2/16] %v2887, 128
      %3241 = vxpose.xlu0.b32.cont [3/16] 0.0, 128
      %3242 = vxpose.xlu0.b32.cont [4/16] 0.0, 128
      %3243 = vxpose.xlu0.b32.cont [5/16] 0.0, 128
      %3244 = vxpose.xlu0.b32.cont [6/16] 0.0, 128
      %3245 = vxpose.xlu0.b32.cont [7/16] 0.0, 128
      %3246 = vxpose.xlu0.b32.cont [8/16] 0.0, 128
      %3247 = vxpose.xlu0.b32.cont [9/16] 0.0, 128
      %3248 = vxpose.xlu0.b32.cont [10/16] 0.0, 128
      %3249 = vxpose.xlu0.b32.cont [11/16] 0.0, 128
      %3250 = vxpose.xlu0.b32.cont [12/16] 0.0, 128
      %3251 = vxpose.xlu0.b32.cont [13/16] 0.0, 128
      %3252 = vxpose.xlu0.b32.cont [14/16] 0.0, 128
      %3253 = vxpose.xlu0.b32.cont [15/16] 0.0, 128
      %3254 = vxpose.xlu0.b32.end [16/16] 0.0, 128
      %v3255 = vpop.trf.xlu0
      %v3256 = vpop.trf.xlu0
      %v3257 = vpop.trf.xlu0
      %v3258 = vpop.trf.xlu0
      %v3259 = vpop.trf.xlu0
      %v3260 = vpop.trf.xlu0
      %v3261 = vpop.trf.xlu0
      %v3262 = vpop.trf.xlu0
      %v3263 = vpop.trf.xlu0
      %v3264 = vpop.trf.xlu0
      %v3265 = vpop.trf.xlu0
      %v3266 = vpop.trf.xlu0
      %v3267 = vpop.trf.xlu0
      %v3268 = vpop.trf.xlu0
      %v3269 = vpop.trf.xlu0
      %v3270 = vpop.trf.xlu0
      %3271 = vxpose.xlu0.b32.start [1/16] %v2890, 128
      %3272 = vxpose.xlu0.b32.cont [2/16] %v2893, 128
      %3273 = vxpose.xlu0.b32.cont [3/16] 0.0, 128
      %3274 = vxpose.xlu0.b32.cont [4/16] 0.0, 128
      %3275 = vxpose.xlu0.b32.cont [5/16] 0.0, 128
      %3276 = vxpose.xlu0.b32.cont [6/16] 0.0, 128
      %3277 = vxpose.xlu0.b32.cont [7/16] 0.0, 128
      %3278 = vxpose.xlu0.b32.cont [8/16] 0.0, 128
      %3279 = vxpose.xlu0.b32.cont [9/16] 0.0, 128
      %3280 = vxpose.xlu0.b32.cont [10/16] 0.0, 128
      %3281 = vxpose.xlu0.b32.cont [11/16] 0.0, 128
      %3282 = vxpose.xlu0.b32.cont [12/16] 0.0, 128
      %3283 = vxpose.xlu0.b32.cont [13/16] 0.0, 128
      %3284 = vxpose.xlu0.b32.cont [14/16] 0.0, 128
      %3285 = vxpose.xlu0.b32.cont [15/16] 0.0, 128
      %3286 = vxpose.xlu0.b32.end [16/16] 0.0, 128
      %v3287 = vpop.trf.xlu0
      %v3288 = vpop.trf.xlu0
      %v3289 = vpop.trf.xlu0
      %v3290 = vpop.trf.xlu0
      %v3291 = vpop.trf.xlu0
      %v3292 = vpop.trf.xlu0
      %v3293 = vpop.trf.xlu0
      %v3294 = vpop.trf.xlu0
      %v3295 = vpop.trf.xlu0
      %v3296 = vpop.trf.xlu0
      %v3297 = vpop.trf.xlu0
      %v3298 = vpop.trf.xlu0
      %v3299 = vpop.trf.xlu0
      %v3300 = vpop.trf.xlu0
      %v3301 = vpop.trf.xlu0
      %v3302 = vpop.trf.xlu0
      %3303 = vxpose.xlu0.b32.start [1/16] %v2896, 128
      %3304 = vxpose.xlu0.b32.cont [2/16] %v2899, 128
      %3305 = vxpose.xlu0.b32.cont [3/16] 0.0, 128
      %3306 = vxpose.xlu0.b32.cont [4/16] 0.0, 128
      %3307 = vxpose.xlu0.b32.cont [5/16] 0.0, 128
      %3308 = vxpose.xlu0.b32.cont [6/16] 0.0, 128
      %3309 = vxpose.xlu0.b32.cont [7/16] 0.0, 128
      %3310 = vxpose.xlu0.b32.cont [8/16] 0.0, 128
      %3311 = vxpose.xlu0.b32.cont [9/16] 0.0, 128
      %3312 = vxpose.xlu0.b32.cont [10/16] 0.0, 128
      %3313 = vxpose.xlu0.b32.cont [11/16] 0.0, 128
      %3314 = vxpose.xlu0.b32.cont [12/16] 0.0, 128
      %3315 = vxpose.xlu0.b32.cont [13/16] 0.0, 128
      %3316 = vxpose.xlu0.b32.cont [14/16] 0.0, 128
      %3317 = vxpose.xlu0.b32.cont [15/16] 0.0, 128
      %3318 = vxpose.xlu0.b32.end [16/16] 0.0, 128
      %v3319 = vpop.trf.xlu0
      %v3320 = vpop.trf.xlu0
      %v3321 = vpop.trf.xlu0
      %v3322 = vpop.trf.xlu0
      %v3323 = vpop.trf.xlu0
      %v3324 = vpop.trf.xlu0
      %v3325 = vpop.trf.xlu0
      %v3326 = vpop.trf.xlu0
      %v3327 = vpop.trf.xlu0
      %v3328 = vpop.trf.xlu0
      %v3329 = vpop.trf.xlu0
      %v3330 = vpop.trf.xlu0
      %v3331 = vpop.trf.xlu0
      %v3332 = vpop.trf.xlu0
      %v3333 = vpop.trf.xlu0
      %v3334 = vpop.trf.xlu0
      %3335 = vxpose.xlu0.b32.start [1/16] %v2902, 128
      %3336 = vxpose.xlu0.b32.cont [2/16] %v2905, 128
      %3337 = vxpose.xlu0.b32.cont [3/16] 0.0, 128
      %3338 = vxpose.xlu0.b32.cont [4/16] 0.0, 128
      %3339 = vxpose.xlu0.b32.cont [5/16] 0.0, 128
      %3340 = vxpose.xlu0.b32.cont [6/16] 0.0, 128
      %3341 = vxpose.xlu0.b32.cont [7/16] 0.0, 128
      %3342 = vxpose.xlu0.b32.cont [8/16] 0.0, 128
      %3343 = vxpose.xlu0.b32.cont [9/16] 0.0, 128
      %3344 = vxpose.xlu0.b32.cont [10/16] 0.0, 128
      %3345 = vxpose.xlu0.b32.cont [11/16] 0.0, 128
      %3346 = vxpose.xlu0.b32.cont [12/16] 0.0, 128
      %3347 = vxpose.xlu0.b32.cont [13/16] 0.0, 128
      %3348 = vxpose.xlu0.b32.cont [14/16] 0.0, 128
      %3349 = vxpose.xlu0.b32.cont [15/16] 0.0, 128
      %3350 = vxpose.xlu0.b32.end [16/16] 0.0, 128
      %v3351 = vpop.trf.xlu0
      %v3352 = vpop.trf.xlu0
      %v3353 = vpop.trf.xlu0
      %v3354 = vpop.trf.xlu0
      %v3355 = vpop.trf.xlu0
      %v3356 = vpop.trf.xlu0
      %v3357 = vpop.trf.xlu0
      %v3358 = vpop.trf.xlu0
      %v3359 = vpop.trf.xlu0
      %v3360 = vpop.trf.xlu0
      %v3361 = vpop.trf.xlu0
      %v3362 = vpop.trf.xlu0
      %v3363 = vpop.trf.xlu0
      %v3364 = vpop.trf.xlu0
      %v3365 = vpop.trf.xlu0
      %v3366 = vpop.trf.xlu0
      %3367 = vxpose.xlu0.b32.start [1/16] %v2908, 128
      %3368 = vxpose.xlu0.b32.cont [2/16] %v2911, 128
      %3369 = vxpose.xlu0.b32.cont [3/16] 0.0, 128
      %3370 = vxpose.xlu0.b32.cont [4/16] 0.0, 128
      %3371 = vxpose.xlu0.b32.cont [5/16] 0.0, 128
      %3372 = vxpose.xlu0.b32.cont [6/16] 0.0, 128
      %3373 = vxpose.xlu0.b32.cont [7/16] 0.0, 128
      %3374 = vxpose.xlu0.b32.cont [8/16] 0.0, 128
      %3375 = vxpose.xlu0.b32.cont [9/16] 0.0, 128
      %3376 = vxpose.xlu0.b32.cont [10/16] 0.0, 128
      %3377 = vxpose.xlu0.b32.cont [11/16] 0.0, 128
      %3378 = vxpose.xlu0.b32.cont [12/16] 0.0, 128
      %3379 = vxpose.xlu0.b32.cont [13/16] 0.0, 128
      %3380 = vxpose.xlu0.b32.cont [14/16] 0.0, 128
      %3381 = vxpose.xlu0.b32.cont [15/16] 0.0, 128
      %3382 = vxpose.xlu0.b32.end [16/16] 0.0, 128
      %v3383 = vpop.trf.xlu0
      %v3384 = vpop.trf.xlu0
      %v3385 = vpop.trf.xlu0
      %v3386 = vpop.trf.xlu0
      %v3387 = vpop.trf.xlu0
      %v3388 = vpop.trf.xlu0
      %v3389 = vpop.trf.xlu0
      %v3390 = vpop.trf.xlu0
      %v3391 = vpop.trf.xlu0
      %v3392 = vpop.trf.xlu0
      %v3393 = vpop.trf.xlu0
      %v3394 = vpop.trf.xlu0
      %v3395 = vpop.trf.xlu0
      %v3396 = vpop.trf.xlu0
      %v3397 = vpop.trf.xlu0
      %v3398 = vpop.trf.xlu0
      %3399 = vxpose.xlu0.b32.start [1/16] %v2914, 128
      %3400 = vxpose.xlu0.b32.cont [2/16] %v2917, 128
      %3401 = vxpose.xlu0.b32.cont [3/16] 0.0, 128
      %3402 = vxpose.xlu0.b32.cont [4/16] 0.0, 128
      %3403 = vxpose.xlu0.b32.cont [5/16] 0.0, 128
      %3404 = vxpose.xlu0.b32.cont [6/16] 0.0, 128
      %3405 = vxpose.xlu0.b32.cont [7/16] 0.0, 128
      %3406 = vxpose.xlu0.b32.cont [8/16] 0.0, 128
      %3407 = vxpose.xlu0.b32.cont [9/16] 0.0, 128
      %3408 = vxpose.xlu0.b32.cont [10/16] 0.0, 128
      %3409 = vxpose.xlu0.b32.cont [11/16] 0.0, 128
      %3410 = vxpose.xlu0.b32.cont [12/16] 0.0, 128
      %3411 = vxpose.xlu0.b32.cont [13/16] 0.0, 128
      %3412 = vxpose.xlu0.b32.cont [14/16] 0.0, 128
      %3413 = vxpose.xlu0.b32.cont [15/16] 0.0, 128
      %3414 = vxpose.xlu0.b32.end [16/16] 0.0, 128
      %v3415 = vpop.trf.xlu0
      %v3416 = vpop.trf.xlu0
      %v3417 = vpop.trf.xlu0
      %v3418 = vpop.trf.xlu0
      %v3419 = vpop.trf.xlu0
      %v3420 = vpop.trf.xlu0
      %v3421 = vpop.trf.xlu0
      %v3422 = vpop.trf.xlu0
      %v3423 = vpop.trf.xlu0
      %v3424 = vpop.trf.xlu0
      %v3425 = vpop.trf.xlu0
      %v3426 = vpop.trf.xlu0
      %v3427 = vpop.trf.xlu0
      %v3428 = vpop.trf.xlu0
      %v3429 = vpop.trf.xlu0
      %v3430 = vpop.trf.xlu0
      %v3431 = vld [vmem:[%s12] sm:$0xff]
      %v3432 = vld [vmem:[%s12 + $0x8] sm:$0xff]
      %v3433 = vld [vmem:[%s13] sm:$0xff]
      %v3434 = vld [vmem:[%s13 + $0x8] sm:$0xff]
      %v3436 = vsel %vm658, %v2935, 0
      %v3439 = vsel %vm658, %v2936, 0
      %v3442 = vsel %vm658, %v2937, 0
      %v3445 = vsel %vm658, %v2938, 0
      %v3448 = vsel %vm658, %v2967, 0
      %v3451 = vsel %vm658, %v2968, 0
      %v3454 = vsel %vm658, %v2969, 0
      %v3457 = vsel %vm658, %v2970, 0
      %v3460 = vsel %vm658, %v2999, 0
      %v3463 = vsel %vm658, %v3000, 0
      %v3466 = vsel %vm658, %v3001, 0
      %v3469 = vsel %vm658, %v3002, 0
      %v3472 = vsel %vm658, %v3031, 0
      %v3475 = vsel %vm658, %v3032, 0
      %v3478 = vsel %vm658, %v3033, 0
      %v3481 = vsel %vm658, %v3034, 0
      %v3484 = vsel %vm658, %v3063, 0
      %v3487 = vsel %vm658, %v3064, 0
      %v3490 = vsel %vm658, %v3065, 0
      %v3493 = vsel %vm658, %v3066, 0
      %v3496 = vsel %vm658, %v3095, 0
      %v3499 = vsel %vm658, %v3096, 0
      %v3502 = vsel %vm658, %v3097, 0
      %v3505 = vsel %vm658, %v3098, 0
      %v3508 = vsel %vm658, %v3127, 0
      %v3511 = vsel %vm658, %v3128, 0
      %v3514 = vsel %vm658, %v3129, 0
      %v3517 = vsel %vm658, %v3130, 0
      %v3520 = vsel %vm658, %v3159, 0
      %v3523 = vsel %vm658, %v3160, 0
      %v3526 = vsel %vm658, %v3161, 0
      %v3529 = vsel %vm658, %v3162, 0
      %3531 = vmatpush.msra.mxu0 0.0
      %3532 = vmatpush.msra.mxu0 0.0
      %3533 = vmatpush.msra.mxu0 0.0
      %3534 = vmatpush.msra.mxu0 0.0
      %3535 = vmatpush.msra.mxu0 0.0
      %3536 = vmatpush.msra.mxu0 0.0
      %3537 = vmatpush.msra.mxu0 0.0
      %3538 = vmatpush.msra.mxu0 0.0
      %3539 = vmatpush.msra.mxu0 0.0
      %3540 = vmatpush.msra.mxu0 0.0
      %3541 = vmatpush.msra.mxu0 0.0
      %3542 = vmatpush.msra.mxu0 0.0
      %3543 = vmatpush.msra.mxu0 0.0
      %3544 = vmatpush.msra.mxu0 0.0
      %3545 = vmatpush.msra.mxu0 %v3432
      %3546 = vmatpush.msra.mxu0 %v3431
      %3547 = vmatmul.f32.gmra.mxu0 %v3436
      %v3548 = vpop.f32.mrf.mxu0
      %v3549 = vadd.f32 0.0, %v3548
      %3550 = vmatmul.f32.gmra.mxu0 %v3439
      %v3551 = vpop.f32.mrf.mxu0
      %v3552 = vadd.f32 0.0, %v3551
      %3553 = vmatmul.f32.gmra.mxu0 %v3442
      %v3554 = vpop.f32.mrf.mxu0
      %v3555 = vadd.f32 0.0, %v3554
      %3556 = vmatmul.f32.gmra.mxu0 %v3445
      %v3557 = vpop.f32.mrf.mxu0
      %v3558 = vadd.f32 0.0, %v3557
      %3559 = vmatmul.f32.gmra.mxu0 %v3448
      %v3560 = vpop.f32.mrf.mxu0
      %v3561 = vadd.f32 0.0, %v3560
      %3562 = vmatmul.f32.gmra.mxu0 %v3451
      %v3563 = vpop.f32.mrf.mxu0
      %v3564 = vadd.f32 0.0, %v3563
      %3565 = vmatmul.f32.gmra.mxu0 %v3454
      %v3566 = vpop.f32.mrf.mxu0
      %v3567 = vadd.f32 0.0, %v3566
      %3568 = vmatmul.f32.gmra.mxu0 %v3457
      %v3569 = vpop.f32.mrf.mxu0
      %v3570 = vadd.f32 0.0, %v3569
      %3571 = vmatmul.f32.gmra.mxu0 %v3460
      %v3572 = vpop.f32.mrf.mxu0
      %v3573 = vadd.f32 0.0, %v3572
      %3574 = vmatmul.f32.gmra.mxu0 %v3463
      %v3575 = vpop.f32.mrf.mxu0
      %v3576 = vadd.f32 0.0, %v3575
      %3577 = vmatmul.f32.gmra.mxu0 %v3466
      %v3578 = vpop.f32.mrf.mxu0
      %v3579 = vadd.f32 0.0, %v3578
      %3580 = vmatmul.f32.gmra.mxu0 %v3469
      %v3581 = vpop.f32.mrf.mxu0
      %v3582 = vadd.f32 0.0, %v3581
      %3583 = vmatmul.f32.gmra.mxu0 %v3472
      %v3584 = vpop.f32.mrf.mxu0
      %v3585 = vadd.f32 0.0, %v3584
      %3586 = vmatmul.f32.gmra.mxu0 %v3475
      %v3587 = vpop.f32.mrf.mxu0
      %v3588 = vadd.f32 0.0, %v3587
      %3589 = vmatmul.f32.gmra.mxu0 %v3478
      %v3590 = vpop.f32.mrf.mxu0
      %v3591 = vadd.f32 0.0, %v3590
      %3592 = vmatmul.f32.gmra.mxu0 %v3481
      %v3593 = vpop.f32.mrf.mxu0
      %v3594 = vadd.f32 0.0, %v3593
      %3595 = vmatmul.f32.gmra.mxu0 %v3484
      %v3596 = vpop.f32.mrf.mxu0
      %v3597 = vadd.f32 0.0, %v3596
      %3598 = vmatmul.f32.gmra.mxu0 %v3487
      %v3599 = vpop.f32.mrf.mxu0
      %v3600 = vadd.f32 0.0, %v3599
      %3601 = vmatmul.f32.gmra.mxu0 %v3490
      %v3602 = vpop.f32.mrf.mxu0
      %v3603 = vadd.f32 0.0, %v3602
      %3604 = vmatmul.f32.gmra.mxu0 %v3493
      %v3605 = vpop.f32.mrf.mxu0
      %v3606 = vadd.f32 0.0, %v3605
      %3607 = vmatmul.f32.gmra.mxu0 %v3496
      %v3608 = vpop.f32.mrf.mxu0
      %v3609 = vadd.f32 0.0, %v3608
      %3610 = vmatmul.f32.gmra.mxu0 %v3499
      %v3611 = vpop.f32.mrf.mxu0
      %v3612 = vadd.f32 0.0, %v3611
      %3613 = vmatmul.f32.gmra.mxu0 %v3502
      %v3614 = vpop.f32.mrf.mxu0
      %v3615 = vadd.f32 0.0, %v3614
      %3616 = vmatmul.f32.gmra.mxu0 %v3505
      %v3617 = vpop.f32.mrf.mxu0
      %v3618 = vadd.f32 0.0, %v3617
      %3619 = vmatmul.f32.gmra.mxu0 %v3508
      %v3620 = vpop.f32.mrf.mxu0
      %v3621 = vadd.f32 0.0, %v3620
      %3622 = vmatmul.f32.gmra.mxu0 %v3511
      %v3623 = vpop.f32.mrf.mxu0
      %v3624 = vadd.f32 0.0, %v3623
      %3625 = vmatmul.f32.gmra.mxu0 %v3514
      %v3626 = vpop.f32.mrf.mxu0
      %v3627 = vadd.f32 0.0, %v3626
      %3628 = vmatmul.f32.gmra.mxu0 %v3517
      %v3629 = vpop.f32.mrf.mxu0
      %v3630 = vadd.f32 0.0, %v3629
      %3631 = vmatmul.f32.gmra.mxu0 %v3520
      %v3632 = vpop.f32.mrf.mxu0
      %v3633 = vadd.f32 0.0, %v3632
      %3634 = vmatmul.f32.gmra.mxu0 %v3523
      %v3635 = vpop.f32.mrf.mxu0
      %v3636 = vadd.f32 0.0, %v3635
      %3637 = vmatmul.f32.gmra.mxu0 %v3526
      %v3638 = vpop.f32.mrf.mxu0
      %v3639 = vadd.f32 0.0, %v3638
      %3640 = vmatmul.f32.gmra.mxu0 %v3529
      %v3641 = vpop.f32.mrf.mxu0
      %v3642 = vadd.f32 0.0, %v3641
      %3643 = vdwg.mxu0
      %v3645 = vsel %vm658, %v3191, 0
      %v3648 = vsel %vm658, %v3192, 0
      %v3651 = vsel %vm658, %v3193, 0
      %v3654 = vsel %vm658, %v3194, 0
      %v3657 = vsel %vm658, %v3223, 0
      %v3660 = vsel %vm658, %v3224, 0
      %v3663 = vsel %vm658, %v3225, 0
      %v3666 = vsel %vm658, %v3226, 0
      %v3669 = vsel %vm658, %v3255, 0
      %v3672 = vsel %vm658, %v3256, 0
      %v3675 = vsel %vm658, %v3257, 0
      %v3678 = vsel %vm658, %v3258, 0
      %v3681 = vsel %vm658, %v3287, 0
      %v3684 = vsel %vm658, %v3288, 0
      %v3687 = vsel %vm658, %v3289, 0
      %v3690 = vsel %vm658, %v3290, 0
      %v3693 = vsel %vm658, %v3319, 0
      %v3696 = vsel %vm658, %v3320, 0
      %v3699 = vsel %vm658, %v3321, 0
      %v3702 = vsel %vm658, %v3322, 0
      %v3705 = vsel %vm658, %v3351, 0
      %v3708 = vsel %vm658, %v3352, 0
      %v3711 = vsel %vm658, %v3353, 0
      %v3714 = vsel %vm658, %v3354, 0
      %v3717 = vsel %vm658, %v3383, 0
      %v3720 = vsel %vm658, %v3384, 0
      %v3723 = vsel %vm658, %v3385, 0
      %v3726 = vsel %vm658, %v3386, 0
      %v3729 = vsel %vm658, %v3415, 0
      %v3732 = vsel %vm658, %v3416, 0
      %v3735 = vsel %vm658, %v3417, 0
      %v3738 = vsel %vm658, %v3418, 0
      %3740 = vmatpush.msra.mxu0 0.0
      %3741 = vmatpush.msra.mxu0 0.0
      %3742 = vmatpush.msra.mxu0 0.0
      %3743 = vmatpush.msra.mxu0 0.0
      %3744 = vmatpush.msra.mxu0 0.0
      %3745 = vmatpush.msra.mxu0 0.0
      %3746 = vmatpush.msra.mxu0 0.0
      %3747 = vmatpush.msra.mxu0 0.0
      %3748 = vmatpush.msra.mxu0 0.0
      %3749 = vmatpush.msra.mxu0 0.0
      %3750 = vmatpush.msra.mxu0 0.0
      %3751 = vmatpush.msra.mxu0 0.0
      %3752 = vmatpush.msra.mxu0 0.0
      %3753 = vmatpush.msra.mxu0 0.0
      %3754 = vmatpush.msra.mxu0 %v3434
      %3755 = vmatpush.msra.mxu0 %v3433
      %3756 = vmatmul.f32.gmra.mxu0 %v3645
      %v3757 = vpop.f32.mrf.mxu0
      %v3758 = vadd.f32 0.0, %v3757
      %3759 = vmatmul.f32.gmra.mxu0 %v3648
      %v3760 = vpop.f32.mrf.mxu0
      %v3761 = vadd.f32 0.0, %v3760
      %3762 = vmatmul.f32.gmra.mxu0 %v3651
      %v3763 = vpop.f32.mrf.mxu0
      %v3764 = vadd.f32 0.0, %v3763
      %3765 = vmatmul.f32.gmra.mxu0 %v3654
      %v3766 = vpop.f32.mrf.mxu0
      %v3767 = vadd.f32 0.0, %v3766
      %3768 = vmatmul.f32.gmra.mxu0 %v3657
      %v3769 = vpop.f32.mrf.mxu0
      %v3770 = vadd.f32 0.0, %v3769
      %3771 = vmatmul.f32.gmra.mxu0 %v3660
      %v3772 = vpop.f32.mrf.mxu0
      %v3773 = vadd.f32 0.0, %v3772
      %3774 = vmatmul.f32.gmra.mxu0 %v3663
      %v3775 = vpop.f32.mrf.mxu0
      %v3776 = vadd.f32 0.0, %v3775
      %3777 = vmatmul.f32.gmra.mxu0 %v3666
      %v3778 = vpop.f32.mrf.mxu0
      %v3779 = vadd.f32 0.0, %v3778
      %3780 = vmatmul.f32.gmra.mxu0 %v3669
      %v3781 = vpop.f32.mrf.mxu0
      %v3782 = vadd.f32 0.0, %v3781
      %3783 = vmatmul.f32.gmra.mxu0 %v3672
      %v3784 = vpop.f32.mrf.mxu0
      %v3785 = vadd.f32 0.0, %v3784
      %3786 = vmatmul.f32.gmra.mxu0 %v3675
      %v3787 = vpop.f32.mrf.mxu0
      %v3788 = vadd.f32 0.0, %v3787
      %3789 = vmatmul.f32.gmra.mxu0 %v3678
      %v3790 = vpop.f32.mrf.mxu0
      %v3791 = vadd.f32 0.0, %v3790
      %3792 = vmatmul.f32.gmra.mxu0 %v3681
      %v3793 = vpop.f32.mrf.mxu0
      %v3794 = vadd.f32 0.0, %v3793
      %3795 = vmatmul.f32.gmra.mxu0 %v3684
      %v3796 = vpop.f32.mrf.mxu0
      %v3797 = vadd.f32 0.0, %v3796
      %3798 = vmatmul.f32.gmra.mxu0 %v3687
      %v3799 = vpop.f32.mrf.mxu0
      %v3800 = vadd.f32 0.0, %v3799
      %3801 = vmatmul.f32.gmra.mxu0 %v3690
      %v3802 = vpop.f32.mrf.mxu0
      %v3803 = vadd.f32 0.0, %v3802
      %3804 = vmatmul.f32.gmra.mxu0 %v3693
      %v3805 = vpop.f32.mrf.mxu0
      %v3806 = vadd.f32 0.0, %v3805
      %3807 = vmatmul.f32.gmra.mxu0 %v3696
      %v3808 = vpop.f32.mrf.mxu0
      %v3809 = vadd.f32 0.0, %v3808
      %3810 = vmatmul.f32.gmra.mxu0 %v3699
      %v3811 = vpop.f32.mrf.mxu0
      %v3812 = vadd.f32 0.0, %v3811
      %3813 = vmatmul.f32.gmra.mxu0 %v3702
      %v3814 = vpop.f32.mrf.mxu0
      %v3815 = vadd.f32 0.0, %v3814
      %3816 = vmatmul.f32.gmra.mxu0 %v3705
      %v3817 = vpop.f32.mrf.mxu0
      %v3818 = vadd.f32 0.0, %v3817
      %3819 = vmatmul.f32.gmra.mxu0 %v3708
      %v3820 = vpop.f32.mrf.mxu0
      %v3821 = vadd.f32 0.0, %v3820
      %3822 = vmatmul.f32.gmra.mxu0 %v3711
      %v3823 = vpop.f32.mrf.mxu0
      %v3824 = vadd.f32 0.0, %v3823
      %3825 = vmatmul.f32.gmra.mxu0 %v3714
      %v3826 = vpop.f32.mrf.mxu0
      %v3827 = vadd.f32 0.0, %v3826
      %3828 = vmatmul.f32.gmra.mxu0 %v3717
      %v3829 = vpop.f32.mrf.mxu0
      %v3830 = vadd.f32 0.0, %v3829
      %3831 = vmatmul.f32.gmra.mxu0 %v3720
      %v3832 = vpop.f32.mrf.mxu0
      %v3833 = vadd.f32 0.0, %v3832
      %3834 = vmatmul.f32.gmra.mxu0 %v3723
      %v3835 = vpop.f32.mrf.mxu0
      %v3836 = vadd.f32 0.0, %v3835
      %3837 = vmatmul.f32.gmra.mxu0 %v3726
      %v3838 = vpop.f32.mrf.mxu0
      %v3839 = vadd.f32 0.0, %v3838
      %3840 = vmatmul.f32.gmra.mxu0 %v3729
      %v3841 = vpop.f32.mrf.mxu0
      %v3842 = vadd.f32 0.0, %v3841
      %3843 = vmatmul.f32.gmra.mxu0 %v3732
      %v3844 = vpop.f32.mrf.mxu0
      %v3845 = vadd.f32 0.0, %v3844
      %3846 = vmatmul.f32.gmra.mxu0 %v3735
      %v3847 = vpop.f32.mrf.mxu0
      %v3848 = vadd.f32 0.0, %v3847
      %3849 = vmatmul.f32.gmra.mxu0 %v3738
      %v3850 = vpop.f32.mrf.mxu0
      %v3851 = vadd.f32 0.0, %v3850
      %3852 = vdwg.mxu0
      %v3853 = vsub.f32 %v3549, %v3758
      %v3854 = vsub.f32 %v3552, %v3761
      %v3855 = vsub.f32 %v3555, %v3764
      %v3856 = vsub.f32 %v3558, %v3767
      %v3857 = vsub.f32 %v3561, %v3770
      %v3858 = vsub.f32 %v3564, %v3773
      %v3859 = vsub.f32 %v3567, %v3776
      %v3860 = vsub.f32 %v3570, %v3779
      %v3861 = vsub.f32 %v3573, %v3782
      %v3862 = vsub.f32 %v3576, %v3785
      %v3863 = vsub.f32 %v3579, %v3788
      %v3864 = vsub.f32 %v3582, %v3791
      %v3865 = vsub.f32 %v3585, %v3794
      %v3866 = vsub.f32 %v3588, %v3797
      %v3867 = vsub.f32 %v3591, %v3800
      %v3868 = vsub.f32 %v3594, %v3803
      %v3869 = vsub.f32 %v3597, %v3806
      %v3870 = vsub.f32 %v3600, %v3809
      %v3871 = vsub.f32 %v3603, %v3812
      %v3872 = vsub.f32 %v3606, %v3815
      %v3873 = vsub.f32 %v3609, %v3818
      %v3874 = vsub.f32 %v3612, %v3821
      %v3875 = vsub.f32 %v3615, %v3824
      %v3876 = vsub.f32 %v3618, %v3827
      %v3877 = vsub.f32 %v3621, %v3830
      %v3878 = vsub.f32 %v3624, %v3833
      %v3879 = vsub.f32 %v3627, %v3836
      %v3880 = vsub.f32 %v3630, %v3839
      %v3881 = vsub.f32 %v3633, %v3842
      %v3882 = vsub.f32 %v3636, %v3845
      %v3883 = vsub.f32 %v3639, %v3848
      %v3884 = vsub.f32 %v3642, %v3851
      %3885 = vmatpush.msra.mxu0 0.0
      %3886 = vmatpush.msra.mxu0 0.0
      %3887 = vmatpush.msra.mxu0 0.0
      %3888 = vmatpush.msra.mxu0 0.0
      %3889 = vmatpush.msra.mxu0 0.0
      %3890 = vmatpush.msra.mxu0 0.0
      %3891 = vmatpush.msra.mxu0 0.0
      %3892 = vmatpush.msra.mxu0 0.0
      %3893 = vmatpush.msra.mxu0 0.0
      %3894 = vmatpush.msra.mxu0 0.0
      %3895 = vmatpush.msra.mxu0 0.0
      %3896 = vmatpush.msra.mxu0 0.0
      %3897 = vmatpush.msra.mxu0 0.0
      %3898 = vmatpush.msra.mxu0 0.0
      %3899 = vmatpush.msra.mxu0 %v3432
      %3900 = vmatpush.msra.mxu0 %v3431
      %3901 = vmatmul.f32.gmra.mxu0 %v3645
      %v3902 = vpop.f32.mrf.mxu0
      %v3903 = vadd.f32 0.0, %v3902
      %3904 = vmatmul.f32.gmra.mxu0 %v3648
      %v3905 = vpop.f32.mrf.mxu0
      %v3906 = vadd.f32 0.0, %v3905
      %3907 = vmatmul.f32.gmra.mxu0 %v3651
      %v3908 = vpop.f32.mrf.mxu0
      %v3909 = vadd.f32 0.0, %v3908
      %3910 = vmatmul.f32.gmra.mxu0 %v3654
      %v3911 = vpop.f32.mrf.mxu0
      %v3912 = vadd.f32 0.0, %v3911
      %3913 = vmatmul.f32.gmra.mxu0 %v3657
      %v3914 = vpop.f32.mrf.mxu0
      %v3915 = vadd.f32 0.0, %v3914
      %3916 = vmatmul.f32.gmra.mxu0 %v3660
      %v3917 = vpop.f32.mrf.mxu0
      %v3918 = vadd.f32 0.0, %v3917
      %3919 = vmatmul.f32.gmra.mxu0 %v3663
      %v3920 = vpop.f32.mrf.mxu0
      %v3921 = vadd.f32 0.0, %v3920
      %3922 = vmatmul.f32.gmra.mxu0 %v3666
      %v3923 = vpop.f32.mrf.mxu0
      %v3924 = vadd.f32 0.0, %v3923
      %3925 = vmatmul.f32.gmra.mxu0 %v3669
      %v3926 = vpop.f32.mrf.mxu0
      %v3927 = vadd.f32 0.0, %v3926
      %3928 = vmatmul.f32.gmra.mxu0 %v3672
      %v3929 = vpop.f32.mrf.mxu0
      %v3930 = vadd.f32 0.0, %v3929
      %3931 = vmatmul.f32.gmra.mxu0 %v3675
      %v3932 = vpop.f32.mrf.mxu0
      %v3933 = vadd.f32 0.0, %v3932
      %3934 = vmatmul.f32.gmra.mxu0 %v3678
      %v3935 = vpop.f32.mrf.mxu0
      %v3936 = vadd.f32 0.0, %v3935
      %3937 = vmatmul.f32.gmra.mxu0 %v3681
      %v3938 = vpop.f32.mrf.mxu0
      %v3939 = vadd.f32 0.0, %v3938
      %3940 = vmatmul.f32.gmra.mxu0 %v3684
      %v3941 = vpop.f32.mrf.mxu0
      %v3942 = vadd.f32 0.0, %v3941
      %3943 = vmatmul.f32.gmra.mxu0 %v3687
      %v3944 = vpop.f32.mrf.mxu0
      %v3945 = vadd.f32 0.0, %v3944
      %3946 = vmatmul.f32.gmra.mxu0 %v3690
      %v3947 = vpop.f32.mrf.mxu0
      %v3948 = vadd.f32 0.0, %v3947
      %3949 = vmatmul.f32.gmra.mxu0 %v3693
      %v3950 = vpop.f32.mrf.mxu0
      %v3951 = vadd.f32 0.0, %v3950
      %3952 = vmatmul.f32.gmra.mxu0 %v3696
      %v3953 = vpop.f32.mrf.mxu0
      %v3954 = vadd.f32 0.0, %v3953
      %3955 = vmatmul.f32.gmra.mxu0 %v3699
      %v3956 = vpop.f32.mrf.mxu0
      %v3957 = vadd.f32 0.0, %v3956
      %3958 = vmatmul.f32.gmra.mxu0 %v3702
      %v3959 = vpop.f32.mrf.mxu0
      %v3960 = vadd.f32 0.0, %v3959
      %3961 = vmatmul.f32.gmra.mxu0 %v3705
      %v3962 = vpop.f32.mrf.mxu0
      %v3963 = vadd.f32 0.0, %v3962
      %3964 = vmatmul.f32.gmra.mxu0 %v3708
      %v3965 = vpop.f32.mrf.mxu0
      %v3966 = vadd.f32 0.0, %v3965
      %3967 = vmatmul.f32.gmra.mxu0 %v3711
      %v3968 = vpop.f32.mrf.mxu0
      %v3969 = vadd.f32 0.0, %v3968
      %3970 = vmatmul.f32.gmra.mxu0 %v3714
      %v3971 = vpop.f32.mrf.mxu0
      %v3972 = vadd.f32 0.0, %v3971
      %3973 = vmatmul.f32.gmra.mxu0 %v3717
      %v3974 = vpop.f32.mrf.mxu0
      %v3975 = vadd.f32 0.0, %v3974
      %3976 = vmatmul.f32.gmra.mxu0 %v3720
      %v3977 = vpop.f32.mrf.mxu0
      %v3978 = vadd.f32 0.0, %v3977
      %3979 = vmatmul.f32.gmra.mxu0 %v3723
      %v3980 = vpop.f32.mrf.mxu0
      %v3981 = vadd.f32 0.0, %v3980
      %3982 = vmatmul.f32.gmra.mxu0 %v3726
      %v3983 = vpop.f32.mrf.mxu0
      %v3984 = vadd.f32 0.0, %v3983
      %3985 = vmatmul.f32.gmra.mxu0 %v3729
      %v3986 = vpop.f32.mrf.mxu0
      %v3987 = vadd.f32 0.0, %v3986
      %3988 = vmatmul.f32.gmra.mxu0 %v3732
      %v3989 = vpop.f32.mrf.mxu0
      %v3990 = vadd.f32 0.0, %v3989
      %3991 = vmatmul.f32.gmra.mxu0 %v3735
      %v3992 = vpop.f32.mrf.mxu0
      %v3993 = vadd.f32 0.0, %v3992
      %3994 = vmatmul.f32.gmra.mxu0 %v3738
      %v3995 = vpop.f32.mrf.mxu0
      %v3996 = vadd.f32 0.0, %v3995
      %3997 = vdwg.mxu0
      %3998 = vmatpush.msra.mxu0 0.0
      %3999 = vmatpush.msra.mxu0 0.0
      %4000 = vmatpush.msra.mxu0 0.0
      %4001 = vmatpush.msra.mxu0 0.0
      %4002 = vmatpush.msra.mxu0 0.0
      %4003 = vmatpush.msra.mxu0 0.0
      %4004 = vmatpush.msra.mxu0 0.0
      %4005 = vmatpush.msra.mxu0 0.0
      %4006 = vmatpush.msra.mxu0 0.0
      %4007 = vmatpush.msra.mxu0 0.0
      %4008 = vmatpush.msra.mxu0 0.0
      %4009 = vmatpush.msra.mxu0 0.0
      %4010 = vmatpush.msra.mxu0 0.0
      %4011 = vmatpush.msra.mxu0 0.0
      %4012 = vmatpush.msra.mxu0 %v3434
      %4013 = vmatpush.msra.mxu0 %v3433
      %4014 = vmatmul.f32.gmra.mxu0 %v3436
      %v4015 = vpop.f32.mrf.mxu0
      %v4016 = vadd.f32 %v3903, %v4015
      %4017 = vmatmul.f32.gmra.mxu0 %v3439
      %v4018 = vpop.f32.mrf.mxu0
      %v4019 = vadd.f32 %v3906, %v4018
      %4020 = vmatmul.f32.gmra.mxu0 %v3442
      %v4021 = vpop.f32.mrf.mxu0
      %v4022 = vadd.f32 %v3909, %v4021
      %4023 = vmatmul.f32.gmra.mxu0 %v3445
      %v4024 = vpop.f32.mrf.mxu0
      %v4025 = vadd.f32 %v3912, %v4024
      %4026 = vmatmul.f32.gmra.mxu0 %v3448
      %v4027 = vpop.f32.mrf.mxu0
      %v4028 = vadd.f32 %v3915, %v4027
      %4029 = vmatmul.f32.gmra.mxu0 %v3451
      %v4030 = vpop.f32.mrf.mxu0
      %v4031 = vadd.f32 %v3918, %v4030
      %4032 = vmatmul.f32.gmra.mxu0 %v3454
      %v4033 = vpop.f32.mrf.mxu0
      %v4034 = vadd.f32 %v3921, %v4033
      %4035 = vmatmul.f32.gmra.mxu0 %v3457
      %v4036 = vpop.f32.mrf.mxu0
      %v4037 = vadd.f32 %v3924, %v4036
      %4038 = vmatmul.f32.gmra.mxu0 %v3460
      %v4039 = vpop.f32.mrf.mxu0
      %v4040 = vadd.f32 %v3927, %v4039
      %4041 = vmatmul.f32.gmra.mxu0 %v3463
      %v4042 = vpop.f32.mrf.mxu0
      %v4043 = vadd.f32 %v3930, %v4042
      %4044 = vmatmul.f32.gmra.mxu0 %v3466
      %v4045 = vpop.f32.mrf.mxu0
      %v4046 = vadd.f32 %v3933, %v4045
      %4047 = vmatmul.f32.gmra.mxu0 %v3469
      %v4048 = vpop.f32.mrf.mxu0
      %v4049 = vadd.f32 %v3936, %v4048
      %4050 = vmatmul.f32.gmra.mxu0 %v3472
      %v4051 = vpop.f32.mrf.mxu0
      %v4052 = vadd.f32 %v3939, %v4051
      %4053 = vmatmul.f32.gmra.mxu0 %v3475
      %v4054 = vpop.f32.mrf.mxu0
      %v4055 = vadd.f32 %v3942, %v4054
      %4056 = vmatmul.f32.gmra.mxu0 %v3478
      %v4057 = vpop.f32.mrf.mxu0
      %v4058 = vadd.f32 %v3945, %v4057
      %4059 = vmatmul.f32.gmra.mxu0 %v3481
      %v4060 = vpop.f32.mrf.mxu0
      %v4061 = vadd.f32 %v3948, %v4060
      %4062 = vmatmul.f32.gmra.mxu0 %v3484
      %v4063 = vpop.f32.mrf.mxu0
      %v4064 = vadd.f32 %v3951, %v4063
      %4065 = vmatmul.f32.gmra.mxu0 %v3487
      %v4066 = vpop.f32.mrf.mxu0
      %v4067 = vadd.f32 %v3954, %v4066
      %4068 = vmatmul.f32.gmra.mxu0 %v3490
      %v4069 = vpop.f32.mrf.mxu0
      %v4070 = vadd.f32 %v3957, %v4069
      %4071 = vmatmul.f32.gmra.mxu0 %v3493
      %v4072 = vpop.f32.mrf.mxu0
      %v4073 = vadd.f32 %v3960, %v4072
      %4074 = vmatmul.f32.gmra.mxu0 %v3496
      %v4075 = vpop.f32.mrf.mxu0
      %v4076 = vadd.f32 %v3963, %v4075
      %4077 = vmatmul.f32.gmra.mxu0 %v3499
      %v4078 = vpop.f32.mrf.mxu0
      %v4079 = vadd.f32 %v3966, %v4078
      %4080 = vmatmul.f32.gmra.mxu0 %v3502
      %v4081 = vpop.f32.mrf.mxu0
      %v4082 = vadd.f32 %v3969, %v4081
      %4083 = vmatmul.f32.gmra.mxu0 %v3505
      %v4084 = vpop.f32.mrf.mxu0
      %v4085 = vadd.f32 %v3972, %v4084
      %4086 = vmatmul.f32.gmra.mxu0 %v3508
      %v4087 = vpop.f32.mrf.mxu0
      %v4088 = vadd.f32 %v3975, %v4087
      %4089 = vmatmul.f32.gmra.mxu0 %v3511
      %v4090 = vpop.f32.mrf.mxu0
      %v4091 = vadd.f32 %v3978, %v4090
      %4092 = vmatmul.f32.gmra.mxu0 %v3514
      %v4093 = vpop.f32.mrf.mxu0
      %v4094 = vadd.f32 %v3981, %v4093
      %4095 = vmatmul.f32.gmra.mxu0 %v3517
      %v4096 = vpop.f32.mrf.mxu0
      %v4097 = vadd.f32 %v3984, %v4096
      %4098 = vmatmul.f32.gmra.mxu0 %v3520
      %v4099 = vpop.f32.mrf.mxu0
      %v4100 = vadd.f32 %v3987, %v4099
      %4101 = vmatmul.f32.gmra.mxu0 %v3523
      %v4102 = vpop.f32.mrf.mxu0
      %v4103 = vadd.f32 %v3990, %v4102
      %4104 = vmatmul.f32.gmra.mxu0 %v3526
      %v4105 = vpop.f32.mrf.mxu0
      %v4106 = vadd.f32 %v3993, %v4105
      %4107 = vmatmul.f32.gmra.mxu0 %v3529
      %v4108 = vpop.f32.mrf.mxu0
      %v4109 = vadd.f32 %v3996, %v4108
      %4110 = vdwg.mxu0
      %v4111 = vld [vmem:[%s578] sm:$0xff]
      %v4112 = vld [vmem:[%s578 + $0x8] sm:$0xff]
      %v4113 = vld [vmem:[%s578 + $0x10] sm:$0xff]
      %v4114 = vld [vmem:[%s578 + $0x18] sm:$0xff]
      %v4115 = vld [vmem:[%s578 + $0x20] sm:$0xff]
      %v4116 = vld [vmem:[%s578 + $0x28] sm:$0xff]
      %v4117 = vld [vmem:[%s578 + $0x30] sm:$0xff]
      %v4118 = vld [vmem:[%s578 + $0x38] sm:$0xff]
      %v4119 = vld [vmem:[%s578 + $0x40] sm:$0xff]
      %v4120 = vld [vmem:[%s578 + $0x48] sm:$0xff]
      %v4121 = vld [vmem:[%s578 + $0x50] sm:$0xff]
      %v4122 = vld [vmem:[%s578 + $0x58] sm:$0xff]
      %v4123 = vld [vmem:[%s578 + $0x60] sm:$0xff]
      %v4124 = vld [vmem:[%s578 + $0x68] sm:$0xff]
      %v4125 = vld [vmem:[%s578 + $0x70] sm:$0xff]
      %v4126 = vld [vmem:[%s578 + $0x78] sm:$0xff]
      %v4127 = vld [vmem:[%s578 + $0x80] sm:$0xff]
      %v4128 = vld [vmem:[%s578 + $0x88] sm:$0xff]
      %v4129 = vld [vmem:[%s578 + $0x90] sm:$0xff]
      %v4130 = vld [vmem:[%s578 + $0x98] sm:$0xff]
      %v4131 = vld [vmem:[%s578 + $0xa0] sm:$0xff]
      %v4132 = vld [vmem:[%s578 + $0xa8] sm:$0xff]
      %v4133 = vld [vmem:[%s578 + $0xb0] sm:$0xff]
      %v4134 = vld [vmem:[%s578 + $0xb8] sm:$0xff]
      %v4135 = vld [vmem:[%s578 + $0xc0] sm:$0xff]
      %v4136 = vld [vmem:[%s578 + $0xc8] sm:$0xff]
      %v4137 = vld [vmem:[%s578 + $0xd0] sm:$0xff]
      %v4138 = vld [vmem:[%s578 + $0xd8] sm:$0xff]
      %v4139 = vld [vmem:[%s578 + $0xe0] sm:$0xff]
      %v4140 = vld [vmem:[%s578 + $0xe8] sm:$0xff]
      %v4141 = vld [vmem:[%s578 + $0xf0] sm:$0xff]
      %v4142 = vld [vmem:[%s578 + $0xf8] sm:$0xff]
      %v4143 = vld [vmem:[%s584] sm:$0xff]
      %v4144 = vld [vmem:[%s584 + $0x8] sm:$0xff]
      %v4145 = vld [vmem:[%s584 + $0x10] sm:$0xff]
      %v4146 = vld [vmem:[%s584 + $0x18] sm:$0xff]
      %v4147 = vld [vmem:[%s584 + $0x20] sm:$0xff]
      %v4148 = vld [vmem:[%s584 + $0x28] sm:$0xff]
      %v4149 = vld [vmem:[%s584 + $0x30] sm:$0xff]
      %v4150 = vld [vmem:[%s584 + $0x38] sm:$0xff]
      %v4151 = vld [vmem:[%s584 + $0x40] sm:$0xff]
      %v4152 = vld [vmem:[%s584 + $0x48] sm:$0xff]
      %v4153 = vld [vmem:[%s584 + $0x50] sm:$0xff]
      %v4154 = vld [vmem:[%s584 + $0x58] sm:$0xff]
      %v4155 = vld [vmem:[%s584 + $0x60] sm:$0xff]
      %v4156 = vld [vmem:[%s584 + $0x68] sm:$0xff]
      %v4157 = vld [vmem:[%s584 + $0x70] sm:$0xff]
      %v4158 = vld [vmem:[%s584 + $0x78] sm:$0xff]
      %v4159 = vld [vmem:[%s584 + $0x80] sm:$0xff]
      %v4160 = vld [vmem:[%s584 + $0x88] sm:$0xff]
      %v4161 = vld [vmem:[%s584 + $0x90] sm:$0xff]
      %v4162 = vld [vmem:[%s584 + $0x98] sm:$0xff]
      %v4163 = vld [vmem:[%s584 + $0xa0] sm:$0xff]
      %v4164 = vld [vmem:[%s584 + $0xa8] sm:$0xff]
      %v4165 = vld [vmem:[%s584 + $0xb0] sm:$0xff]
      %v4166 = vld [vmem:[%s584 + $0xb8] sm:$0xff]
      %v4167 = vld [vmem:[%s584 + $0xc0] sm:$0xff]
      %v4168 = vld [vmem:[%s584 + $0xc8] sm:$0xff]
      %v4169 = vld [vmem:[%s584 + $0xd0] sm:$0xff]
      %v4170 = vld [vmem:[%s584 + $0xd8] sm:$0xff]
      %v4171 = vld [vmem:[%s584 + $0xe0] sm:$0xff]
      %v4172 = vld [vmem:[%s584 + $0xe8] sm:$0xff]
      %v4173 = vld [vmem:[%s584 + $0xf0] sm:$0xff]
      %v4174 = vld [vmem:[%s584 + $0xf8] sm:$0xff]
      %v4175 = vsub.f32 %v4111, %v3853
      %v4176 = vsub.f32 %v4112, %v3854
      %v4177 = vsub.f32 %v4113, %v3855
      %v4178 = vsub.f32 %v4114, %v3856
      %v4179 = vsub.f32 %v4115, %v3857
      %v4180 = vsub.f32 %v4116, %v3858
      %v4181 = vsub.f32 %v4117, %v3859
      %v4182 = vsub.f32 %v4118, %v3860
      %v4183 = vsub.f32 %v4119, %v3861
      %v4184 = vsub.f32 %v4120, %v3862
      %v4185 = vsub.f32 %v4121, %v3863
      %v4186 = vsub.f32 %v4122, %v3864
      %v4187 = vsub.f32 %v4123, %v3865
      %v4188 = vsub.f32 %v4124, %v3866
      %v4189 = vsub.f32 %v4125, %v3867
      %v4190 = vsub.f32 %v4126, %v3868
      %v4191 = vsub.f32 %v4127, %v3869
      %v4192 = vsub.f32 %v4128, %v3870
      %v4193 = vsub.f32 %v4129, %v3871
      %v4194 = vsub.f32 %v4130, %v3872
      %v4195 = vsub.f32 %v4131, %v3873
      %v4196 = vsub.f32 %v4132, %v3874
      %v4197 = vsub.f32 %v4133, %v3875
      %v4198 = vsub.f32 %v4134, %v3876
      %v4199 = vsub.f32 %v4135, %v3877
      %v4200 = vsub.f32 %v4136, %v3878
      %v4201 = vsub.f32 %v4137, %v3879
      %v4202 = vsub.f32 %v4138, %v3880
      %v4203 = vsub.f32 %v4139, %v3881
      %v4204 = vsub.f32 %v4140, %v3882
      %v4205 = vsub.f32 %v4141, %v3883
      %v4206 = vsub.f32 %v4142, %v3884
      %v4207 = vmul.f32 %v4175, 0.5
      %v4208 = vmul.f32 %v4176, 0.5
      %v4209 = vmul.f32 %v4177, 0.5
      %v4210 = vmul.f32 %v4178, 0.5
      %v4211 = vmul.f32 %v4179, 0.5
      %v4212 = vmul.f32 %v4180, 0.5
      %v4213 = vmul.f32 %v4181, 0.5
      %v4214 = vmul.f32 %v4182, 0.5
      %v4215 = vmul.f32 %v4183, 0.5
      %v4216 = vmul.f32 %v4184, 0.5
      %v4217 = vmul.f32 %v4185, 0.5
      %v4218 = vmul.f32 %v4186, 0.5
      %v4219 = vmul.f32 %v4187, 0.5
      %v4220 = vmul.f32 %v4188, 0.5
      %v4221 = vmul.f32 %v4189, 0.5
      %v4222 = vmul.f32 %v4190, 0.5
      %v4223 = vmul.f32 %v4191, 0.5
      %v4224 = vmul.f32 %v4192, 0.5
      %v4225 = vmul.f32 %v4193, 0.5
      %v4226 = vmul.f32 %v4194, 0.5
      %v4227 = vmul.f32 %v4195, 0.5
      %v4228 = vmul.f32 %v4196, 0.5
      %v4229 = vmul.f32 %v4197, 0.5
      %v4230 = vmul.f32 %v4198, 0.5
      %v4231 = vmul.f32 %v4199, 0.5
      %v4232 = vmul.f32 %v4200, 0.5
      %v4233 = vmul.f32 %v4201, 0.5
      %v4234 = vmul.f32 %v4202, 0.5
      %v4235 = vmul.f32 %v4203, 0.5
      %v4236 = vmul.f32 %v4204, 0.5
      %v4237 = vmul.f32 %v4205, 0.5
      %v4238 = vmul.f32 %v4206, 0.5
      %v4239 = vsub.f32 %v4111, %v4207
      %v4240 = vsub.f32 %v4112, %v4208
      %v4241 = vsub.f32 %v4113, %v4209
      %v4242 = vsub.f32 %v4114, %v4210
      %v4243 = vsub.f32 %v4115, %v4211
      %v4244 = vsub.f32 %v4116, %v4212
      %v4245 = vsub.f32 %v4117, %v4213
      %v4246 = vsub.f32 %v4118, %v4214
      %v4247 = vsub.f32 %v4119, %v4215
      %v4248 = vsub.f32 %v4120, %v4216
      %v4249 = vsub.f32 %v4121, %v4217
      %v4250 = vsub.f32 %v4122, %v4218
      %v4251 = vsub.f32 %v4123, %v4219
      %v4252 = vsub.f32 %v4124, %v4220
      %v4253 = vsub.f32 %v4125, %v4221
      %v4254 = vsub.f32 %v4126, %v4222
      %v4255 = vsub.f32 %v4127, %v4223
      %v4256 = vsub.f32 %v4128, %v4224
      %v4257 = vsub.f32 %v4129, %v4225
      %v4258 = vsub.f32 %v4130, %v4226
      %v4259 = vsub.f32 %v4131, %v4227
      %v4260 = vsub.f32 %v4132, %v4228
      %v4261 = vsub.f32 %v4133, %v4229
      %v4262 = vsub.f32 %v4134, %v4230
      %v4263 = vsub.f32 %v4135, %v4231
      %v4264 = vsub.f32 %v4136, %v4232
      %v4265 = vsub.f32 %v4137, %v4233
      %v4266 = vsub.f32 %v4138, %v4234
      %v4267 = vsub.f32 %v4139, %v4235
      %v4268 = vsub.f32 %v4140, %v4236
      %v4269 = vsub.f32 %v4141, %v4237
      %v4270 = vsub.f32 %v4142, %v4238
      %vm4271 = vcmask 261120
      %4272 = vst.msk [vmem:[%s614] sm:$0xff] %vm4271, %v4239
      %4273 = vst.msk [vmem:[%s614 + $0x8] sm:$0xff] %vm4271, %v4240
      %4274 = vst.msk [vmem:[%s614 + $0x10] sm:$0xff] %vm4271, %v4241
      %4275 = vst.msk [vmem:[%s614 + $0x18] sm:$0xff] %vm4271, %v4242
      %4276 = vst.msk [vmem:[%s614 + $0x20] sm:$0xff] %vm4271, %v4243
      %4277 = vst.msk [vmem:[%s614 + $0x28] sm:$0xff] %vm4271, %v4244
      %4278 = vst.msk [vmem:[%s614 + $0x30] sm:$0xff] %vm4271, %v4245
      %4279 = vst.msk [vmem:[%s614 + $0x38] sm:$0xff] %vm4271, %v4246
      %4280 = vst.msk [vmem:[%s614 + $0x40] sm:$0xff] %vm4271, %v4247
      %4281 = vst.msk [vmem:[%s614 + $0x48] sm:$0xff] %vm4271, %v4248
      %4282 = vst.msk [vmem:[%s614 + $0x50] sm:$0xff] %vm4271, %v4249
      %4283 = vst.msk [vmem:[%s614 + $0x58] sm:$0xff] %vm4271, %v4250
      %4284 = vst.msk [vmem:[%s614 + $0x60] sm:$0xff] %vm4271, %v4251
      %4285 = vst.msk [vmem:[%s614 + $0x68] sm:$0xff] %vm4271, %v4252
      %4286 = vst.msk [vmem:[%s614 + $0x70] sm:$0xff] %vm4271, %v4253
      %4287 = vst.msk [vmem:[%s614 + $0x78] sm:$0xff] %vm4271, %v4254
      %4288 = vst.msk [vmem:[%s614 + $0x80] sm:$0xff] %vm4271, %v4255
      %4289 = vst.msk [vmem:[%s614 + $0x88] sm:$0xff] %vm4271, %v4256
      %4290 = vst.msk [vmem:[%s614 + $0x90] sm:$0xff] %vm4271, %v4257
      %4291 = vst.msk [vmem:[%s614 + $0x98] sm:$0xff] %vm4271, %v4258
      %4292 = vst.msk [vmem:[%s614 + $0xa0] sm:$0xff] %vm4271, %v4259
      %4293 = vst.msk [vmem:[%s614 + $0xa8] sm:$0xff] %vm4271, %v4260
      %4294 = vst.msk [vmem:[%s614 + $0xb0] sm:$0xff] %vm4271, %v4261
      %4295 = vst.msk [vmem:[%s614 + $0xb8] sm:$0xff] %vm4271, %v4262
      %4296 = vst.msk [vmem:[%s614 + $0xc0] sm:$0xff] %vm4271, %v4263
      %4297 = vst.msk [vmem:[%s614 + $0xc8] sm:$0xff] %vm4271, %v4264
      %4298 = vst.msk [vmem:[%s614 + $0xd0] sm:$0xff] %vm4271, %v4265
      %4299 = vst.msk [vmem:[%s614 + $0xd8] sm:$0xff] %vm4271, %v4266
      %4300 = vst.msk [vmem:[%s614 + $0xe0] sm:$0xff] %vm4271, %v4267
      %4301 = vst.msk [vmem:[%s614 + $0xe8] sm:$0xff] %vm4271, %v4268
      %4302 = vst.msk [vmem:[%s614 + $0xf0] sm:$0xff] %vm4271, %v4269
      %4303 = vst.msk [vmem:[%s614 + $0xf8] sm:$0xff] %vm4271, %v4270
      %v4304 = vsub.f32 %v4143, %v4016
      %v4305 = vsub.f32 %v4144, %v4019
      %v4306 = vsub.f32 %v4145, %v4022
      %v4307 = vsub.f32 %v4146, %v4025
      %v4308 = vsub.f32 %v4147, %v4028
      %v4309 = vsub.f32 %v4148, %v4031
      %v4310 = vsub.f32 %v4149, %v4034
      %v4311 = vsub.f32 %v4150, %v4037
      %v4312 = vsub.f32 %v4151, %v4040
      %v4313 = vsub.f32 %v4152, %v4043
      %v4314 = vsub.f32 %v4153, %v4046
      %v4315 = vsub.f32 %v4154, %v4049
      %v4316 = vsub.f32 %v4155, %v4052
      %v4317 = vsub.f32 %v4156, %v4055
      %v4318 = vsub.f32 %v4157, %v4058
      %v4319 = vsub.f32 %v4158, %v4061
      %v4320 = vsub.f32 %v4159, %v4064
      %v4321 = vsub.f32 %v4160, %v4067
      %v4322 = vsub.f32 %v4161, %v4070
      %v4323 = vsub.f32 %v4162, %v4073
      %v4324 = vsub.f32 %v4163, %v4076
      %v4325 = vsub.f32 %v4164, %v4079
      %v4326 = vsub.f32 %v4165, %v4082
      %v4327 = vsub.f32 %v4166, %v4085
      %v4328 = vsub.f32 %v4167, %v4088
      %v4329 = vsub.f32 %v4168, %v4091
      %v4330 = vsub.f32 %v4169, %v4094
      %v4331 = vsub.f32 %v4170, %v4097
      %v4332 = vsub.f32 %v4171, %v4100
      %v4333 = vsub.f32 %v4172, %v4103
      %v4334 = vsub.f32 %v4173, %v4106
      %v4335 = vsub.f32 %v4174, %v4109
      %v4336 = vmul.f32 %v4304, 0.5
      %v4337 = vmul.f32 %v4305, 0.5
      %v4338 = vmul.f32 %v4306, 0.5
      %v4339 = vmul.f32 %v4307, 0.5
      %v4340 = vmul.f32 %v4308, 0.5
      %v4341 = vmul.f32 %v4309, 0.5
      %v4342 = vmul.f32 %v4310, 0.5
      %v4343 = vmul.f32 %v4311, 0.5
      %v4344 = vmul.f32 %v4312, 0.5
      %v4345 = vmul.f32 %v4313, 0.5
      %v4346 = vmul.f32 %v4314, 0.5
      %v4347 = vmul.f32 %v4315, 0.5
      %v4348 = vmul.f32 %v4316, 0.5
      %v4349 = vmul.f32 %v4317, 0.5
      %v4350 = vmul.f32 %v4318, 0.5
      %v4351 = vmul.f32 %v4319, 0.5
      %v4352 = vmul.f32 %v4320, 0.5
      %v4353 = vmul.f32 %v4321, 0.5
      %v4354 = vmul.f32 %v4322, 0.5
      %v4355 = vmul.f32 %v4323, 0.5
      %v4356 = vmul.f32 %v4324, 0.5
      %v4357 = vmul.f32 %v4325, 0.5
      %v4358 = vmul.f32 %v4326, 0.5
      %v4359 = vmul.f32 %v4327, 0.5
      %v4360 = vmul.f32 %v4328, 0.5
      %v4361 = vmul.f32 %v4329, 0.5
      %v4362 = vmul.f32 %v4330, 0.5
      %v4363 = vmul.f32 %v4331, 0.5
      %v4364 = vmul.f32 %v4332, 0.5
      %v4365 = vmul.f32 %v4333, 0.5
      %v4366 = vmul.f32 %v4334, 0.5
      %v4367 = vmul.f32 %v4335, 0.5
      %v4368 = vsub.f32 %v4143, %v4336
      %v4369 = vsub.f32 %v4144, %v4337
      %v4370 = vsub.f32 %v4145, %v4338
      %v4371 = vsub.f32 %v4146, %v4339
      %v4372 = vsub.f32 %v4147, %v4340
      %v4373 = vsub.f32 %v4148, %v4341
      %v4374 = vsub.f32 %v4149, %v4342
      %v4375 = vsub.f32 %v4150, %v4343
      %v4376 = vsub.f32 %v4151, %v4344
      %v4377 = vsub.f32 %v4152, %v4345
      %v4378 = vsub.f32 %v4153, %v4346
      %v4379 = vsub.f32 %v4154, %v4347
      %v4380 = vsub.f32 %v4155, %v4348
      %v4381 = vsub.f32 %v4156, %v4349
      %v4382 = vsub.f32 %v4157, %v4350
      %v4383 = vsub.f32 %v4158, %v4351
      %v4384 = vsub.f32 %v4159, %v4352
      %v4385 = vsub.f32 %v4160, %v4353
      %v4386 = vsub.f32 %v4161, %v4354
      %v4387 = vsub.f32 %v4162, %v4355
      %v4388 = vsub.f32 %v4163, %v4356
      %v4389 = vsub.f32 %v4164, %v4357
      %v4390 = vsub.f32 %v4165, %v4358
      %v4391 = vsub.f32 %v4166, %v4359
      %v4392 = vsub.f32 %v4167, %v4360
      %v4393 = vsub.f32 %v4168, %v4361
      %v4394 = vsub.f32 %v4169, %v4362
      %v4395 = vsub.f32 %v4170, %v4363
      %v4396 = vsub.f32 %v4171, %v4364
      %v4397 = vsub.f32 %v4172, %v4365
      %v4398 = vsub.f32 %v4173, %v4366
      %v4399 = vsub.f32 %v4174, %v4367
      %4400 = vst.msk [vmem:[%s620] sm:$0xff] %vm4271, %v4368
      %4401 = vst.msk [vmem:[%s620 + $0x8] sm:$0xff] %vm4271, %v4369
      %4402 = vst.msk [vmem:[%s620 + $0x10] sm:$0xff] %vm4271, %v4370
      %4403 = vst.msk [vmem:[%s620 + $0x18] sm:$0xff] %vm4271, %v4371
      %4404 = vst.msk [vmem:[%s620 + $0x20] sm:$0xff] %vm4271, %v4372
      %4405 = vst.msk [vmem:[%s620 + $0x28] sm:$0xff] %vm4271, %v4373
      %4406 = vst.msk [vmem:[%s620 + $0x30] sm:$0xff] %vm4271, %v4374
      %4407 = vst.msk [vmem:[%s620 + $0x38] sm:$0xff] %vm4271, %v4375
      %4408 = vst.msk [vmem:[%s620 + $0x40] sm:$0xff] %vm4271, %v4376
      %4409 = vst.msk [vmem:[%s620 + $0x48] sm:$0xff] %vm4271, %v4377
      %4410 = vst.msk [vmem:[%s620 + $0x50] sm:$0xff] %vm4271, %v4378
      %4411 = vst.msk [vmem:[%s620 + $0x58] sm:$0xff] %vm4271, %v4379
      %4412 = vst.msk [vmem:[%s620 + $0x60] sm:$0xff] %vm4271, %v4380
      %4413 = vst.msk [vmem:[%s620 + $0x68] sm:$0xff] %vm4271, %v4381
      %4414 = vst.msk [vmem:[%s620 + $0x70] sm:$0xff] %vm4271, %v4382
      %4415 = vst.msk [vmem:[%s620 + $0x78] sm:$0xff] %vm4271, %v4383
      %4416 = vst.msk [vmem:[%s620 + $0x80] sm:$0xff] %vm4271, %v4384
      %4417 = vst.msk [vmem:[%s620 + $0x88] sm:$0xff] %vm4271, %v4385
      %4418 = vst.msk [vmem:[%s620 + $0x90] sm:$0xff] %vm4271, %v4386
      %4419 = vst.msk [vmem:[%s620 + $0x98] sm:$0xff] %vm4271, %v4387
      %4420 = vst.msk [vmem:[%s620 + $0xa0] sm:$0xff] %vm4271, %v4388
      %4421 = vst.msk [vmem:[%s620 + $0xa8] sm:$0xff] %vm4271, %v4389
      %4422 = vst.msk [vmem:[%s620 + $0xb0] sm:$0xff] %vm4271, %v4390
      %4423 = vst.msk [vmem:[%s620 + $0xb8] sm:$0xff] %vm4271, %v4391
      %4424 = vst.msk [vmem:[%s620 + $0xc0] sm:$0xff] %vm4271, %v4392
      %4425 = vst.msk [vmem:[%s620 + $0xc8] sm:$0xff] %vm4271, %v4393
      %4426 = vst.msk [vmem:[%s620 + $0xd0] sm:$0xff] %vm4271, %v4394
      %4427 = vst.msk [vmem:[%s620 + $0xd8] sm:$0xff] %vm4271, %v4395
      %4428 = vst.msk [vmem:[%s620 + $0xe0] sm:$0xff] %vm4271, %v4396
      %4429 = vst.msk [vmem:[%s620 + $0xe8] sm:$0xff] %vm4271, %v4397
      %4430 = vst.msk [vmem:[%s620 + $0xf0] sm:$0xff] %vm4271, %v4398
      %4431 = vst.msk [vmem:[%s620 + $0xf8] sm:$0xff] %vm4271, %v4399
      %s4432 = smul.u32 32, %s27
      %p4433 = scmp.lt.s32.totalorder %s4432, 63
      %s4434 = scalar_select %p4433, %s4432, 63
      %s4435 = smul.addr %s4434, 8
      %s4436 = scalar_lea.vmem %s14, %s4435
      %s4437 = smul.u32 32, %s27
      %p4438 = scmp.lt.s32.totalorder %s4437, 63
      %s4439 = scalar_select %p4438, %s4437, 63
      %s4440 = smul.addr %s4439, 8
      %s4441 = scalar_lea.vmem %s15, %s4440
      // Predicated region
      $region77: #{tpu_custom_call.1} parent=75 // pred_check
        %p4442 = pneg %p369
      $region78: #{tpu_custom_call.1} parent=75 // pred_check_branch
        %4444 = sbr.rel (%p4442) target = $region80
      $region79: #{tpu_custom_call.1} parent=75 // pred_region
        %s4445 = smul.u32 32, %s27
      $region80: #{tpu_custom_call.1} parent=75 // pred_fallthru
        _
      // Predicated region
      $region81: #{tpu_custom_call.1} parent=75 // pred_check
        %p4446 = pneg %p395
      $region82: #{tpu_custom_call.1} parent=75 // pred_check_branch
        %4448 = sbr.rel (%p4446) target = $region84
      $region83: #{tpu_custom_call.1} parent=75 // pred_region
        %s4449 = smul.u32 32, %s27
      $region84: #{tpu_custom_call.1} parent=75 // pred_fallthru
        _
    $region76: #{tpu_custom_call.1} parent=5 // pred_fallthru
      _
    %p4450 = scmp.le.s32.totalorder 2, %s22
    // Predicated region
    $region85: #{tpu_custom_call.1} parent=5 // pred_check
      %p4451 = pneg %p4450
    $region86: #{tpu_custom_call.1} parent=5 // pred_check_branch
      %4453 = sbr.rel (%p4451) target = $region88
    $region87: #{tpu_custom_call.1} parent=5 // pred_region
      %s4454 = ssub.s32 %s22, 2
      // Predicated region
      $region89: #{tpu_custom_call.1} parent=87 // pred_check
        %p4455 = pneg %p375
      $region90: #{tpu_custom_call.1} parent=87 // pred_check_branch
        %4457 = sbr.rel (%p4455) target = $region92
      $region91: #{tpu_custom_call.1} parent=87 // pred_region
        %s4458 = smul.u32 32, %s28
        %p4459 = scmp.lt.s32.totalorder %s4458, 63
        %s4460 = scalar_select %p4459, %s4458, 63
        %s4461 = smul.addr %s4460, 8
        %s4462 = scalar_lea.vmem %s14, %s4461
      $region92: #{tpu_custom_call.1} parent=87 // pred_fallthru
        _
      // Predicated region
      $region93: #{tpu_custom_call.1} parent=87 // pred_check
        %p4463 = pneg %p401
      $region94: #{tpu_custom_call.1} parent=87 // pred_check_branch
        %4465 = sbr.rel (%p4463) target = $region96
      $region95: #{tpu_custom_call.1} parent=87 // pred_region
        %s4466 = smul.u32 32, %s28
        %p4467 = scmp.lt.s32.totalorder %s4466, 63
        %s4468 = scalar_select %p4467, %s4466, 63
        %s4469 = smul.addr %s4468, 8
        %s4470 = scalar_lea.vmem %s15, %s4469
      $region96: #{tpu_custom_call.1} parent=87 // pred_fallthru
        _
    $region88: #{tpu_custom_call.1} parent=5 // pred_fallthru
      _
  $region6: #{tpu_custom_call.1} parent=0 // loop_footer
    %s26 = sadd.s32 1, %s22
  $region7: #{tpu_custom_call.1} parent=0 // loop_footer_branch
    %21 = sbr.rel target = $region3
  $region8: #{tpu_custom_call.1} parent=0 // loop_exit
    _

</llo_original>
